<compile_context>
chip_gen: v7x
topology: tpu7x:2x2x1
jax: 0.10.0
libtpu: 0.0.40
codegen_flags: <defaults>
</compile_context>

<pallas_src>
import functools

import jax
import jax.numpy as jnp
from jax import lax
from jax.experimental import pallas as pl
from jax.experimental.pallas import tpu as pltpu


def _last_layer_kernel(*refs, inv_hw, use_bn, use_dropout, drop_p, inv_keep):
    # refs = (x_ref[, scale_ref, shift_ref][, u_ref], o_ref)
    it = iter(refs)
    x_ref = next(it)
    scale_ref = next(it) if use_bn else None
    shift_ref = next(it) if use_bn else None
    u_ref = next(it) if use_dropout else None
    o_ref = next(it)

    # AdaptiveAvgPool2d((1,1)) == mean over the HW lane axis.  Accumulate the
    # reduction directly in f32 (no widened copy of the input block).
    pooled = jnp.sum(x_ref[...], axis=-1, dtype=jnp.float32) * jnp.float32(inv_hw)

    if use_bn:
        # Eval-mode BatchNorm pre-folded (in the wrapper) into a per-channel
        # affine, applied post-pool (exact: linear map commutes with the mean).
        pooled = pooled * scale_ref[...] + shift_ref[...]

    if use_dropout:
        keep = u_ref[...] >= jnp.float32(drop_p)
        pooled = jnp.where(keep, pooled * jnp.float32(inv_keep), jnp.float32(0.0))

    o_ref[...] = pooled.astype(o_ref.dtype)


def _pick_tiles(N, C, HW, itemsize):
    """Pick (tn, tc) for large, legal, DMA-amortizing blocks."""
    # ~12 MiB per in-flight x block -> ~24 MiB double-buffered (fits v7x too).
    budget = 12 * 1024 * 1024

    # Channel tile: full C unless a single batch row overflows the budget and
    # C can be split on 128-lane boundaries (keeps output stores lane-dense).
    tc = C
    if C % 128 == 0 and C * HW * itemsize > budget:
        n128 = C // 128
        divs = [128 * k for k in range(1, n128 + 1) if n128 % k == 0]
        fitting = [c for c in divs if c * HW * itemsize <= budget]
        tc = max(fitting) if fitting else min(divs)

    # Batch tile: largest divisor of N that is full-N or a multiple of 8
    # (legal second-to-last output block dim) such that the block fits.
    per_row = max(1, tc * HW * itemsize)
    cap = max(1, budget // per_row)
    if N <= cap:
        tn = N
    else:
        mult8 = [d for d in range(8, min(N, cap) + 1, 8) if N % d == 0]
        tn = max(mult8) if mult8 else N  # full-N fallback keeps the block legal

    # Keep >= 2 grid steps along a "parallel" axis when cheaply possible
    # (v7x has 2 TensorCores/chip; a 1-step grid idles one of them).
    if (N // tn) * (C // tc) < 2:
        if tn % 16 == 0:
            tn //= 2
        elif tc % 256 == 0:
            tc //= 2
    return tn, tc


def resnet50_last_layer_forward(x, gamma=None, beta=None, running_mean=None,
                                running_var=None, *, compare_batch_norm=True,
                                compare_dropout=True, dropout_p=0.2, eps=1e-5,
                                training=True, dropout_seed=0):
    """Fused forward of ResNet50LastLayer on TPU via Pallas.

    x : (N, C, H, W) — NCHW like the PyTorch module.
    Returns (N, C, 1, 1), matching AdaptiveAvgPool2d((1, 1)).
    """
    N, C, H, W = x.shape
    HW = H * W
    itemsize = x.dtype.itemsize

    use_bn = bool(compare_batch_norm)
    use_dropout = bool(compare_dropout and training)
    drop_p = float(dropout_p)
    inv_keep = 0.0 if drop_p >= 1.0 else 1.0 / (1.0 - drop_p)

    # Free view of the NCHW buffer: channels on sublanes, spatial on lanes.
    x3 = x.reshape(N, C, HW)

    tn, tc = _pick_tiles(N, C, HW, itemsize)
    grid = (N // tn, C // tc)

    kernel = functools.partial(
        _last_layer_kernel,
        inv_hw=1.0 / HW,
        use_bn=use_bn,
        use_dropout=use_dropout,
        drop_p=drop_p,
        inv_keep=inv_keep,
    )

    inputs = [x3]
    in_specs = [pl.BlockSpec((tn, tc, HW), lambda i, j: (i, j, 0))]
    bytes_accessed = x3.size * itemsize + N * C * itemsize

    if use_bn:
        def _param(p, fill):
            if p is None:
                return jnp.full((C,), fill, jnp.float32)
            return p.astype(jnp.float32)

        g = _param(gamma, 1.0)
        b = _param(beta, 0.0)
        m = _param(running_mean, 0.0)
        v = _param(running_var, 1.0)
        # Fold eval-mode BN into a single per-channel affine (done once, host side).
        inv_std = lax.rsqrt(v + jnp.float32(eps))
        scale = (g * inv_std).reshape(1, C)
        shift = (b - m * g * inv_std).reshape(1, C)
        inputs += [scale, shift]
        in_specs += [pl.BlockSpec((1, tc), lambda i, j: (0, j)),
                     pl.BlockSpec((1, tc), lambda i, j: (0, j))]
        bytes_accessed += 2 * C * 4

    if use_dropout:
        # Host-side uniform field: reproducible, tiling-independent dropout mask.
        u = jax.random.uniform(jax.random.PRNGKey(dropout_seed), (N, C),
                               dtype=jnp.float32)
        inputs.append(u)
        in_specs.append(pl.BlockSpec((tn, tc), lambda i, j: (i, j)))
        bytes_accessed += N * C * 4

    # VMEM: 2x double-buffered blocks of every operand, with headroom; capped
    # so the request also fits v7x's smaller (64 MiB physical) VMEM.
    in_block = tn * tc * HW * itemsize
    out_block = tn * tc * itemsize
    param_block = 2 * tc * 4 if use_bn else 0
    u_block = tn * tc * 4 if use_dropout else 0
    needed = 2 * (in_block + out_block + param_block + u_block)
    vmem_limit = int(min(60 * 1024 * 1024,
                         max(32 * 1024 * 1024, (needed * 3) // 2)))

    cost = pl.CostEstimate(
        flops=int(N * C * (HW + 4)),
        bytes_accessed=int(bytes_accessed),
        transcendentals=0,
    )

    out = pl.pallas_call(
        kernel,
        out_shape=jax.ShapeDtypeStruct((N, C), x.dtype),
        grid=grid,
        in_specs=in_specs,
        out_specs=pl.BlockSpec((tn, tc), lambda i, j: (i, j)),
        compiler_params=pltpu.CompilerParams(
            dimension_semantics=("parallel", "parallel"),
            vmem_limit_bytes=vmem_limit,
        ),
        cost_estimate=cost,
    )(*inputs)

    return out.reshape(N, C, 1, 1)


def _reference(x, gamma, beta, mean, var, *, compare_batch_norm, eps=1e-5):
    y = x.astype(jnp.float32)
    if compare_batch_norm:
        inv = 1.0 / jnp.sqrt(var.astype(jnp.float32) + eps)
        scale = (gamma * inv)[None, :, None, None]
        shift = (beta - mean * gamma * inv)[None, :, None, None]
        y = y * scale + shift
    y = jnp.mean(y, axis=(2, 3), keepdims=True)
    return y.astype(x.dtype)


if __name__ == "__main__":
    key = jax.random.PRNGKey(0)
    kx, kg, kb, km, kv = jax.random.split(key, 5)

    N, C, H, W = 2, 512, 16, 16
    x = jax.random.normal(kx, (N, C, H, W), dtype=jnp.float32)
    gamma = jax.random.normal(kg, (C,), dtype=jnp.float32) * 0.1 + 1.0
    beta = jax.random.normal(kb, (C,), dtype=jnp.float32) * 0.1
    running_mean = jax.random.normal(km, (C,), dtype=jnp.float32) * 0.1
    running_var = jax.random.uniform(kv, (C,), dtype=jnp.float32,
                                     minval=0.5, maxval=1.5)

    # 1) BatchNorm + avgpool (no dropout) — exact check against reference.
    out_bn = resnet50_last_layer_forward(
        x, gamma, beta, running_mean, running_var,
        compare_batch_norm=True, compare_dropout=False, training=True)
    out_bn = jax.block_until_ready(out_bn)
    ref_bn = _reference(x, gamma, beta, running_mean, running_var,
                        compare_batch_norm=True)
    assert out_bn.shape == (N, C, 1, 1)
    assert jnp.allclose(out_bn, ref_bn, atol=1e-4, rtol=1e-4)

    # 2) avgpool only (compare_batch_norm=False, compare_dropout=False).
    out_plain = resnet50_last_layer_forward(
        x, compare_batch_norm=False, compare_dropout=False, training=False)
    out_plain = jax.block_until_ready(out_plain)
    ref_plain = _reference(x, gamma, beta, running_mean, running_var,
                           compare_batch_norm=False)
    assert jnp.allclose(out_plain, ref_plain, atol=1e-5, rtol=1e-5)

    # 3) BatchNorm + avgpool + dropout (training): each kept element equals
    #    ref / (1 - p); dropped elements are exactly zero.
    p = 0.2
    out_do = resnet50_last_layer_forward(
        x, gamma, beta, running_mean, running_var,
        compare_batch_norm=True, compare_dropout=True, dropout_p=p,
        training=True, dropout_seed=1234)
    out_do = jax.block_until_ready(out_do)
    kept = out_do != 0.0
    n_kept = int(jnp.sum(kept))
    assert 0 < n_kept < out_do.size
    recon = jnp.where(kept, out_do * (1.0 - p), ref_bn)
    assert jnp.allclose(recon, ref_bn, atol=1e-4, rtol=1e-4)

    print("KERNEL_OK")
</pallas_src>

<mosaic_0001>
module attributes {stable_mosaic.version = 11 : i64} {
  func.func @_last_layer_kernel(%arg0: i32, %arg1: i32, %arg2: memref<2x256x256xf32, #tpu.memory_space<vmem>>, %arg3: memref<1x256xf32, #tpu.memory_space<vmem>>, %arg4: memref<1x256xf32, #tpu.memory_space<vmem>>, %arg5: memref<2x256xf32, #tpu.memory_space<vmem>>) attributes {dimension_semantics = [#tpu.dimension_semantics<parallel>, #tpu.dimension_semantics<parallel>], iteration_bounds = array<i64: 1, 2>, scalar_prefetch = 0 : i64, scratch_operands = 0 : i64, tpu.core_type = #tpu.core_type<tc>, window_params = [{transform_indices = @transform_0, window_bounds = array<i64: 2, 256, 256>}, {transform_indices = @transform_1, window_bounds = array<i64: 1, 256>}, {transform_indices = @transform_2, window_bounds = array<i64: 1, 256>}, {transform_indices = @transform_3, window_bounds = array<i64: 2, 256>}]} {
    %c0 = arith.constant 0 : index
    %c0_0 = arith.constant 0 : index
    %c0_1 = arith.constant 0 : index
    %0 = vector.load %arg2[%c0, %c0_0, %c0_1] : memref<2x256x256xf32, #tpu.memory_space<vmem>>, vector<2x256x256xf32>
    %cst = arith.constant dense<0.000000e+00> : vector<2x256xf32>
    %1 = vector.multi_reduction <add>, %0, %cst [2] : vector<2x256x256xf32> to vector<2x256xf32>
    %cst_2 = arith.constant 3.906250e-03 : f32
    %2 = vector.broadcast %cst_2 : f32 to vector<2x256xf32>
    %3 = arith.mulf %1, %2 : vector<2x256xf32>
    %c0_3 = arith.constant 0 : index
    %c0_4 = arith.constant 0 : index
    %4 = vector.load %arg3[%c0_3, %c0_4] : memref<1x256xf32, #tpu.memory_space<vmem>>, vector<1x256xf32>
    %5 = vector.broadcast %4 : vector<1x256xf32> to vector<2x256xf32>
    %6 = arith.mulf %3, %5 : vector<2x256xf32>
    %c0_5 = arith.constant 0 : index
    %c0_6 = arith.constant 0 : index
    %7 = vector.load %arg4[%c0_5, %c0_6] : memref<1x256xf32, #tpu.memory_space<vmem>>, vector<1x256xf32>
    %8 = vector.broadcast %7 : vector<1x256xf32> to vector<2x256xf32>
    %9 = arith.addf %6, %8 : vector<2x256xf32>
    %c0_7 = arith.constant 0 : index
    %c0_8 = arith.constant 0 : index
    %10 = vector.load %arg5[%c0_7, %c0_8] : memref<2x256xf32, #tpu.memory_space<vmem>>, vector<2x256xf32>
    tpu.vector_store %arg5[%c0_7, %c0_8], %9 {strides = array<i32>} : memref<2x256xf32, #tpu.memory_space<vmem>>, vector<2x256xf32>,
    return
  }
  func.func @transform_0(%arg0: i32, %arg1: i32) -> (i32, i32, i32) {
    %c0_i32 = arith.constant 0 : i32
    %c0_i32_0 = arith.constant 0 : i32
    return %arg0, %arg1, %c0_i32 : i32, i32, i32
  }
  func.func @transform_1(%arg0: i32, %arg1: i32) -> (i32, i32) {
    %c0_i32 = arith.constant 0 : i32
    %c0_i32_0 = arith.constant 0 : i32
    return %c0_i32, %arg1 : i32, i32
  }
  func.func @transform_2(%arg0: i32, %arg1: i32) -> (i32, i32) {
    %c0_i32 = arith.constant 0 : i32
    %c0_i32_0 = arith.constant 0 : i32
    return %c0_i32, %arg1 : i32, i32
  }
  func.func @transform_3(%arg0: i32, %arg1: i32) -> (i32, i32) {
    %c0_i32 = arith.constant 0 : i32
    return %arg0, %arg1 : i32, i32
  }
}

</mosaic_0001>

<llo_original>
// kernel: tpu_custom_call.1
$region0: #{tpu_custom_call.1}
  #allocation0 [shape = 'u32[]', space=smem, size = 0x4, offset = 0x4, fixed_abs, tag = 'smem constant byte address 0x4 - core index']
  #allocation1 [shape = 'u32[144,128]{1,0:T(1,128)}', space=vmem, size = 0x12000, scoped, tag = 'internal scratch']
  #allocation8 [shape = 's32[]', space=sflag, size = 0x4, offset = 0, fixed_abs, tag = 'sflag constant byte address 0x0 - dummy sync flag']
  %s0 = inlined_call_operand.hbm [shape: f32[2,512,256], index: 0, kind: input, shape index: {}]
  %s1 = inlined_call_operand.hbm [shape: f32[1,512], index: 1, kind: input, shape index: {}]
  %s2 = inlined_call_operand.vmem [shape: f32[1,512], index: 2, kind: input, shape index: {}]
  %s3 = inlined_call_operand.hbm [shape: f32[2,512], index: 3, kind: output, shape index: {}]
  %s4 = sld [smem:[#allocation0]]
  $region53: #{tpu_custom_call.1} parent=0
    _
  %s6 = ssub.s32 1, %s4
  %s7 = scalar_select 0, %s6, %s4
  $region1: #{tpu_custom_call.1} parent=0
    #allocation2 [shape = 'u8[1048576]{0}', space=vmem, size = 0x100000, scoped, tag = 'input window, operand 0']
    #allocation3 [shape = 's32[2]{0}', space=sflag, size = 0x8, scoped, tag = 'scoped memory for tpu_custom_call.1']
    #allocation4 [shape = 's32[2]{0}', space=sflag, size = 0x8, scoped, tag = 'scoped memory for tpu_custom_call.1']
    #allocation5 [shape = 'u8[2048]{0}', space=vmem, size = 0x800, scoped, tag = 'input window, operand 1']
    #allocation6 [shape = 's32[2]{0}', space=sflag, size = 0x8, scoped, tag = 'scoped memory for tpu_custom_call.1']
    #allocation7 [shape = 'u8[4096]{0}', space=vmem, size = 0x1000, scoped, tag = 'output window, operand 0']
    %8 = vsyncpa [#allocation3], 0
    %s9 = scalar_lea.sflag [#allocation3], 1
    %10 = vsyncpa %s9, 0
    %11 = vsyncpa [#allocation6], 0
    %s12 = scalar_lea.sflag [#allocation6], 1
    %13 = vsyncpa %s12, 0
    %14 = vsyncpa [#allocation4], 0
    %s15 = scalar_lea.sflag [#allocation4], 1
    %16 = vsyncpa %s15, 0
    loop: start=0, step=1, limit=4
    $region2: #{tpu_custom_call.1} parent=1 // loop_pre_header
      _
    $region3: #{tpu_custom_call.1} parent=1 // loop_header
      %s18 = sphi 0, %s22
      %p19 = scmp.ge.s32.totalorder %s18, 4
      %s25 = sphi 0, %s37
      %s26 = sphi 0, %s33
      %s27 = sphi 0, %s25
      %s28 = sphi 0, %s26
      %s29 = sphi 0, %s27
      %s30 = sphi 0, %s28
      %s42 = sphi 0, %s44
      %s45 = sphi 0, %s42
      %s46 = sphi 0, %s45
      %s62 = sphi 0, %s46
      %s68 = sphi 0, %s70
      %s71 = sphi 0, %s68
      %s72 = sphi 0, %s71
      %s88 = sphi 0, %s72
      %s94 = sphi 0, %s96
      %s97 = sphi 0, %s94
      %s98 = sphi 0, %s97
      %s114 = sphi 0, %s98
      %s122 = sphi 0, %s124
      %s125 = sphi 0, %s122
      %s126 = sphi 0, %s125
      %s142 = sphi 0, %s126
    $region4: #{tpu_custom_call.1} parent=1 // loop_header_branch
      %21 = sbr.rel (%p19) target = $region8
    $region5: #{tpu_custom_call.1} parent=1 // loop_body
      %s23 = ssub.s32 %s18, 1
      %s24 = ssub.s32 %s18, 2
      %s31 = sadd.s32 1, %s26
      %p32 = scmp.ge.s32.totalorder %s31, 2
      %s33 = scalar_select %p32, 0, %s31
      %s34 = sadd.s32 1, %s25
      %s35 = scalar_select %p32, %s34, %s25
      %p36 = scmp.ge.s32.totalorder %s35, 1
      %s37 = scalar_select %p36, 0, %s35
      %s38 = ssub.s32 %s25, %s37
      %s39 = ssub.s32 %s26, %s33
      %s40 = sor.u32 %s38, %s39
      %p41 = scmp.eq.s32.totalorder %s40, 0
      %s43 = sadd.s32 %s42, 1
      %s44 = scalar_select %p41, %s42, %s43
      %p47 = pneg %p41
      %p48 = scmp.eq.s32.totalorder %s18, 1
      %p49 = por %p47, %p48
      %p50 = scmp.ne.s32.totalorder %s42, %s45
      %p51 = scmp.eq.s32.totalorder %s18, 0
      %p52 = por %p50, %p51
      %p53 = scmp.ne.s32.totalorder %s42, %s45
      %p54 = scmp.eq.s32.totalorder %s23, 1
      %p55 = por %p53, %p54
      %p56 = scmp.ne.s32.totalorder %s45, %s46
      %p57 = scmp.eq.s32.totalorder %s23, 0
      %p58 = por %p56, %p57
      %p59 = scmp.ne.s32.totalorder %s45, %s46
      %p60 = scmp.eq.s32.totalorder %s24, 1
      %p61 = por %p59, %p60
      %p63 = scmp.ne.s32.totalorder %s46, %s62
      %p64 = scmp.eq.s32.totalorder %s24, 0
      %p65 = por %p63, %p64
      %s66 = ssub.s32 %s26, %s33
      %p67 = scmp.eq.s32.totalorder %s66, 0
      %s69 = sadd.s32 %s68, 1
      %s70 = scalar_select %p67, %s68, %s69
      %p73 = pneg %p67
      %p74 = scmp.eq.s32.totalorder %s18, 1
      %p75 = por %p73, %p74
      %p76 = scmp.ne.s32.totalorder %s68, %s71
      %p77 = scmp.eq.s32.totalorder %s18, 0
      %p78 = por %p76, %p77
      %p79 = scmp.ne.s32.totalorder %s68, %s71
      %p80 = scmp.eq.s32.totalorder %s23, 1
      %p81 = por %p79, %p80
      %p82 = scmp.ne.s32.totalorder %s71, %s72
      %p83 = scmp.eq.s32.totalorder %s23, 0
      %p84 = por %p82, %p83
      %p85 = scmp.ne.s32.totalorder %s71, %s72
      %p86 = scmp.eq.s32.totalorder %s24, 1
      %p87 = por %p85, %p86
      %p89 = scmp.ne.s32.totalorder %s72, %s88
      %p90 = scmp.eq.s32.totalorder %s24, 0
      %p91 = por %p89, %p90
      %s92 = ssub.s32 %s26, %s33
      %p93 = scmp.eq.s32.totalorder %s92, 0
      %s95 = sadd.s32 %s94, 1
      %s96 = scalar_select %p93, %s94, %s95
      %p99 = pneg %p93
      %p100 = scmp.eq.s32.totalorder %s18, 1
      %p101 = por %p99, %p100
      %p102 = scmp.ne.s32.totalorder %s94, %s97
      %p103 = scmp.eq.s32.totalorder %s18, 0
      %p104 = por %p102, %p103
      %p105 = scmp.ne.s32.totalorder %s94, %s97
      %p106 = scmp.eq.s32.totalorder %s23, 1
      %p107 = por %p105, %p106
      %p108 = scmp.ne.s32.totalorder %s97, %s98
      %p109 = scmp.eq.s32.totalorder %s23, 0
      %p110 = por %p108, %p109
      %p111 = scmp.ne.s32.totalorder %s97, %s98
      %p112 = scmp.eq.s32.totalorder %s24, 1
      %p113 = por %p111, %p112
      %p115 = scmp.ne.s32.totalorder %s98, %s114
      %p116 = scmp.eq.s32.totalorder %s24, 0
      %p117 = por %p115, %p116
      %s118 = ssub.s32 %s25, %s37
      %s119 = ssub.s32 %s26, %s33
      %s120 = sor.u32 %s118, %s119
      %p121 = scmp.eq.s32.totalorder %s120, 0
      %s123 = sadd.s32 %s122, 1
      %s124 = scalar_select %p121, %s122, %s123
      %p127 = pneg %p121
      %p128 = scmp.eq.s32.totalorder %s18, 1
      %p129 = por %p127, %p128
      %p130 = scmp.ne.s32.totalorder %s122, %s125
      %p131 = scmp.eq.s32.totalorder %s18, 0
      %p132 = por %p130, %p131
      %p133 = scmp.ne.s32.totalorder %s122, %s125
      %p134 = scmp.eq.s32.totalorder %s23, 1
      %p135 = por %p133, %p134
      %p136 = scmp.ne.s32.totalorder %s125, %s126
      %p137 = scmp.eq.s32.totalorder %s23, 0
      %p138 = por %p136, %p137
      %p139 = scmp.ne.s32.totalorder %s125, %s126
      %p140 = scmp.eq.s32.totalorder %s24, 1
      %p141 = por %p139, %p140
      %p143 = scmp.ne.s32.totalorder %s126, %s142
      %p144 = scmp.eq.s32.totalorder %s24, 0
      %p145 = por %p143, %p144
      %p146 = scmp.le.s32.totalorder 1, %s18
      %p147 = scmp.lt.s32.totalorder %s18, 3
      %p148 = pnand %p146, %p147
      %p149 = pneg %p148
      // Predicated region
      $region9: #{tpu_custom_call.1} parent=5 // pred_check
        _
      $region10: #{tpu_custom_call.1} parent=5 // pred_check_branch
        %151 = sbr.rel (%p148) target = $region12
      $region11: #{tpu_custom_call.1} parent=5 // pred_region
        %s152 = ssub.s32 %s18, 1
      $region12: #{tpu_custom_call.1} parent=5 // pred_fallthru
        _
      %p153 = scmp.lt.s32.totalorder %s18, 2
      // Predicated region
      $region13: #{tpu_custom_call.1} parent=5 // pred_check
        %p154 = pneg %p153
      $region14: #{tpu_custom_call.1} parent=5 // pred_check_branch
        %156 = sbr.rel (%p154) target = $region16
      $region15: #{tpu_custom_call.1} parent=5 // pred_region
        // Predicated region
        $region17: #{tpu_custom_call.1} parent=15 // pred_check
          %p157 = pneg %p52
        $region18: #{tpu_custom_call.1} parent=15 // pred_check_branch
          %159 = sbr.rel (%p157) target = $region20
        $region19: #{tpu_custom_call.1} parent=15 // pred_region
          #allocation9 [shape = 'u32[6]{0}', space=smem, size = 0x18, scoped, tag = 'DMA stride descriptor']
          %s160 = sand.u32 %s42, 1
          %s161 = scalar_lea.sflag [#allocation3], %s160
          %s162 = sand.u32 %s42, 1
          %s163 = smul.addr %s162, 1024
          %s164 = scalar_lea.vmem [#allocation2], %s163
          %s165 = smul.u32 2, %s25
          %s166 = smul.u32 32, %s26
          %s168 = ssub.s32 16384, 16384
          %169 = vsyncadd %s161, %s168
          %s170 = smul.addr %s166, 2
          %s171 = smul.addr %s165, 128
          %s172 = sadd.s32 %s170, %s171
          %s173 = smul.addr %s172, 128
          %s174 = scalar_lea.hbm %s0, %s173
          %s176 = sshll.u32 1, 14
          %s177 = sxor.u32 4294967295, %s176
          %s179 = sld [smem:[#allocation0]]
          %s180 = sadd.s32 2, %s179
          %s182 = sshll.u32 7, 26
          %s183 = sxor.u32 4294967295, %s182
          %s184 = sand.u32 0, %s183
          %s185 = sshll.u32 %s180, 26
          %s186 = sor.u32 %s184, %s185
          %s187 = sshll.u32 %s164, 4
          %s188 = int_to_ptr.vmem [resolvable:$true] %s187
          %194 = sst [smem:[#allocation9]] 16384
          %s195 = scalar_lea.smem [#allocation9], 1
          %196 = sst [smem:[%s195]] 8192
          %s197 = scalar_lea.smem [#allocation9], 2
          %198 = sst [smem:[%s197]] 32
          %s199 = scalar_lea.smem [#allocation9], 3
          %200 = sst [smem:[%s199]] 256
          %s201 = scalar_lea.smem [#allocation9], 4
          %202 = sst [smem:[%s201]] 256
          %s203 = scalar_lea.smem [#allocation9], 5
          %204 = sst [smem:[%s203]] 16
          %206 = dma.general %s174, 16384, %s188, %s161, [#allocation8], [#allocation9], %s186, 0
        $region20: #{tpu_custom_call.1} parent=15 // pred_fallthru
          _
        // Predicated region
        $region21: #{tpu_custom_call.1} parent=15 // pred_check
          %p207 = pneg %p78
        $region22: #{tpu_custom_call.1} parent=15 // pred_check_branch
          %209 = sbr.rel (%p207) target = $region24
        $region23: #{tpu_custom_call.1} parent=15 // pred_region
          %s210 = sand.u32 %s68, 1
          %s211 = scalar_lea.sflag [#allocation6], %s210
          %s212 = sand.u32 %s68, 1
          %s213 = smul.addr %s212, 2
          %s214 = scalar_lea.vmem [#allocation5], %s213
          %s215 = smul.u32 2, %s26
          %s217 = ssub.s32 32, 32
          %218 = vsyncadd %s211, %s217
          %s219 = smul.addr %s215, 16
          %s220 = scalar_lea.hbm %s1, %s219
          %s222 = sshll.u32 %s214, 4
          %s223 = int_to_ptr.vmem [resolvable:$true] %s222
          %225 = dma.hbm_to_vmem [thread:$0]  %s220, 32, %s223, %s211
        $region24: #{tpu_custom_call.1} parent=15 // pred_fallthru
          _
        // Predicated region
        $region25: #{tpu_custom_call.1} parent=15 // pred_check
          %p226 = pneg %p104
        $region26: #{tpu_custom_call.1} parent=15 // pred_check_branch
          %228 = sbr.rel (%p226) target = $region28
        $region27: #{tpu_custom_call.1} parent=15 // pred_region
          %s229 = smul.u32 2, %s26
          %p230 = scmp.lt.s32.totalorder %s229, 3
          %s231 = scalar_select %p230, %s229, 3
          %s232 = scalar_lea.vmem %s2, %s231
          %s233 = smul.u32 2, %s26
        $region28: #{tpu_custom_call.1} parent=15 // pred_fallthru
          _
      $region16: #{tpu_custom_call.1} parent=5 // pred_fallthru
        _
      %p234 = scmp.le.s32.totalorder 1, %s18
      %p235 = scmp.lt.s32.totalorder %s18, 3
      %p236 = pnand %p234, %p235
      %p237 = pneg %p236
      // Predicated region
      $region29: #{tpu_custom_call.1} parent=5 // pred_check
        _
      $region30: #{tpu_custom_call.1} parent=5 // pred_check_branch
        %239 = sbr.rel (%p236) target = $region32
      $region31: #{tpu_custom_call.1} parent=5 // pred_region
        %s240 = ssub.s32 %s18, 1
        %s241 = sand.u32 %s45, 1
        %s242 = scalar_lea.sflag [#allocation3], %s241
        %s243 = sand.u32 %s45, 1
        %s244 = smul.addr %s243, 1024
        %s245 = scalar_lea.vmem [#allocation2], %s244
        // Predicated region
        $region33: #{tpu_custom_call.1} parent=31 // pred_check
          %p246 = pneg %p58
        $region34: #{tpu_custom_call.1} parent=31 // pred_check_branch
          %248 = sbr.rel (%p246) target = $region36
        $region35: #{tpu_custom_call.1} parent=31 // pred_region
          %249 = dma.done %s242, 16384
        $region36: #{tpu_custom_call.1} parent=31 // pred_fallthru
          _
        %s250 = sand.u32 %s71, 1
        %s251 = scalar_lea.sflag [#allocation6], %s250
        %s252 = sand.u32 %s71, 1
        %s253 = smul.addr %s252, 2
        %s254 = scalar_lea.vmem [#allocation5], %s253
        // Predicated region
        $region37: #{tpu_custom_call.1} parent=31 // pred_check
          %p255 = pneg %p84
        $region38: #{tpu_custom_call.1} parent=31 // pred_check_branch
          %257 = sbr.rel (%p255) target = $region40
        $region39: #{tpu_custom_call.1} parent=31 // pred_region
          %258 = dma.done %s251, 32
        $region40: #{tpu_custom_call.1} parent=31 // pred_fallthru
          _
        %s259 = sand.u32 %s45, 1
        %s260 = scalar_lea.sflag [#allocation3], %s259
        %s261 = sand.u32 %s45, 1
        %s262 = smul.addr %s261, 1024
        %s263 = scalar_lea.vmem [#allocation2], %s262
        %p264 = pneg %p58
        %p265 = pneg %p55
        %s266 = sand.u32 %s71, 1
        %s267 = scalar_lea.sflag [#allocation6], %s266
        %s268 = sand.u32 %s71, 1
        %s269 = smul.addr %s268, 2
        %s270 = scalar_lea.vmem [#allocation5], %s269
        %p271 = pneg %p84
        %p272 = pneg %p81
        %s273 = smul.u32 2, %s28
        %p274 = scmp.lt.s32.totalorder %s273, 3
        %s275 = scalar_select %p274, %s273, 3
        %s276 = scalar_lea.vmem %s2, %s275
        %p277 = pneg %p110
        %p278 = pneg %p107
        %p279 = pneg %p138
        %p280 = pneg %p135
        %s281 = sand.u32 %s125, 1
        %s282 = scalar_lea.sflag [#allocation4], %s281
        %s283 = sand.u32 %s125, 1
        %s284 = smul.addr %s283, 4
        %s285 = scalar_lea.vmem [#allocation7], %s284
        %s286 = smul.u32 2, %s27
        %s287 = smul.u32 32, %s28
        %s288 = smul.u32 2, %s28
        %s289 = smul.u32 2, %s28
        %p290 = scmp.lt.s32.totalorder %s289, 3
        %s291 = scalar_select %p290, %s289, 3
        %s292 = scalar_lea.vmem %s2, %s291
        %s293 = smul.u32 2, %s28
        %s294 = smul.u32 2, %s28
        %v295 = vld [vmem:[%s245] sm:$0xff]
        %v296 = vld [vmem:[%s245 + $0x8] sm:$0xff]
        %v297 = vld [vmem:[%s245 + $0x10] sm:$0xff]
        %v298 = vld [vmem:[%s245 + $0x18] sm:$0xff]
        %v299 = vld [vmem:[%s245 + $0x20] sm:$0xff]
        %v300 = vld [vmem:[%s245 + $0x28] sm:$0xff]
        %v301 = vld [vmem:[%s245 + $0x30] sm:$0xff]
        %v302 = vld [vmem:[%s245 + $0x38] sm:$0xff]
        %v303 = vld [vmem:[%s245 + $0x40] sm:$0xff]
        %v304 = vld [vmem:[%s245 + $0x48] sm:$0xff]
        %v305 = vld [vmem:[%s245 + $0x50] sm:$0xff]
        %v306 = vld [vmem:[%s245 + $0x58] sm:$0xff]
        %v307 = vld [vmem:[%s245 + $0x60] sm:$0xff]
        %v308 = vld [vmem:[%s245 + $0x68] sm:$0xff]
        %v309 = vld [vmem:[%s245 + $0x70] sm:$0xff]
        %v310 = vld [vmem:[%s245 + $0x78] sm:$0xff]
        %v311 = vld [vmem:[%s245 + $0x80] sm:$0xff]
        %v312 = vld [vmem:[%s245 + $0x88] sm:$0xff]
        %v313 = vld [vmem:[%s245 + $0x90] sm:$0xff]
        %v314 = vld [vmem:[%s245 + $0x98] sm:$0xff]
        %v315 = vld [vmem:[%s245 + $0xa0] sm:$0xff]
        %v316 = vld [vmem:[%s245 + $0xa8] sm:$0xff]
        %v317 = vld [vmem:[%s245 + $0xb0] sm:$0xff]
        %v318 = vld [vmem:[%s245 + $0xb8] sm:$0xff]
        %v319 = vld [vmem:[%s245 + $0xc0] sm:$0xff]
        %v320 = vld [vmem:[%s245 + $0xc8] sm:$0xff]
        %v321 = vld [vmem:[%s245 + $0xd0] sm:$0xff]
        %v322 = vld [vmem:[%s245 + $0xd8] sm:$0xff]
        %v323 = vld [vmem:[%s245 + $0xe0] sm:$0xff]
        %v324 = vld [vmem:[%s245 + $0xe8] sm:$0xff]
        %v325 = vld [vmem:[%s245 + $0xf0] sm:$0xff]
        %v326 = vld [vmem:[%s245 + $0xf8] sm:$0xff]
        %v327 = vld [vmem:[%s245 + $0x100] sm:$0xff]
        %v328 = vld [vmem:[%s245 + $0x108] sm:$0xff]
        %v329 = vld [vmem:[%s245 + $0x110] sm:$0xff]
        %v330 = vld [vmem:[%s245 + $0x118] sm:$0xff]
        %v331 = vld [vmem:[%s245 + $0x120] sm:$0xff]
        %v332 = vld [vmem:[%s245 + $0x128] sm:$0xff]
        %v333 = vld [vmem:[%s245 + $0x130] sm:$0xff]
        %v334 = vld [vmem:[%s245 + $0x138] sm:$0xff]
        %v335 = vld [vmem:[%s245 + $0x140] sm:$0xff]
        %v336 = vld [vmem:[%s245 + $0x148] sm:$0xff]
        %v337 = vld [vmem:[%s245 + $0x150] sm:$0xff]
        %v338 = vld [vmem:[%s245 + $0x158] sm:$0xff]
        %v339 = vld [vmem:[%s245 + $0x160] sm:$0xff]
        %v340 = vld [vmem:[%s245 + $0x168] sm:$0xff]
        %v341 = vld [vmem:[%s245 + $0x170] sm:$0xff]
        %v342 = vld [vmem:[%s245 + $0x178] sm:$0xff]
        %v343 = vld [vmem:[%s245 + $0x180] sm:$0xff]
        %v344 = vld [vmem:[%s245 + $0x188] sm:$0xff]
        %v345 = vld [vmem:[%s245 + $0x190] sm:$0xff]
        %v346 = vld [vmem:[%s245 + $0x198] sm:$0xff]
        %v347 = vld [vmem:[%s245 + $0x1a0] sm:$0xff]
        %v348 = vld [vmem:[%s245 + $0x1a8] sm:$0xff]
        %v349 = vld [vmem:[%s245 + $0x1b0] sm:$0xff]
        %v350 = vld [vmem:[%s245 + $0x1b8] sm:$0xff]
        %v351 = vld [vmem:[%s245 + $0x1c0] sm:$0xff]
        %v352 = vld [vmem:[%s245 + $0x1c8] sm:$0xff]
        %v353 = vld [vmem:[%s245 + $0x1d0] sm:$0xff]
        %v354 = vld [vmem:[%s245 + $0x1d8] sm:$0xff]
        %v355 = vld [vmem:[%s245 + $0x1e0] sm:$0xff]
        %v356 = vld [vmem:[%s245 + $0x1e8] sm:$0xff]
        %v357 = vld [vmem:[%s245 + $0x1f0] sm:$0xff]
        %v358 = vld [vmem:[%s245 + $0x1f8] sm:$0xff]
        %v359 = vld [vmem:[%s245 + $0x200] sm:$0xff]
        %v360 = vld [vmem:[%s245 + $0x208] sm:$0xff]
        %v361 = vld [vmem:[%s245 + $0x210] sm:$0xff]
        %v362 = vld [vmem:[%s245 + $0x218] sm:$0xff]
        %v363 = vld [vmem:[%s245 + $0x220] sm:$0xff]
        %v364 = vld [vmem:[%s245 + $0x228] sm:$0xff]
        %v365 = vld [vmem:[%s245 + $0x230] sm:$0xff]
        %v366 = vld [vmem:[%s245 + $0x238] sm:$0xff]
        %v367 = vld [vmem:[%s245 + $0x240] sm:$0xff]
        %v368 = vld [vmem:[%s245 + $0x248] sm:$0xff]
        %v369 = vld [vmem:[%s245 + $0x250] sm:$0xff]
        %v370 = vld [vmem:[%s245 + $0x258] sm:$0xff]
        %v371 = vld [vmem:[%s245 + $0x260] sm:$0xff]
        %v372 = vld [vmem:[%s245 + $0x268] sm:$0xff]
        %v373 = vld [vmem:[%s245 + $0x270] sm:$0xff]
        %v374 = vld [vmem:[%s245 + $0x278] sm:$0xff]
        %v375 = vld [vmem:[%s245 + $0x280] sm:$0xff]
        %v376 = vld [vmem:[%s245 + $0x288] sm:$0xff]
        %v377 = vld [vmem:[%s245 + $0x290] sm:$0xff]
        %v378 = vld [vmem:[%s245 + $0x298] sm:$0xff]
        %v379 = vld [vmem:[%s245 + $0x2a0] sm:$0xff]
        %v380 = vld [vmem:[%s245 + $0x2a8] sm:$0xff]
        %v381 = vld [vmem:[%s245 + $0x2b0] sm:$0xff]
        %v382 = vld [vmem:[%s245 + $0x2b8] sm:$0xff]
        %v383 = vld [vmem:[%s245 + $0x2c0] sm:$0xff]
        %v384 = vld [vmem:[%s245 + $0x2c8] sm:$0xff]
        %v385 = vld [vmem:[%s245 + $0x2d0] sm:$0xff]
        %v386 = vld [vmem:[%s245 + $0x2d8] sm:$0xff]
        %v387 = vld [vmem:[%s245 + $0x2e0] sm:$0xff]
        %v388 = vld [vmem:[%s245 + $0x2e8] sm:$0xff]
        %v389 = vld [vmem:[%s245 + $0x2f0] sm:$0xff]
        %v390 = vld [vmem:[%s245 + $0x2f8] sm:$0xff]
        %v391 = vld [vmem:[%s245 + $0x300] sm:$0xff]
        %v392 = vld [vmem:[%s245 + $0x308] sm:$0xff]
        %v393 = vld [vmem:[%s245 + $0x310] sm:$0xff]
        %v394 = vld [vmem:[%s245 + $0x318] sm:$0xff]
        %v395 = vld [vmem:[%s245 + $0x320] sm:$0xff]
        %v396 = vld [vmem:[%s245 + $0x328] sm:$0xff]
        %v397 = vld [vmem:[%s245 + $0x330] sm:$0xff]
        %v398 = vld [vmem:[%s245 + $0x338] sm:$0xff]
        %v399 = vld [vmem:[%s245 + $0x340] sm:$0xff]
        %v400 = vld [vmem:[%s245 + $0x348] sm:$0xff]
        %v401 = vld [vmem:[%s245 + $0x350] sm:$0xff]
        %v402 = vld [vmem:[%s245 + $0x358] sm:$0xff]
        %v403 = vld [vmem:[%s245 + $0x360] sm:$0xff]
        %v404 = vld [vmem:[%s245 + $0x368] sm:$0xff]
        %v405 = vld [vmem:[%s245 + $0x370] sm:$0xff]
        %v406 = vld [vmem:[%s245 + $0x378] sm:$0xff]
        %v407 = vld [vmem:[%s245 + $0x380] sm:$0xff]
        %v408 = vld [vmem:[%s245 + $0x388] sm:$0xff]
        %v409 = vld [vmem:[%s245 + $0x390] sm:$0xff]
        %v410 = vld [vmem:[%s245 + $0x398] sm:$0xff]
        %v411 = vld [vmem:[%s245 + $0x3a0] sm:$0xff]
        %v412 = vld [vmem:[%s245 + $0x3a8] sm:$0xff]
        %v413 = vld [vmem:[%s245 + $0x3b0] sm:$0xff]
        %v414 = vld [vmem:[%s245 + $0x3b8] sm:$0xff]
        %v415 = vld [vmem:[%s245 + $0x3c0] sm:$0xff]
        %v416 = vld [vmem:[%s245 + $0x3c8] sm:$0xff]
        %v417 = vld [vmem:[%s245 + $0x3d0] sm:$0xff]
        %v418 = vld [vmem:[%s245 + $0x3d8] sm:$0xff]
        %v419 = vld [vmem:[%s245 + $0x3e0] sm:$0xff]
        %v420 = vld [vmem:[%s245 + $0x3e8] sm:$0xff]
        %v421 = vld [vmem:[%s245 + $0x3f0] sm:$0xff]
        %v422 = vld [vmem:[%s245 + $0x3f8] sm:$0xff]
        %v423 = vadd.f32 %v295, %v296
        %424 = vadd.xlane.f32.xlu0 %v423
        %v425 = vpop.xlane.xlu0 %424
        %v426 = vadd.f32 %v297, %v298
        %427 = vadd.xlane.f32.xlu0 %v426
        %v428 = vpop.xlane.xlu0 %427
        %v429 = vadd.f32 %v299, %v300
        %430 = vadd.xlane.f32.xlu0 %v429
        %v431 = vpop.xlane.xlu0 %430
        %v432 = vadd.f32 %v301, %v302
        %433 = vadd.xlane.f32.xlu0 %v432
        %v434 = vpop.xlane.xlu0 %433
        %v435 = vadd.f32 %v303, %v304
        %436 = vadd.xlane.f32.xlu0 %v435
        %v437 = vpop.xlane.xlu0 %436
        %v438 = vadd.f32 %v305, %v306
        %439 = vadd.xlane.f32.xlu0 %v438
        %v440 = vpop.xlane.xlu0 %439
        %v441 = vadd.f32 %v307, %v308
        %442 = vadd.xlane.f32.xlu0 %v441
        %v443 = vpop.xlane.xlu0 %442
        %v444 = vadd.f32 %v309, %v310
        %445 = vadd.xlane.f32.xlu0 %v444
        %v446 = vpop.xlane.xlu0 %445
        %v447 = vadd.f32 %v311, %v312
        %448 = vadd.xlane.f32.xlu0 %v447
        %v449 = vpop.xlane.xlu0 %448
        %v450 = vadd.f32 %v313, %v314
        %451 = vadd.xlane.f32.xlu0 %v450
        %v452 = vpop.xlane.xlu0 %451
        %v453 = vadd.f32 %v315, %v316
        %454 = vadd.xlane.f32.xlu0 %v453
        %v455 = vpop.xlane.xlu0 %454
        %v456 = vadd.f32 %v317, %v318
        %457 = vadd.xlane.f32.xlu0 %v456
        %v458 = vpop.xlane.xlu0 %457
        %v459 = vadd.f32 %v319, %v320
        %460 = vadd.xlane.f32.xlu0 %v459
        %v461 = vpop.xlane.xlu0 %460
        %v462 = vadd.f32 %v321, %v322
        %463 = vadd.xlane.f32.xlu0 %v462
        %v464 = vpop.xlane.xlu0 %463
        %v465 = vadd.f32 %v323, %v324
        %466 = vadd.xlane.f32.xlu0 %v465
        %v467 = vpop.xlane.xlu0 %466
        %v468 = vadd.f32 %v325, %v326
        %469 = vadd.xlane.f32.xlu0 %v468
        %v470 = vpop.xlane.xlu0 %469
        %v471 = vadd.f32 %v327, %v328
        %472 = vadd.xlane.f32.xlu0 %v471
        %v473 = vpop.xlane.xlu0 %472
        %v474 = vadd.f32 %v329, %v330
        %475 = vadd.xlane.f32.xlu0 %v474
        %v476 = vpop.xlane.xlu0 %475
        %v477 = vadd.f32 %v331, %v332
        %478 = vadd.xlane.f32.xlu0 %v477
        %v479 = vpop.xlane.xlu0 %478
        %v480 = vadd.f32 %v333, %v334
        %481 = vadd.xlane.f32.xlu0 %v480
        %v482 = vpop.xlane.xlu0 %481
        %v483 = vadd.f32 %v335, %v336
        %484 = vadd.xlane.f32.xlu0 %v483
        %v485 = vpop.xlane.xlu0 %484
        %v486 = vadd.f32 %v337, %v338
        %487 = vadd.xlane.f32.xlu0 %v486
        %v488 = vpop.xlane.xlu0 %487
        %v489 = vadd.f32 %v339, %v340
        %490 = vadd.xlane.f32.xlu0 %v489
        %v491 = vpop.xlane.xlu0 %490
        %v492 = vadd.f32 %v341, %v342
        %493 = vadd.xlane.f32.xlu0 %v492
        %v494 = vpop.xlane.xlu0 %493
        %v495 = vadd.f32 %v343, %v344
        %496 = vadd.xlane.f32.xlu0 %v495
        %v497 = vpop.xlane.xlu0 %496
        %v498 = vadd.f32 %v345, %v346
        %499 = vadd.xlane.f32.xlu0 %v498
        %v500 = vpop.xlane.xlu0 %499
        %v501 = vadd.f32 %v347, %v348
        %502 = vadd.xlane.f32.xlu0 %v501
        %v503 = vpop.xlane.xlu0 %502
        %v504 = vadd.f32 %v349, %v350
        %505 = vadd.xlane.f32.xlu0 %v504
        %v506 = vpop.xlane.xlu0 %505
        %v507 = vadd.f32 %v351, %v352
        %508 = vadd.xlane.f32.xlu0 %v507
        %v509 = vpop.xlane.xlu0 %508
        %v510 = vadd.f32 %v353, %v354
        %511 = vadd.xlane.f32.xlu0 %v510
        %v512 = vpop.xlane.xlu0 %511
        %v513 = vadd.f32 %v355, %v356
        %514 = vadd.xlane.f32.xlu0 %v513
        %v515 = vpop.xlane.xlu0 %514
        %v516 = vadd.f32 %v357, %v358
        %517 = vadd.xlane.f32.xlu0 %v516
        %v518 = vpop.xlane.xlu0 %517
        %v519 = vadd.f32 %v359, %v360
        %520 = vadd.xlane.f32.xlu0 %v519
        %v521 = vpop.xlane.xlu0 %520
        %v522 = vadd.f32 %v361, %v362
        %523 = vadd.xlane.f32.xlu0 %v522
        %v524 = vpop.xlane.xlu0 %523
        %v525 = vadd.f32 %v363, %v364
        %526 = vadd.xlane.f32.xlu0 %v525
        %v527 = vpop.xlane.xlu0 %526
        %v528 = vadd.f32 %v365, %v366
        %529 = vadd.xlane.f32.xlu0 %v528
        %v530 = vpop.xlane.xlu0 %529
        %v531 = vadd.f32 %v367, %v368
        %532 = vadd.xlane.f32.xlu0 %v531
        %v533 = vpop.xlane.xlu0 %532
        %v534 = vadd.f32 %v369, %v370
        %535 = vadd.xlane.f32.xlu0 %v534
        %v536 = vpop.xlane.xlu0 %535
        %v537 = vadd.f32 %v371, %v372
        %538 = vadd.xlane.f32.xlu0 %v537
        %v539 = vpop.xlane.xlu0 %538
        %v540 = vadd.f32 %v373, %v374
        %541 = vadd.xlane.f32.xlu0 %v540
        %v542 = vpop.xlane.xlu0 %541
        %v543 = vadd.f32 %v375, %v376
        %544 = vadd.xlane.f32.xlu0 %v543
        %v545 = vpop.xlane.xlu0 %544
        %v546 = vadd.f32 %v377, %v378
        %547 = vadd.xlane.f32.xlu0 %v546
        %v548 = vpop.xlane.xlu0 %547
        %v549 = vadd.f32 %v379, %v380
        %550 = vadd.xlane.f32.xlu0 %v549
        %v551 = vpop.xlane.xlu0 %550
        %v552 = vadd.f32 %v381, %v382
        %553 = vadd.xlane.f32.xlu0 %v552
        %v554 = vpop.xlane.xlu0 %553
        %v555 = vadd.f32 %v383, %v384
        %556 = vadd.xlane.f32.xlu0 %v555
        %v557 = vpop.xlane.xlu0 %556
        %v558 = vadd.f32 %v385, %v386
        %559 = vadd.xlane.f32.xlu0 %v558
        %v560 = vpop.xlane.xlu0 %559
        %v561 = vadd.f32 %v387, %v388
        %562 = vadd.xlane.f32.xlu0 %v561
        %v563 = vpop.xlane.xlu0 %562
        %v564 = vadd.f32 %v389, %v390
        %565 = vadd.xlane.f32.xlu0 %v564
        %v566 = vpop.xlane.xlu0 %565
        %v567 = vadd.f32 %v391, %v392
        %568 = vadd.xlane.f32.xlu0 %v567
        %v569 = vpop.xlane.xlu0 %568
        %v570 = vadd.f32 %v393, %v394
        %571 = vadd.xlane.f32.xlu0 %v570
        %v572 = vpop.xlane.xlu0 %571
        %v573 = vadd.f32 %v395, %v396
        %574 = vadd.xlane.f32.xlu0 %v573
        %v575 = vpop.xlane.xlu0 %574
        %v576 = vadd.f32 %v397, %v398
        %577 = vadd.xlane.f32.xlu0 %v576
        %v578 = vpop.xlane.xlu0 %577
        %v579 = vadd.f32 %v399, %v400
        %580 = vadd.xlane.f32.xlu0 %v579
        %v581 = vpop.xlane.xlu0 %580
        %v582 = vadd.f32 %v401, %v402
        %583 = vadd.xlane.f32.xlu0 %v582
        %v584 = vpop.xlane.xlu0 %583
        %v585 = vadd.f32 %v403, %v404
        %586 = vadd.xlane.f32.xlu0 %v585
        %v587 = vpop.xlane.xlu0 %586
        %v588 = vadd.f32 %v405, %v406
        %589 = vadd.xlane.f32.xlu0 %v588
        %v590 = vpop.xlane.xlu0 %589
        %v591 = vadd.f32 %v407, %v408
        %592 = vadd.xlane.f32.xlu0 %v591
        %v593 = vpop.xlane.xlu0 %592
        %v594 = vadd.f32 %v409, %v410
        %595 = vadd.xlane.f32.xlu0 %v594
        %v596 = vpop.xlane.xlu0 %595
        %v597 = vadd.f32 %v411, %v412
        %598 = vadd.xlane.f32.xlu0 %v597
        %v599 = vpop.xlane.xlu0 %598
        %v600 = vadd.f32 %v413, %v414
        %601 = vadd.xlane.f32.xlu0 %v600
        %v602 = vpop.xlane.xlu0 %601
        %v603 = vadd.f32 %v415, %v416
        %604 = vadd.xlane.f32.xlu0 %v603
        %v605 = vpop.xlane.xlu0 %604
        %v606 = vadd.f32 %v417, %v418
        %607 = vadd.xlane.f32.xlu0 %v606
        %v608 = vpop.xlane.xlu0 %607
        %v609 = vadd.f32 %v419, %v420
        %610 = vadd.xlane.f32.xlu0 %v609
        %v611 = vpop.xlane.xlu0 %610
        %v612 = vadd.f32 %v421, %v422
        %613 = vadd.xlane.f32.xlu0 %v612
        %v614 = vpop.xlane.xlu0 %613
        %v615 = vmul.f32 %v425, 0.00390625
        %v616 = vmul.f32 %v428, 0.00390625
        %v617 = vmul.f32 %v431, 0.00390625
        %v618 = vmul.f32 %v434, 0.00390625
        %v619 = vmul.f32 %v437, 0.00390625
        %v620 = vmul.f32 %v440, 0.00390625
        %v621 = vmul.f32 %v443, 0.00390625
        %v622 = vmul.f32 %v446, 0.00390625
        %v623 = vmul.f32 %v449, 0.00390625
        %v624 = vmul.f32 %v452, 0.00390625
        %v625 = vmul.f32 %v455, 0.00390625
        %v626 = vmul.f32 %v458, 0.00390625
        %v627 = vmul.f32 %v461, 0.00390625
        %v628 = vmul.f32 %v464, 0.00390625
        %v629 = vmul.f32 %v467, 0.00390625
        %v630 = vmul.f32 %v470, 0.00390625
        %v631 = vmul.f32 %v473, 0.00390625
        %v632 = vmul.f32 %v476, 0.00390625
        %v633 = vmul.f32 %v479, 0.00390625
        %v634 = vmul.f32 %v482, 0.00390625
        %v635 = vmul.f32 %v485, 0.00390625
        %v636 = vmul.f32 %v488, 0.00390625
        %v637 = vmul.f32 %v491, 0.00390625
        %v638 = vmul.f32 %v494, 0.00390625
        %v639 = vmul.f32 %v497, 0.00390625
        %v640 = vmul.f32 %v500, 0.00390625
        %v641 = vmul.f32 %v503, 0.00390625
        %v642 = vmul.f32 %v506, 0.00390625
        %v643 = vmul.f32 %v509, 0.00390625
        %v644 = vmul.f32 %v512, 0.00390625
        %v645 = vmul.f32 %v515, 0.00390625
        %v646 = vmul.f32 %v518, 0.00390625
        %v647 = vmul.f32 %v521, 0.00390625
        %v648 = vmul.f32 %v524, 0.00390625
        %v649 = vmul.f32 %v527, 0.00390625
        %v650 = vmul.f32 %v530, 0.00390625
        %v651 = vmul.f32 %v533, 0.00390625
        %v652 = vmul.f32 %v536, 0.00390625
        %v653 = vmul.f32 %v539, 0.00390625
        %v654 = vmul.f32 %v542, 0.00390625
        %v655 = vmul.f32 %v545, 0.00390625
        %v656 = vmul.f32 %v548, 0.00390625
        %v657 = vmul.f32 %v551, 0.00390625
        %v658 = vmul.f32 %v554, 0.00390625
        %v659 = vmul.f32 %v557, 0.00390625
        %v660 = vmul.f32 %v560, 0.00390625
        %v661 = vmul.f32 %v563, 0.00390625
        %v662 = vmul.f32 %v566, 0.00390625
        %v663 = vmul.f32 %v569, 0.00390625
        %v664 = vmul.f32 %v572, 0.00390625
        %v665 = vmul.f32 %v575, 0.00390625
        %v666 = vmul.f32 %v578, 0.00390625
        %v667 = vmul.f32 %v581, 0.00390625
        %v668 = vmul.f32 %v584, 0.00390625
        %v669 = vmul.f32 %v587, 0.00390625
        %v670 = vmul.f32 %v590, 0.00390625
        %v671 = vmul.f32 %v593, 0.00390625
        %v672 = vmul.f32 %v596, 0.00390625
        %v673 = vmul.f32 %v599, 0.00390625
        %v674 = vmul.f32 %v602, 0.00390625
        %v675 = vmul.f32 %v605, 0.00390625
        %v676 = vmul.f32 %v608, 0.00390625
        %v677 = vmul.f32 %v611, 0.00390625
        %v678 = vmul.f32 %v614, 0.00390625
        %v679 = vld [vmem:[%s254] sm:$0x3]
        %v681 = vlaneseq
        %v682 = vshrl.u32 %v681, 7
        %v683 = vsub.s32 0, %v682
        %v684 = vrot.slane %v679, %v683
        %v685 = vlaneseq
        %v686 = vshrl.u32 %v685, 7
        %v687 = vsub.s32 1, %v686
        %v688 = vrot.slane %v679, %v687
        %690 = vbcast.lane.b32.xlu0 %v684, 256
        %v691 = vpop.permute.xlu0 %690
        %s693 = sor.u32 256, 8
        %694 = vbcast.lane.b32.xlu0 %v684, %s693
        %v695 = vpop.permute.xlu0 %694
        %s697 = sor.u32 256, 16
        %698 = vbcast.lane.b32.xlu0 %v684, %s697
        %v699 = vpop.permute.xlu0 %698
        %s701 = sor.u32 256, 24
        %702 = vbcast.lane.b32.xlu0 %v684, %s701
        %v703 = vpop.permute.xlu0 %702
        %s705 = sor.u32 256, 32
        %706 = vbcast.lane.b32.xlu0 %v684, %s705
        %v707 = vpop.permute.xlu0 %706
        %s709 = sor.u32 256, 40
        %710 = vbcast.lane.b32.xlu0 %v684, %s709
        %v711 = vpop.permute.xlu0 %710
        %s713 = sor.u32 256, 48
        %714 = vbcast.lane.b32.xlu0 %v684, %s713
        %v715 = vpop.permute.xlu0 %714
        %s717 = sor.u32 256, 56
        %718 = vbcast.lane.b32.xlu0 %v684, %s717
        %v719 = vpop.permute.xlu0 %718
        %s721 = sor.u32 256, 64
        %722 = vbcast.lane.b32.xlu0 %v684, %s721
        %v723 = vpop.permute.xlu0 %722
        %s725 = sor.u32 256, 72
        %726 = vbcast.lane.b32.xlu0 %v684, %s725
        %v727 = vpop.permute.xlu0 %726
        %s729 = sor.u32 256, 80
        %730 = vbcast.lane.b32.xlu0 %v684, %s729
        %v731 = vpop.permute.xlu0 %730
        %s733 = sor.u32 256, 88
        %734 = vbcast.lane.b32.xlu0 %v684, %s733
        %v735 = vpop.permute.xlu0 %734
        %s737 = sor.u32 256, 96
        %738 = vbcast.lane.b32.xlu0 %v684, %s737
        %v739 = vpop.permute.xlu0 %738
        %s741 = sor.u32 256, 104
        %742 = vbcast.lane.b32.xlu0 %v684, %s741
        %v743 = vpop.permute.xlu0 %742
        %s745 = sor.u32 256, 112
        %746 = vbcast.lane.b32.xlu0 %v684, %s745
        %v747 = vpop.permute.xlu0 %746
        %s749 = sor.u32 256, 120
        %750 = vbcast.lane.b32.xlu0 %v684, %s749
        %v751 = vpop.permute.xlu0 %750
        %753 = vbcast.lane.b32.xlu0 %v688, 256
        %v754 = vpop.permute.xlu0 %753
        %s756 = sor.u32 256, 8
        %757 = vbcast.lane.b32.xlu0 %v688, %s756
        %v758 = vpop.permute.xlu0 %757
        %s760 = sor.u32 256, 16
        %761 = vbcast.lane.b32.xlu0 %v688, %s760
        %v762 = vpop.permute.xlu0 %761
        %s764 = sor.u32 256, 24
        %765 = vbcast.lane.b32.xlu0 %v688, %s764
        %v766 = vpop.permute.xlu0 %765
        %s768 = sor.u32 256, 32
        %769 = vbcast.lane.b32.xlu0 %v688, %s768
        %v770 = vpop.permute.xlu0 %769
        %s772 = sor.u32 256, 40
        %773 = vbcast.lane.b32.xlu0 %v688, %s772
        %v774 = vpop.permute.xlu0 %773
        %s776 = sor.u32 256, 48
        %777 = vbcast.lane.b32.xlu0 %v688, %s776
        %v778 = vpop.permute.xlu0 %777
        %s780 = sor.u32 256, 56
        %781 = vbcast.lane.b32.xlu0 %v688, %s780
        %v782 = vpop.permute.xlu0 %781
        %s784 = sor.u32 256, 64
        %785 = vbcast.lane.b32.xlu0 %v688, %s784
        %v786 = vpop.permute.xlu0 %785
        %s788 = sor.u32 256, 72
        %789 = vbcast.lane.b32.xlu0 %v688, %s788
        %v790 = vpop.permute.xlu0 %789
        %s792 = sor.u32 256, 80
        %793 = vbcast.lane.b32.xlu0 %v688, %s792
        %v794 = vpop.permute.xlu0 %793
        %s796 = sor.u32 256, 88
        %797 = vbcast.lane.b32.xlu0 %v688, %s796
        %v798 = vpop.permute.xlu0 %797
        %s800 = sor.u32 256, 96
        %801 = vbcast.lane.b32.xlu0 %v688, %s800
        %v802 = vpop.permute.xlu0 %801
        %s804 = sor.u32 256, 104
        %805 = vbcast.lane.b32.xlu0 %v688, %s804
        %v806 = vpop.permute.xlu0 %805
        %s808 = sor.u32 256, 112
        %809 = vbcast.lane.b32.xlu0 %v688, %s808
        %v810 = vpop.permute.xlu0 %809
        %s812 = sor.u32 256, 120
        %813 = vbcast.lane.b32.xlu0 %v688, %s812
        %v814 = vpop.permute.xlu0 %813
        %v847 = vmul.f32 %v615, %v691
        %v848 = vmul.f32 %v616, %v695
        %v849 = vmul.f32 %v617, %v699
        %v850 = vmul.f32 %v618, %v703
        %v851 = vmul.f32 %v619, %v707
        %v852 = vmul.f32 %v620, %v711
        %v853 = vmul.f32 %v621, %v715
        %v854 = vmul.f32 %v622, %v719
        %v855 = vmul.f32 %v623, %v723
        %v856 = vmul.f32 %v624, %v727
        %v857 = vmul.f32 %v625, %v731
        %v858 = vmul.f32 %v626, %v735
        %v859 = vmul.f32 %v627, %v739
        %v860 = vmul.f32 %v628, %v743
        %v861 = vmul.f32 %v629, %v747
        %v862 = vmul.f32 %v630, %v751
        %v863 = vmul.f32 %v631, %v754
        %v864 = vmul.f32 %v632, %v758
        %v865 = vmul.f32 %v633, %v762
        %v866 = vmul.f32 %v634, %v766
        %v867 = vmul.f32 %v635, %v770
        %v868 = vmul.f32 %v636, %v774
        %v869 = vmul.f32 %v637, %v778
        %v870 = vmul.f32 %v638, %v782
        %v871 = vmul.f32 %v639, %v786
        %v872 = vmul.f32 %v640, %v790
        %v873 = vmul.f32 %v641, %v794
        %v874 = vmul.f32 %v642, %v798
        %v875 = vmul.f32 %v643, %v802
        %v876 = vmul.f32 %v644, %v806
        %v877 = vmul.f32 %v645, %v810
        %v878 = vmul.f32 %v646, %v814
        %v879 = vmul.f32 %v647, %v691
        %v880 = vmul.f32 %v648, %v695
        %v881 = vmul.f32 %v649, %v699
        %v882 = vmul.f32 %v650, %v703
        %v883 = vmul.f32 %v651, %v707
        %v884 = vmul.f32 %v652, %v711
        %v885 = vmul.f32 %v653, %v715
        %v886 = vmul.f32 %v654, %v719
        %v887 = vmul.f32 %v655, %v723
        %v888 = vmul.f32 %v656, %v727
        %v889 = vmul.f32 %v657, %v731
        %v890 = vmul.f32 %v658, %v735
        %v891 = vmul.f32 %v659, %v739
        %v892 = vmul.f32 %v660, %v743
        %v893 = vmul.f32 %v661, %v747
        %v894 = vmul.f32 %v662, %v751
        %v895 = vmul.f32 %v663, %v754
        %v896 = vmul.f32 %v664, %v758
        %v897 = vmul.f32 %v665, %v762
        %v898 = vmul.f32 %v666, %v766
        %v899 = vmul.f32 %v667, %v770
        %v900 = vmul.f32 %v668, %v774
        %v901 = vmul.f32 %v669, %v778
        %v902 = vmul.f32 %v670, %v782
        %v903 = vmul.f32 %v671, %v786
        %v904 = vmul.f32 %v672, %v790
        %v905 = vmul.f32 %v673, %v794
        %v906 = vmul.f32 %v674, %v798
        %v907 = vmul.f32 %v675, %v802
        %v908 = vmul.f32 %v676, %v806
        %v909 = vmul.f32 %v677, %v810
        %v910 = vmul.f32 %v678, %v814
        %v911 = vld [vmem:[%s292] sm:$0x3]
        %v913 = vlaneseq
        %v914 = vshrl.u32 %v913, 7
        %v915 = vsub.s32 0, %v914
        %v916 = vrot.slane %v911, %v915
        %v917 = vlaneseq
        %v918 = vshrl.u32 %v917, 7
        %v919 = vsub.s32 1, %v918
        %v920 = vrot.slane %v911, %v919
        %922 = vbcast.lane.b32.xlu0 %v916, 256
        %v923 = vpop.permute.xlu0 %922
        %s925 = sor.u32 256, 8
        %926 = vbcast.lane.b32.xlu0 %v916, %s925
        %v927 = vpop.permute.xlu0 %926
        %s929 = sor.u32 256, 16
        %930 = vbcast.lane.b32.xlu0 %v916, %s929
        %v931 = vpop.permute.xlu0 %930
        %s933 = sor.u32 256, 24
        %934 = vbcast.lane.b32.xlu0 %v916, %s933
        %v935 = vpop.permute.xlu0 %934
        %s937 = sor.u32 256, 32
        %938 = vbcast.lane.b32.xlu0 %v916, %s937
        %v939 = vpop.permute.xlu0 %938
        %s941 = sor.u32 256, 40
        %942 = vbcast.lane.b32.xlu0 %v916, %s941
        %v943 = vpop.permute.xlu0 %942
        %s945 = sor.u32 256, 48
        %946 = vbcast.lane.b32.xlu0 %v916, %s945
        %v947 = vpop.permute.xlu0 %946
        %s949 = sor.u32 256, 56
        %950 = vbcast.lane.b32.xlu0 %v916, %s949
        %v951 = vpop.permute.xlu0 %950
        %s953 = sor.u32 256, 64
        %954 = vbcast.lane.b32.xlu0 %v916, %s953
        %v955 = vpop.permute.xlu0 %954
        %s957 = sor.u32 256, 72
        %958 = vbcast.lane.b32.xlu0 %v916, %s957
        %v959 = vpop.permute.xlu0 %958
        %s961 = sor.u32 256, 80
        %962 = vbcast.lane.b32.xlu0 %v916, %s961
        %v963 = vpop.permute.xlu0 %962
        %s965 = sor.u32 256, 88
        %966 = vbcast.lane.b32.xlu0 %v916, %s965
        %v967 = vpop.permute.xlu0 %966
        %s969 = sor.u32 256, 96
        %970 = vbcast.lane.b32.xlu0 %v916, %s969
        %v971 = vpop.permute.xlu0 %970
        %s973 = sor.u32 256, 104
        %974 = vbcast.lane.b32.xlu0 %v916, %s973
        %v975 = vpop.permute.xlu0 %974
        %s977 = sor.u32 256, 112
        %978 = vbcast.lane.b32.xlu0 %v916, %s977
        %v979 = vpop.permute.xlu0 %978
        %s981 = sor.u32 256, 120
        %982 = vbcast.lane.b32.xlu0 %v916, %s981
        %v983 = vpop.permute.xlu0 %982
        %985 = vbcast.lane.b32.xlu0 %v920, 256
        %v986 = vpop.permute.xlu0 %985
        %s988 = sor.u32 256, 8
        %989 = vbcast.lane.b32.xlu0 %v920, %s988
        %v990 = vpop.permute.xlu0 %989
        %s992 = sor.u32 256, 16
        %993 = vbcast.lane.b32.xlu0 %v920, %s992
        %v994 = vpop.permute.xlu0 %993
        %s996 = sor.u32 256, 24
        %997 = vbcast.lane.b32.xlu0 %v920, %s996
        %v998 = vpop.permute.xlu0 %997
        %s1000 = sor.u32 256, 32
        %1001 = vbcast.lane.b32.xlu0 %v920, %s1000
        %v1002 = vpop.permute.xlu0 %1001
        %s1004 = sor.u32 256, 40
        %1005 = vbcast.lane.b32.xlu0 %v920, %s1004
        %v1006 = vpop.permute.xlu0 %1005
        %s1008 = sor.u32 256, 48
        %1009 = vbcast.lane.b32.xlu0 %v920, %s1008
        %v1010 = vpop.permute.xlu0 %1009
        %s1012 = sor.u32 256, 56
        %1013 = vbcast.lane.b32.xlu0 %v920, %s1012
        %v1014 = vpop.permute.xlu0 %1013
        %s1016 = sor.u32 256, 64
        %1017 = vbcast.lane.b32.xlu0 %v920, %s1016
        %v1018 = vpop.permute.xlu0 %1017
        %s1020 = sor.u32 256, 72
        %1021 = vbcast.lane.b32.xlu0 %v920, %s1020
        %v1022 = vpop.permute.xlu0 %1021
        %s1024 = sor.u32 256, 80
        %1025 = vbcast.lane.b32.xlu0 %v920, %s1024
        %v1026 = vpop.permute.xlu0 %1025
        %s1028 = sor.u32 256, 88
        %1029 = vbcast.lane.b32.xlu0 %v920, %s1028
        %v1030 = vpop.permute.xlu0 %1029
        %s1032 = sor.u32 256, 96
        %1033 = vbcast.lane.b32.xlu0 %v920, %s1032
        %v1034 = vpop.permute.xlu0 %1033
        %s1036 = sor.u32 256, 104
        %1037 = vbcast.lane.b32.xlu0 %v920, %s1036
        %v1038 = vpop.permute.xlu0 %1037
        %s1040 = sor.u32 256, 112
        %1041 = vbcast.lane.b32.xlu0 %v920, %s1040
        %v1042 = vpop.permute.xlu0 %1041
        %s1044 = sor.u32 256, 120
        %1045 = vbcast.lane.b32.xlu0 %v920, %s1044
        %v1046 = vpop.permute.xlu0 %1045
        %v1079 = vadd.f32 %v847, %v923
        %v1080 = vadd.f32 %v848, %v927
        %v1081 = vadd.f32 %v849, %v931
        %v1082 = vadd.f32 %v850, %v935
        %v1083 = vadd.f32 %v851, %v939
        %v1084 = vadd.f32 %v852, %v943
        %v1085 = vadd.f32 %v853, %v947
        %v1086 = vadd.f32 %v854, %v951
        %v1087 = vadd.f32 %v855, %v955
        %v1088 = vadd.f32 %v856, %v959
        %v1089 = vadd.f32 %v857, %v963
        %v1090 = vadd.f32 %v858, %v967
        %v1091 = vadd.f32 %v859, %v971
        %v1092 = vadd.f32 %v860, %v975
        %v1093 = vadd.f32 %v861, %v979
        %v1094 = vadd.f32 %v862, %v983
        %v1095 = vadd.f32 %v863, %v986
        %v1096 = vadd.f32 %v864, %v990
        %v1097 = vadd.f32 %v865, %v994
        %v1098 = vadd.f32 %v866, %v998
        %v1099 = vadd.f32 %v867, %v1002
        %v1100 = vadd.f32 %v868, %v1006
        %v1101 = vadd.f32 %v869, %v1010
        %v1102 = vadd.f32 %v870, %v1014
        %v1103 = vadd.f32 %v871, %v1018
        %v1104 = vadd.f32 %v872, %v1022
        %v1105 = vadd.f32 %v873, %v1026
        %v1106 = vadd.f32 %v874, %v1030
        %v1107 = vadd.f32 %v875, %v1034
        %v1108 = vadd.f32 %v876, %v1038
        %v1109 = vadd.f32 %v877, %v1042
        %v1110 = vadd.f32 %v878, %v1046
        %v1111 = vadd.f32 %v879, %v923
        %v1112 = vadd.f32 %v880, %v927
        %v1113 = vadd.f32 %v881, %v931
        %v1114 = vadd.f32 %v882, %v935
        %v1115 = vadd.f32 %v883, %v939
        %v1116 = vadd.f32 %v884, %v943
        %v1117 = vadd.f32 %v885, %v947
        %v1118 = vadd.f32 %v886, %v951
        %v1119 = vadd.f32 %v887, %v955
        %v1120 = vadd.f32 %v888, %v959
        %v1121 = vadd.f32 %v889, %v963
        %v1122 = vadd.f32 %v890, %v967
        %v1123 = vadd.f32 %v891, %v971
        %v1124 = vadd.f32 %v892, %v975
        %v1125 = vadd.f32 %v893, %v979
        %v1126 = vadd.f32 %v894, %v983
        %v1127 = vadd.f32 %v895, %v986
        %v1128 = vadd.f32 %v896, %v990
        %v1129 = vadd.f32 %v897, %v994
        %v1130 = vadd.f32 %v898, %v998
        %v1131 = vadd.f32 %v899, %v1002
        %v1132 = vadd.f32 %v900, %v1006
        %v1133 = vadd.f32 %v901, %v1010
        %v1134 = vadd.f32 %v902, %v1014
        %v1135 = vadd.f32 %v903, %v1018
        %v1136 = vadd.f32 %v904, %v1022
        %v1137 = vadd.f32 %v905, %v1026
        %v1138 = vadd.f32 %v906, %v1030
        %v1139 = vadd.f32 %v907, %v1034
        %v1140 = vadd.f32 %v908, %v1038
        %v1141 = vadd.f32 %v909, %v1042
        %v1142 = vadd.f32 %v910, %v1046
        %v1207 = vcombine.high %v1079, %v1079
        %v1209 = vunpack.c.l.s4 1983009808
        %v1210 = vunpack.c.0.s8 %v1209
        %v1211 = vlaneseq
        %v1212 = vshrl.u32 %v1211, 7
        %v1213 = vsub.s32 %v1210, %v1212
        %v1214 = vrot.slane %v1079, %v1213
        %v1216 = vunpack.c.l.s4 1983009808
        %v1217 = vunpack.c.0.s8 %v1216
        %v1218 = vlaneseq
        %v1219 = vshrl.u32 %v1218, 7
        %v1220 = vsub.s32 %v1217, %v1219
        %v1221 = vrot.slane %v1207, %v1220
        %v1222 = vcombine.high %v1214, %v1214
        %v1223 = vcombine.high %v1221, %v1221
        %v1224 = vcombine.high %v1080, %v1080
        %v1226 = vunpack.c.l.s4 1983009808
        %v1227 = vunpack.c.0.s8 %v1226
        %v1228 = vlaneseq
        %v1229 = vshrl.u32 %v1228, 7
        %v1230 = vsub.s32 %v1227, %v1229
        %v1231 = vrot.slane %v1080, %v1230
        %v1233 = vunpack.c.l.s4 1983009808
        %v1234 = vunpack.c.0.s8 %v1233
        %v1235 = vlaneseq
        %v1236 = vshrl.u32 %v1235, 7
        %v1237 = vsub.s32 %v1234, %v1236
        %v1238 = vrot.slane %v1224, %v1237
        %v1239 = vcombine.high %v1231, %v1231
        %v1240 = vcombine.high %v1238, %v1238
        %v1241 = vcombine.high %v1081, %v1081
        %v1243 = vunpack.c.l.s4 1983009808
        %v1244 = vunpack.c.0.s8 %v1243
        %v1245 = vlaneseq
        %v1246 = vshrl.u32 %v1245, 7
        %v1247 = vsub.s32 %v1244, %v1246
        %v1248 = vrot.slane %v1081, %v1247
        %v1250 = vunpack.c.l.s4 1983009808
        %v1251 = vunpack.c.0.s8 %v1250
        %v1252 = vlaneseq
        %v1253 = vshrl.u32 %v1252, 7
        %v1254 = vsub.s32 %v1251, %v1253
        %v1255 = vrot.slane %v1241, %v1254
        %v1256 = vcombine.high %v1248, %v1248
        %v1257 = vcombine.high %v1255, %v1255
        %v1258 = vcombine.high %v1082, %v1082
        %v1260 = vunpack.c.l.s4 1983009808
        %v1261 = vunpack.c.0.s8 %v1260
        %v1262 = vlaneseq
        %v1263 = vshrl.u32 %v1262, 7
        %v1264 = vsub.s32 %v1261, %v1263
        %v1265 = vrot.slane %v1082, %v1264
        %v1267 = vunpack.c.l.s4 1983009808
        %v1268 = vunpack.c.0.s8 %v1267
        %v1269 = vlaneseq
        %v1270 = vshrl.u32 %v1269, 7
        %v1271 = vsub.s32 %v1268, %v1270
        %v1272 = vrot.slane %v1258, %v1271
        %v1273 = vcombine.high %v1265, %v1265
        %v1274 = vcombine.high %v1272, %v1272
        %v1275 = vcombine.high %v1083, %v1083
        %v1277 = vunpack.c.l.s4 1983009808
        %v1278 = vunpack.c.0.s8 %v1277
        %v1279 = vlaneseq
        %v1280 = vshrl.u32 %v1279, 7
        %v1281 = vsub.s32 %v1278, %v1280
        %v1282 = vrot.slane %v1083, %v1281
        %v1284 = vunpack.c.l.s4 1983009808
        %v1285 = vunpack.c.0.s8 %v1284
        %v1286 = vlaneseq
        %v1287 = vshrl.u32 %v1286, 7
        %v1288 = vsub.s32 %v1285, %v1287
        %v1289 = vrot.slane %v1275, %v1288
        %v1290 = vcombine.high %v1282, %v1282
        %v1291 = vcombine.high %v1289, %v1289
        %v1292 = vcombine.high %v1084, %v1084
        %v1294 = vunpack.c.l.s4 1983009808
        %v1295 = vunpack.c.0.s8 %v1294
        %v1296 = vlaneseq
        %v1297 = vshrl.u32 %v1296, 7
        %v1298 = vsub.s32 %v1295, %v1297
        %v1299 = vrot.slane %v1084, %v1298
        %v1301 = vunpack.c.l.s4 1983009808
        %v1302 = vunpack.c.0.s8 %v1301
        %v1303 = vlaneseq
        %v1304 = vshrl.u32 %v1303, 7
        %v1305 = vsub.s32 %v1302, %v1304
        %v1306 = vrot.slane %v1292, %v1305
        %v1307 = vcombine.high %v1299, %v1299
        %v1308 = vcombine.high %v1306, %v1306
        %v1309 = vcombine.high %v1085, %v1085
        %v1311 = vunpack.c.l.s4 1983009808
        %v1312 = vunpack.c.0.s8 %v1311
        %v1313 = vlaneseq
        %v1314 = vshrl.u32 %v1313, 7
        %v1315 = vsub.s32 %v1312, %v1314
        %v1316 = vrot.slane %v1085, %v1315
        %v1318 = vunpack.c.l.s4 1983009808
        %v1319 = vunpack.c.0.s8 %v1318
        %v1320 = vlaneseq
        %v1321 = vshrl.u32 %v1320, 7
        %v1322 = vsub.s32 %v1319, %v1321
        %v1323 = vrot.slane %v1309, %v1322
        %v1324 = vcombine.high %v1316, %v1316
        %v1325 = vcombine.high %v1323, %v1323
        %v1326 = vcombine.high %v1086, %v1086
        %v1328 = vunpack.c.l.s4 1983009808
        %v1329 = vunpack.c.0.s8 %v1328
        %v1330 = vlaneseq
        %v1331 = vshrl.u32 %v1330, 7
        %v1332 = vsub.s32 %v1329, %v1331
        %v1333 = vrot.slane %v1086, %v1332
        %v1335 = vunpack.c.l.s4 1983009808
        %v1336 = vunpack.c.0.s8 %v1335
        %v1337 = vlaneseq
        %v1338 = vshrl.u32 %v1337, 7
        %v1339 = vsub.s32 %v1336, %v1338
        %v1340 = vrot.slane %v1326, %v1339
        %v1341 = vcombine.high %v1333, %v1333
        %v1342 = vcombine.high %v1340, %v1340
        %v1343 = vcombine.high %v1087, %v1087
        %v1345 = vunpack.c.l.s4 1983009808
        %v1346 = vunpack.c.0.s8 %v1345
        %v1347 = vlaneseq
        %v1348 = vshrl.u32 %v1347, 7
        %v1349 = vsub.s32 %v1346, %v1348
        %v1350 = vrot.slane %v1087, %v1349
        %v1352 = vunpack.c.l.s4 1983009808
        %v1353 = vunpack.c.0.s8 %v1352
        %v1354 = vlaneseq
        %v1355 = vshrl.u32 %v1354, 7
        %v1356 = vsub.s32 %v1353, %v1355
        %v1357 = vrot.slane %v1343, %v1356
        %v1358 = vcombine.high %v1350, %v1350
        %v1359 = vcombine.high %v1357, %v1357
        %v1360 = vcombine.high %v1088, %v1088
        %v1362 = vunpack.c.l.s4 1983009808
        %v1363 = vunpack.c.0.s8 %v1362
        %v1364 = vlaneseq
        %v1365 = vshrl.u32 %v1364, 7
        %v1366 = vsub.s32 %v1363, %v1365
        %v1367 = vrot.slane %v1088, %v1366
        %v1369 = vunpack.c.l.s4 1983009808
        %v1370 = vunpack.c.0.s8 %v1369
        %v1371 = vlaneseq
        %v1372 = vshrl.u32 %v1371, 7
        %v1373 = vsub.s32 %v1370, %v1372
        %v1374 = vrot.slane %v1360, %v1373
        %v1375 = vcombine.high %v1367, %v1367
        %v1376 = vcombine.high %v1374, %v1374
        %v1377 = vcombine.high %v1089, %v1089
        %v1379 = vunpack.c.l.s4 1983009808
        %v1380 = vunpack.c.0.s8 %v1379
        %v1381 = vlaneseq
        %v1382 = vshrl.u32 %v1381, 7
        %v1383 = vsub.s32 %v1380, %v1382
        %v1384 = vrot.slane %v1089, %v1383
        %v1386 = vunpack.c.l.s4 1983009808
        %v1387 = vunpack.c.0.s8 %v1386
        %v1388 = vlaneseq
        %v1389 = vshrl.u32 %v1388, 7
        %v1390 = vsub.s32 %v1387, %v1389
        %v1391 = vrot.slane %v1377, %v1390
        %v1392 = vcombine.high %v1384, %v1384
        %v1393 = vcombine.high %v1391, %v1391
        %v1394 = vcombine.high %v1090, %v1090
        %v1396 = vunpack.c.l.s4 1983009808
        %v1397 = vunpack.c.0.s8 %v1396
        %v1398 = vlaneseq
        %v1399 = vshrl.u32 %v1398, 7
        %v1400 = vsub.s32 %v1397, %v1399
        %v1401 = vrot.slane %v1090, %v1400
        %v1403 = vunpack.c.l.s4 1983009808
        %v1404 = vunpack.c.0.s8 %v1403
        %v1405 = vlaneseq
        %v1406 = vshrl.u32 %v1405, 7
        %v1407 = vsub.s32 %v1404, %v1406
        %v1408 = vrot.slane %v1394, %v1407
        %v1409 = vcombine.high %v1401, %v1401
        %v1410 = vcombine.high %v1408, %v1408
        %v1411 = vcombine.high %v1091, %v1091
        %v1413 = vunpack.c.l.s4 1983009808
        %v1414 = vunpack.c.0.s8 %v1413
        %v1415 = vlaneseq
        %v1416 = vshrl.u32 %v1415, 7
        %v1417 = vsub.s32 %v1414, %v1416
        %v1418 = vrot.slane %v1091, %v1417
        %v1420 = vunpack.c.l.s4 1983009808
        %v1421 = vunpack.c.0.s8 %v1420
        %v1422 = vlaneseq
        %v1423 = vshrl.u32 %v1422, 7
        %v1424 = vsub.s32 %v1421, %v1423
        %v1425 = vrot.slane %v1411, %v1424
        %v1426 = vcombine.high %v1418, %v1418
        %v1427 = vcombine.high %v1425, %v1425
        %v1428 = vcombine.high %v1092, %v1092
        %v1430 = vunpack.c.l.s4 1983009808
        %v1431 = vunpack.c.0.s8 %v1430
        %v1432 = vlaneseq
        %v1433 = vshrl.u32 %v1432, 7
        %v1434 = vsub.s32 %v1431, %v1433
        %v1435 = vrot.slane %v1092, %v1434
        %v1437 = vunpack.c.l.s4 1983009808
        %v1438 = vunpack.c.0.s8 %v1437
        %v1439 = vlaneseq
        %v1440 = vshrl.u32 %v1439, 7
        %v1441 = vsub.s32 %v1438, %v1440
        %v1442 = vrot.slane %v1428, %v1441
        %v1443 = vcombine.high %v1435, %v1435
        %v1444 = vcombine.high %v1442, %v1442
        %v1445 = vcombine.high %v1093, %v1093
        %v1447 = vunpack.c.l.s4 1983009808
        %v1448 = vunpack.c.0.s8 %v1447
        %v1449 = vlaneseq
        %v1450 = vshrl.u32 %v1449, 7
        %v1451 = vsub.s32 %v1448, %v1450
        %v1452 = vrot.slane %v1093, %v1451
        %v1454 = vunpack.c.l.s4 1983009808
        %v1455 = vunpack.c.0.s8 %v1454
        %v1456 = vlaneseq
        %v1457 = vshrl.u32 %v1456, 7
        %v1458 = vsub.s32 %v1455, %v1457
        %v1459 = vrot.slane %v1445, %v1458
        %v1460 = vcombine.high %v1452, %v1452
        %v1461 = vcombine.high %v1459, %v1459
        %v1462 = vcombine.high %v1094, %v1094
        %v1464 = vunpack.c.l.s4 1983009808
        %v1465 = vunpack.c.0.s8 %v1464
        %v1466 = vlaneseq
        %v1467 = vshrl.u32 %v1466, 7
        %v1468 = vsub.s32 %v1465, %v1467
        %v1469 = vrot.slane %v1094, %v1468
        %v1471 = vunpack.c.l.s4 1983009808
        %v1472 = vunpack.c.0.s8 %v1471
        %v1473 = vlaneseq
        %v1474 = vshrl.u32 %v1473, 7
        %v1475 = vsub.s32 %v1472, %v1474
        %v1476 = vrot.slane %v1462, %v1475
        %v1477 = vcombine.high %v1469, %v1469
        %v1478 = vcombine.high %v1476, %v1476
        %v1479 = vcombine.high %v1095, %v1095
        %v1481 = vunpack.c.l.s4 1983009808
        %v1482 = vunpack.c.0.s8 %v1481
        %v1483 = vlaneseq
        %v1484 = vshrl.u32 %v1483, 7
        %v1485 = vsub.s32 %v1482, %v1484
        %v1486 = vrot.slane %v1095, %v1485
        %v1488 = vunpack.c.l.s4 1983009808
        %v1489 = vunpack.c.0.s8 %v1488
        %v1490 = vlaneseq
        %v1491 = vshrl.u32 %v1490, 7
        %v1492 = vsub.s32 %v1489, %v1491
        %v1493 = vrot.slane %v1479, %v1492
        %v1494 = vcombine.high %v1486, %v1486
        %v1495 = vcombine.high %v1493, %v1493
        %v1496 = vcombine.high %v1096, %v1096
        %v1498 = vunpack.c.l.s4 1983009808
        %v1499 = vunpack.c.0.s8 %v1498
        %v1500 = vlaneseq
        %v1501 = vshrl.u32 %v1500, 7
        %v1502 = vsub.s32 %v1499, %v1501
        %v1503 = vrot.slane %v1096, %v1502
        %v1505 = vunpack.c.l.s4 1983009808
        %v1506 = vunpack.c.0.s8 %v1505
        %v1507 = vlaneseq
        %v1508 = vshrl.u32 %v1507, 7
        %v1509 = vsub.s32 %v1506, %v1508
        %v1510 = vrot.slane %v1496, %v1509
        %v1511 = vcombine.high %v1503, %v1503
        %v1512 = vcombine.high %v1510, %v1510
        %v1513 = vcombine.high %v1097, %v1097
        %v1515 = vunpack.c.l.s4 1983009808
        %v1516 = vunpack.c.0.s8 %v1515
        %v1517 = vlaneseq
        %v1518 = vshrl.u32 %v1517, 7
        %v1519 = vsub.s32 %v1516, %v1518
        %v1520 = vrot.slane %v1097, %v1519
        %v1522 = vunpack.c.l.s4 1983009808
        %v1523 = vunpack.c.0.s8 %v1522
        %v1524 = vlaneseq
        %v1525 = vshrl.u32 %v1524, 7
        %v1526 = vsub.s32 %v1523, %v1525
        %v1527 = vrot.slane %v1513, %v1526
        %v1528 = vcombine.high %v1520, %v1520
        %v1529 = vcombine.high %v1527, %v1527
        %v1530 = vcombine.high %v1098, %v1098
        %v1532 = vunpack.c.l.s4 1983009808
        %v1533 = vunpack.c.0.s8 %v1532
        %v1534 = vlaneseq
        %v1535 = vshrl.u32 %v1534, 7
        %v1536 = vsub.s32 %v1533, %v1535
        %v1537 = vrot.slane %v1098, %v1536
        %v1539 = vunpack.c.l.s4 1983009808
        %v1540 = vunpack.c.0.s8 %v1539
        %v1541 = vlaneseq
        %v1542 = vshrl.u32 %v1541, 7
        %v1543 = vsub.s32 %v1540, %v1542
        %v1544 = vrot.slane %v1530, %v1543
        %v1545 = vcombine.high %v1537, %v1537
        %v1546 = vcombine.high %v1544, %v1544
        %v1547 = vcombine.high %v1099, %v1099
        %v1549 = vunpack.c.l.s4 1983009808
        %v1550 = vunpack.c.0.s8 %v1549
        %v1551 = vlaneseq
        %v1552 = vshrl.u32 %v1551, 7
        %v1553 = vsub.s32 %v1550, %v1552
        %v1554 = vrot.slane %v1099, %v1553
        %v1556 = vunpack.c.l.s4 1983009808
        %v1557 = vunpack.c.0.s8 %v1556
        %v1558 = vlaneseq
        %v1559 = vshrl.u32 %v1558, 7
        %v1560 = vsub.s32 %v1557, %v1559
        %v1561 = vrot.slane %v1547, %v1560
        %v1562 = vcombine.high %v1554, %v1554
        %v1563 = vcombine.high %v1561, %v1561
        %v1564 = vcombine.high %v1100, %v1100
        %v1566 = vunpack.c.l.s4 1983009808
        %v1567 = vunpack.c.0.s8 %v1566
        %v1568 = vlaneseq
        %v1569 = vshrl.u32 %v1568, 7
        %v1570 = vsub.s32 %v1567, %v1569
        %v1571 = vrot.slane %v1100, %v1570
        %v1573 = vunpack.c.l.s4 1983009808
        %v1574 = vunpack.c.0.s8 %v1573
        %v1575 = vlaneseq
        %v1576 = vshrl.u32 %v1575, 7
        %v1577 = vsub.s32 %v1574, %v1576
        %v1578 = vrot.slane %v1564, %v1577
        %v1579 = vcombine.high %v1571, %v1571
        %v1580 = vcombine.high %v1578, %v1578
        %v1581 = vcombine.high %v1101, %v1101
        %v1583 = vunpack.c.l.s4 1983009808
        %v1584 = vunpack.c.0.s8 %v1583
        %v1585 = vlaneseq
        %v1586 = vshrl.u32 %v1585, 7
        %v1587 = vsub.s32 %v1584, %v1586
        %v1588 = vrot.slane %v1101, %v1587
        %v1590 = vunpack.c.l.s4 1983009808
        %v1591 = vunpack.c.0.s8 %v1590
        %v1592 = vlaneseq
        %v1593 = vshrl.u32 %v1592, 7
        %v1594 = vsub.s32 %v1591, %v1593
        %v1595 = vrot.slane %v1581, %v1594
        %v1596 = vcombine.high %v1588, %v1588
        %v1597 = vcombine.high %v1595, %v1595
        %v1598 = vcombine.high %v1102, %v1102
        %v1600 = vunpack.c.l.s4 1983009808
        %v1601 = vunpack.c.0.s8 %v1600
        %v1602 = vlaneseq
        %v1603 = vshrl.u32 %v1602, 7
        %v1604 = vsub.s32 %v1601, %v1603
        %v1605 = vrot.slane %v1102, %v1604
        %v1607 = vunpack.c.l.s4 1983009808
        %v1608 = vunpack.c.0.s8 %v1607
        %v1609 = vlaneseq
        %v1610 = vshrl.u32 %v1609, 7
        %v1611 = vsub.s32 %v1608, %v1610
        %v1612 = vrot.slane %v1598, %v1611
        %v1613 = vcombine.high %v1605, %v1605
        %v1614 = vcombine.high %v1612, %v1612
        %v1615 = vcombine.high %v1103, %v1103
        %v1617 = vunpack.c.l.s4 1983009808
        %v1618 = vunpack.c.0.s8 %v1617
        %v1619 = vlaneseq
        %v1620 = vshrl.u32 %v1619, 7
        %v1621 = vsub.s32 %v1618, %v1620
        %v1622 = vrot.slane %v1103, %v1621
        %v1624 = vunpack.c.l.s4 1983009808
        %v1625 = vunpack.c.0.s8 %v1624
        %v1626 = vlaneseq
        %v1627 = vshrl.u32 %v1626, 7
        %v1628 = vsub.s32 %v1625, %v1627
        %v1629 = vrot.slane %v1615, %v1628
        %v1630 = vcombine.high %v1622, %v1622
        %v1631 = vcombine.high %v1629, %v1629
        %v1632 = vcombine.high %v1104, %v1104
        %v1634 = vunpack.c.l.s4 1983009808
        %v1635 = vunpack.c.0.s8 %v1634
        %v1636 = vlaneseq
        %v1637 = vshrl.u32 %v1636, 7
        %v1638 = vsub.s32 %v1635, %v1637
        %v1639 = vrot.slane %v1104, %v1638
        %v1641 = vunpack.c.l.s4 1983009808
        %v1642 = vunpack.c.0.s8 %v1641
        %v1643 = vlaneseq
        %v1644 = vshrl.u32 %v1643, 7
        %v1645 = vsub.s32 %v1642, %v1644
        %v1646 = vrot.slane %v1632, %v1645
        %v1647 = vcombine.high %v1639, %v1639
        %v1648 = vcombine.high %v1646, %v1646
        %v1649 = vcombine.high %v1105, %v1105
        %v1651 = vunpack.c.l.s4 1983009808
        %v1652 = vunpack.c.0.s8 %v1651
        %v1653 = vlaneseq
        %v1654 = vshrl.u32 %v1653, 7
        %v1655 = vsub.s32 %v1652, %v1654
        %v1656 = vrot.slane %v1105, %v1655
        %v1658 = vunpack.c.l.s4 1983009808
        %v1659 = vunpack.c.0.s8 %v1658
        %v1660 = vlaneseq
        %v1661 = vshrl.u32 %v1660, 7
        %v1662 = vsub.s32 %v1659, %v1661
        %v1663 = vrot.slane %v1649, %v1662
        %v1664 = vcombine.high %v1656, %v1656
        %v1665 = vcombine.high %v1663, %v1663
        %v1666 = vcombine.high %v1106, %v1106
        %v1668 = vunpack.c.l.s4 1983009808
        %v1669 = vunpack.c.0.s8 %v1668
        %v1670 = vlaneseq
        %v1671 = vshrl.u32 %v1670, 7
        %v1672 = vsub.s32 %v1669, %v1671
        %v1673 = vrot.slane %v1106, %v1672
        %v1675 = vunpack.c.l.s4 1983009808
        %v1676 = vunpack.c.0.s8 %v1675
        %v1677 = vlaneseq
        %v1678 = vshrl.u32 %v1677, 7
        %v1679 = vsub.s32 %v1676, %v1678
        %v1680 = vrot.slane %v1666, %v1679
        %v1681 = vcombine.high %v1673, %v1673
        %v1682 = vcombine.high %v1680, %v1680
        %v1683 = vcombine.high %v1107, %v1107
        %v1685 = vunpack.c.l.s4 1983009808
        %v1686 = vunpack.c.0.s8 %v1685
        %v1687 = vlaneseq
        %v1688 = vshrl.u32 %v1687, 7
        %v1689 = vsub.s32 %v1686, %v1688
        %v1690 = vrot.slane %v1107, %v1689
        %v1692 = vunpack.c.l.s4 1983009808
        %v1693 = vunpack.c.0.s8 %v1692
        %v1694 = vlaneseq
        %v1695 = vshrl.u32 %v1694, 7
        %v1696 = vsub.s32 %v1693, %v1695
        %v1697 = vrot.slane %v1683, %v1696
        %v1698 = vcombine.high %v1690, %v1690
        %v1699 = vcombine.high %v1697, %v1697
        %v1700 = vcombine.high %v1108, %v1108
        %v1702 = vunpack.c.l.s4 1983009808
        %v1703 = vunpack.c.0.s8 %v1702
        %v1704 = vlaneseq
        %v1705 = vshrl.u32 %v1704, 7
        %v1706 = vsub.s32 %v1703, %v1705
        %v1707 = vrot.slane %v1108, %v1706
        %v1709 = vunpack.c.l.s4 1983009808
        %v1710 = vunpack.c.0.s8 %v1709
        %v1711 = vlaneseq
        %v1712 = vshrl.u32 %v1711, 7
        %v1713 = vsub.s32 %v1710, %v1712
        %v1714 = vrot.slane %v1700, %v1713
        %v1715 = vcombine.high %v1707, %v1707
        %v1716 = vcombine.high %v1714, %v1714
        %v1717 = vcombine.high %v1109, %v1109
        %v1719 = vunpack.c.l.s4 1983009808
        %v1720 = vunpack.c.0.s8 %v1719
        %v1721 = vlaneseq
        %v1722 = vshrl.u32 %v1721, 7
        %v1723 = vsub.s32 %v1720, %v1722
        %v1724 = vrot.slane %v1109, %v1723
        %v1726 = vunpack.c.l.s4 1983009808
        %v1727 = vunpack.c.0.s8 %v1726
        %v1728 = vlaneseq
        %v1729 = vshrl.u32 %v1728, 7
        %v1730 = vsub.s32 %v1727, %v1729
        %v1731 = vrot.slane %v1717, %v1730
        %v1732 = vcombine.high %v1724, %v1724
        %v1733 = vcombine.high %v1731, %v1731
        %v1734 = vcombine.high %v1110, %v1110
        %v1736 = vunpack.c.l.s4 1983009808
        %v1737 = vunpack.c.0.s8 %v1736
        %v1738 = vlaneseq
        %v1739 = vshrl.u32 %v1738, 7
        %v1740 = vsub.s32 %v1737, %v1739
        %v1741 = vrot.slane %v1110, %v1740
        %v1743 = vunpack.c.l.s4 1983009808
        %v1744 = vunpack.c.0.s8 %v1743
        %v1745 = vlaneseq
        %v1746 = vshrl.u32 %v1745, 7
        %v1747 = vsub.s32 %v1744, %v1746
        %v1748 = vrot.slane %v1734, %v1747
        %v1749 = vcombine.high %v1741, %v1741
        %v1750 = vcombine.high %v1748, %v1748
        %v1751 = vcombine.high %v1111, %v1111
        %v1753 = vunpack.c.l.s4 1983009808
        %v1754 = vunpack.c.0.s8 %v1753
        %v1755 = vlaneseq
        %v1756 = vshrl.u32 %v1755, 7
        %v1757 = vsub.s32 %v1754, %v1756
        %v1758 = vrot.slane %v1111, %v1757
        %v1760 = vunpack.c.l.s4 1983009808
        %v1761 = vunpack.c.0.s8 %v1760
        %v1762 = vlaneseq
        %v1763 = vshrl.u32 %v1762, 7
        %v1764 = vsub.s32 %v1761, %v1763
        %v1765 = vrot.slane %v1751, %v1764
        %v1766 = vcombine.high %v1758, %v1758
        %v1767 = vcombine.high %v1765, %v1765
        %v1768 = vcombine.high %v1112, %v1112
        %v1770 = vunpack.c.l.s4 1983009808
        %v1771 = vunpack.c.0.s8 %v1770
        %v1772 = vlaneseq
        %v1773 = vshrl.u32 %v1772, 7
        %v1774 = vsub.s32 %v1771, %v1773
        %v1775 = vrot.slane %v1112, %v1774
        %v1777 = vunpack.c.l.s4 1983009808
        %v1778 = vunpack.c.0.s8 %v1777
        %v1779 = vlaneseq
        %v1780 = vshrl.u32 %v1779, 7
        %v1781 = vsub.s32 %v1778, %v1780
        %v1782 = vrot.slane %v1768, %v1781
        %v1783 = vcombine.high %v1775, %v1775
        %v1784 = vcombine.high %v1782, %v1782
        %v1785 = vcombine.high %v1113, %v1113
        %v1787 = vunpack.c.l.s4 1983009808
        %v1788 = vunpack.c.0.s8 %v1787
        %v1789 = vlaneseq
        %v1790 = vshrl.u32 %v1789, 7
        %v1791 = vsub.s32 %v1788, %v1790
        %v1792 = vrot.slane %v1113, %v1791
        %v1794 = vunpack.c.l.s4 1983009808
        %v1795 = vunpack.c.0.s8 %v1794
        %v1796 = vlaneseq
        %v1797 = vshrl.u32 %v1796, 7
        %v1798 = vsub.s32 %v1795, %v1797
        %v1799 = vrot.slane %v1785, %v1798
        %v1800 = vcombine.high %v1792, %v1792
        %v1801 = vcombine.high %v1799, %v1799
        %v1802 = vcombine.high %v1114, %v1114
        %v1804 = vunpack.c.l.s4 1983009808
        %v1805 = vunpack.c.0.s8 %v1804
        %v1806 = vlaneseq
        %v1807 = vshrl.u32 %v1806, 7
        %v1808 = vsub.s32 %v1805, %v1807
        %v1809 = vrot.slane %v1114, %v1808
        %v1811 = vunpack.c.l.s4 1983009808
        %v1812 = vunpack.c.0.s8 %v1811
        %v1813 = vlaneseq
        %v1814 = vshrl.u32 %v1813, 7
        %v1815 = vsub.s32 %v1812, %v1814
        %v1816 = vrot.slane %v1802, %v1815
        %v1817 = vcombine.high %v1809, %v1809
        %v1818 = vcombine.high %v1816, %v1816
        %v1819 = vcombine.high %v1115, %v1115
        %v1821 = vunpack.c.l.s4 1983009808
        %v1822 = vunpack.c.0.s8 %v1821
        %v1823 = vlaneseq
        %v1824 = vshrl.u32 %v1823, 7
        %v1825 = vsub.s32 %v1822, %v1824
        %v1826 = vrot.slane %v1115, %v1825
        %v1828 = vunpack.c.l.s4 1983009808
        %v1829 = vunpack.c.0.s8 %v1828
        %v1830 = vlaneseq
        %v1831 = vshrl.u32 %v1830, 7
        %v1832 = vsub.s32 %v1829, %v1831
        %v1833 = vrot.slane %v1819, %v1832
        %v1834 = vcombine.high %v1826, %v1826
        %v1835 = vcombine.high %v1833, %v1833
        %v1836 = vcombine.high %v1116, %v1116
        %v1838 = vunpack.c.l.s4 1983009808
        %v1839 = vunpack.c.0.s8 %v1838
        %v1840 = vlaneseq
        %v1841 = vshrl.u32 %v1840, 7
        %v1842 = vsub.s32 %v1839, %v1841
        %v1843 = vrot.slane %v1116, %v1842
        %v1845 = vunpack.c.l.s4 1983009808
        %v1846 = vunpack.c.0.s8 %v1845
        %v1847 = vlaneseq
        %v1848 = vshrl.u32 %v1847, 7
        %v1849 = vsub.s32 %v1846, %v1848
        %v1850 = vrot.slane %v1836, %v1849
        %v1851 = vcombine.high %v1843, %v1843
        %v1852 = vcombine.high %v1850, %v1850
        %v1853 = vcombine.high %v1117, %v1117
        %v1855 = vunpack.c.l.s4 1983009808
        %v1856 = vunpack.c.0.s8 %v1855
        %v1857 = vlaneseq
        %v1858 = vshrl.u32 %v1857, 7
        %v1859 = vsub.s32 %v1856, %v1858
        %v1860 = vrot.slane %v1117, %v1859
        %v1862 = vunpack.c.l.s4 1983009808
        %v1863 = vunpack.c.0.s8 %v1862
        %v1864 = vlaneseq
        %v1865 = vshrl.u32 %v1864, 7
        %v1866 = vsub.s32 %v1863, %v1865
        %v1867 = vrot.slane %v1853, %v1866
        %v1868 = vcombine.high %v1860, %v1860
        %v1869 = vcombine.high %v1867, %v1867
        %v1870 = vcombine.high %v1118, %v1118
        %v1872 = vunpack.c.l.s4 1983009808
        %v1873 = vunpack.c.0.s8 %v1872
        %v1874 = vlaneseq
        %v1875 = vshrl.u32 %v1874, 7
        %v1876 = vsub.s32 %v1873, %v1875
        %v1877 = vrot.slane %v1118, %v1876
        %v1879 = vunpack.c.l.s4 1983009808
        %v1880 = vunpack.c.0.s8 %v1879
        %v1881 = vlaneseq
        %v1882 = vshrl.u32 %v1881, 7
        %v1883 = vsub.s32 %v1880, %v1882
        %v1884 = vrot.slane %v1870, %v1883
        %v1885 = vcombine.high %v1877, %v1877
        %v1886 = vcombine.high %v1884, %v1884
        %v1887 = vcombine.high %v1119, %v1119
        %v1889 = vunpack.c.l.s4 1983009808
        %v1890 = vunpack.c.0.s8 %v1889
        %v1891 = vlaneseq
        %v1892 = vshrl.u32 %v1891, 7
        %v1893 = vsub.s32 %v1890, %v1892
        %v1894 = vrot.slane %v1119, %v1893
        %v1896 = vunpack.c.l.s4 1983009808
        %v1897 = vunpack.c.0.s8 %v1896
        %v1898 = vlaneseq
        %v1899 = vshrl.u32 %v1898, 7
        %v1900 = vsub.s32 %v1897, %v1899
        %v1901 = vrot.slane %v1887, %v1900
        %v1902 = vcombine.high %v1894, %v1894
        %v1903 = vcombine.high %v1901, %v1901
        %v1904 = vcombine.high %v1120, %v1120
        %v1906 = vunpack.c.l.s4 1983009808
        %v1907 = vunpack.c.0.s8 %v1906
        %v1908 = vlaneseq
        %v1909 = vshrl.u32 %v1908, 7
        %v1910 = vsub.s32 %v1907, %v1909
        %v1911 = vrot.slane %v1120, %v1910
        %v1913 = vunpack.c.l.s4 1983009808
        %v1914 = vunpack.c.0.s8 %v1913
        %v1915 = vlaneseq
        %v1916 = vshrl.u32 %v1915, 7
        %v1917 = vsub.s32 %v1914, %v1916
        %v1918 = vrot.slane %v1904, %v1917
        %v1919 = vcombine.high %v1911, %v1911
        %v1920 = vcombine.high %v1918, %v1918
        %v1921 = vcombine.high %v1121, %v1121
        %v1923 = vunpack.c.l.s4 1983009808
        %v1924 = vunpack.c.0.s8 %v1923
        %v1925 = vlaneseq
        %v1926 = vshrl.u32 %v1925, 7
        %v1927 = vsub.s32 %v1924, %v1926
        %v1928 = vrot.slane %v1121, %v1927
        %v1930 = vunpack.c.l.s4 1983009808
        %v1931 = vunpack.c.0.s8 %v1930
        %v1932 = vlaneseq
        %v1933 = vshrl.u32 %v1932, 7
        %v1934 = vsub.s32 %v1931, %v1933
        %v1935 = vrot.slane %v1921, %v1934
        %v1936 = vcombine.high %v1928, %v1928
        %v1937 = vcombine.high %v1935, %v1935
        %v1938 = vcombine.high %v1122, %v1122
        %v1940 = vunpack.c.l.s4 1983009808
        %v1941 = vunpack.c.0.s8 %v1940
        %v1942 = vlaneseq
        %v1943 = vshrl.u32 %v1942, 7
        %v1944 = vsub.s32 %v1941, %v1943
        %v1945 = vrot.slane %v1122, %v1944
        %v1947 = vunpack.c.l.s4 1983009808
        %v1948 = vunpack.c.0.s8 %v1947
        %v1949 = vlaneseq
        %v1950 = vshrl.u32 %v1949, 7
        %v1951 = vsub.s32 %v1948, %v1950
        %v1952 = vrot.slane %v1938, %v1951
        %v1953 = vcombine.high %v1945, %v1945
        %v1954 = vcombine.high %v1952, %v1952
        %v1955 = vcombine.high %v1123, %v1123
        %v1957 = vunpack.c.l.s4 1983009808
        %v1958 = vunpack.c.0.s8 %v1957
        %v1959 = vlaneseq
        %v1960 = vshrl.u32 %v1959, 7
        %v1961 = vsub.s32 %v1958, %v1960
        %v1962 = vrot.slane %v1123, %v1961
        %v1964 = vunpack.c.l.s4 1983009808
        %v1965 = vunpack.c.0.s8 %v1964
        %v1966 = vlaneseq
        %v1967 = vshrl.u32 %v1966, 7
        %v1968 = vsub.s32 %v1965, %v1967
        %v1969 = vrot.slane %v1955, %v1968
        %v1970 = vcombine.high %v1962, %v1962
        %v1971 = vcombine.high %v1969, %v1969
        %v1972 = vcombine.high %v1124, %v1124
        %v1974 = vunpack.c.l.s4 1983009808
        %v1975 = vunpack.c.0.s8 %v1974
        %v1976 = vlaneseq
        %v1977 = vshrl.u32 %v1976, 7
        %v1978 = vsub.s32 %v1975, %v1977
        %v1979 = vrot.slane %v1124, %v1978
        %v1981 = vunpack.c.l.s4 1983009808
        %v1982 = vunpack.c.0.s8 %v1981
        %v1983 = vlaneseq
        %v1984 = vshrl.u32 %v1983, 7
        %v1985 = vsub.s32 %v1982, %v1984
        %v1986 = vrot.slane %v1972, %v1985
        %v1987 = vcombine.high %v1979, %v1979
        %v1988 = vcombine.high %v1986, %v1986
        %v1989 = vcombine.high %v1125, %v1125
        %v1991 = vunpack.c.l.s4 1983009808
        %v1992 = vunpack.c.0.s8 %v1991
        %v1993 = vlaneseq
        %v1994 = vshrl.u32 %v1993, 7
        %v1995 = vsub.s32 %v1992, %v1994
        %v1996 = vrot.slane %v1125, %v1995
        %v1998 = vunpack.c.l.s4 1983009808
        %v1999 = vunpack.c.0.s8 %v1998
        %v2000 = vlaneseq
        %v2001 = vshrl.u32 %v2000, 7
        %v2002 = vsub.s32 %v1999, %v2001
        %v2003 = vrot.slane %v1989, %v2002
        %v2004 = vcombine.high %v1996, %v1996
        %v2005 = vcombine.high %v2003, %v2003
        %v2006 = vcombine.high %v1126, %v1126
        %v2008 = vunpack.c.l.s4 1983009808
        %v2009 = vunpack.c.0.s8 %v2008
        %v2010 = vlaneseq
        %v2011 = vshrl.u32 %v2010, 7
        %v2012 = vsub.s32 %v2009, %v2011
        %v2013 = vrot.slane %v1126, %v2012
        %v2015 = vunpack.c.l.s4 1983009808
        %v2016 = vunpack.c.0.s8 %v2015
        %v2017 = vlaneseq
        %v2018 = vshrl.u32 %v2017, 7
        %v2019 = vsub.s32 %v2016, %v2018
        %v2020 = vrot.slane %v2006, %v2019
        %v2021 = vcombine.high %v2013, %v2013
        %v2022 = vcombine.high %v2020, %v2020
        %v2023 = vcombine.high %v1127, %v1127
        %v2025 = vunpack.c.l.s4 1983009808
        %v2026 = vunpack.c.0.s8 %v2025
        %v2027 = vlaneseq
        %v2028 = vshrl.u32 %v2027, 7
        %v2029 = vsub.s32 %v2026, %v2028
        %v2030 = vrot.slane %v1127, %v2029
        %v2032 = vunpack.c.l.s4 1983009808
        %v2033 = vunpack.c.0.s8 %v2032
        %v2034 = vlaneseq
        %v2035 = vshrl.u32 %v2034, 7
        %v2036 = vsub.s32 %v2033, %v2035
        %v2037 = vrot.slane %v2023, %v2036
        %v2038 = vcombine.high %v2030, %v2030
        %v2039 = vcombine.high %v2037, %v2037
        %v2040 = vcombine.high %v1128, %v1128
        %v2042 = vunpack.c.l.s4 1983009808
        %v2043 = vunpack.c.0.s8 %v2042
        %v2044 = vlaneseq
        %v2045 = vshrl.u32 %v2044, 7
        %v2046 = vsub.s32 %v2043, %v2045
        %v2047 = vrot.slane %v1128, %v2046
        %v2049 = vunpack.c.l.s4 1983009808
        %v2050 = vunpack.c.0.s8 %v2049
        %v2051 = vlaneseq
        %v2052 = vshrl.u32 %v2051, 7
        %v2053 = vsub.s32 %v2050, %v2052
        %v2054 = vrot.slane %v2040, %v2053
        %v2055 = vcombine.high %v2047, %v2047
        %v2056 = vcombine.high %v2054, %v2054
        %v2057 = vcombine.high %v1129, %v1129
        %v2059 = vunpack.c.l.s4 1983009808
        %v2060 = vunpack.c.0.s8 %v2059
        %v2061 = vlaneseq
        %v2062 = vshrl.u32 %v2061, 7
        %v2063 = vsub.s32 %v2060, %v2062
        %v2064 = vrot.slane %v1129, %v2063
        %v2066 = vunpack.c.l.s4 1983009808
        %v2067 = vunpack.c.0.s8 %v2066
        %v2068 = vlaneseq
        %v2069 = vshrl.u32 %v2068, 7
        %v2070 = vsub.s32 %v2067, %v2069
        %v2071 = vrot.slane %v2057, %v2070
        %v2072 = vcombine.high %v2064, %v2064
        %v2073 = vcombine.high %v2071, %v2071
        %v2074 = vcombine.high %v1130, %v1130
        %v2076 = vunpack.c.l.s4 1983009808
        %v2077 = vunpack.c.0.s8 %v2076
        %v2078 = vlaneseq
        %v2079 = vshrl.u32 %v2078, 7
        %v2080 = vsub.s32 %v2077, %v2079
        %v2081 = vrot.slane %v1130, %v2080
        %v2083 = vunpack.c.l.s4 1983009808
        %v2084 = vunpack.c.0.s8 %v2083
        %v2085 = vlaneseq
        %v2086 = vshrl.u32 %v2085, 7
        %v2087 = vsub.s32 %v2084, %v2086
        %v2088 = vrot.slane %v2074, %v2087
        %v2089 = vcombine.high %v2081, %v2081
        %v2090 = vcombine.high %v2088, %v2088
        %v2091 = vcombine.high %v1131, %v1131
        %v2093 = vunpack.c.l.s4 1983009808
        %v2094 = vunpack.c.0.s8 %v2093
        %v2095 = vlaneseq
        %v2096 = vshrl.u32 %v2095, 7
        %v2097 = vsub.s32 %v2094, %v2096
        %v2098 = vrot.slane %v1131, %v2097
        %v2100 = vunpack.c.l.s4 1983009808
        %v2101 = vunpack.c.0.s8 %v2100
        %v2102 = vlaneseq
        %v2103 = vshrl.u32 %v2102, 7
        %v2104 = vsub.s32 %v2101, %v2103
        %v2105 = vrot.slane %v2091, %v2104
        %v2106 = vcombine.high %v2098, %v2098
        %v2107 = vcombine.high %v2105, %v2105
        %v2108 = vcombine.high %v1132, %v1132
        %v2110 = vunpack.c.l.s4 1983009808
        %v2111 = vunpack.c.0.s8 %v2110
        %v2112 = vlaneseq
        %v2113 = vshrl.u32 %v2112, 7
        %v2114 = vsub.s32 %v2111, %v2113
        %v2115 = vrot.slane %v1132, %v2114
        %v2117 = vunpack.c.l.s4 1983009808
        %v2118 = vunpack.c.0.s8 %v2117
        %v2119 = vlaneseq
        %v2120 = vshrl.u32 %v2119, 7
        %v2121 = vsub.s32 %v2118, %v2120
        %v2122 = vrot.slane %v2108, %v2121
        %v2123 = vcombine.high %v2115, %v2115
        %v2124 = vcombine.high %v2122, %v2122
        %v2125 = vcombine.high %v1133, %v1133
        %v2127 = vunpack.c.l.s4 1983009808
        %v2128 = vunpack.c.0.s8 %v2127
        %v2129 = vlaneseq
        %v2130 = vshrl.u32 %v2129, 7
        %v2131 = vsub.s32 %v2128, %v2130
        %v2132 = vrot.slane %v1133, %v2131
        %v2134 = vunpack.c.l.s4 1983009808
        %v2135 = vunpack.c.0.s8 %v2134
        %v2136 = vlaneseq
        %v2137 = vshrl.u32 %v2136, 7
        %v2138 = vsub.s32 %v2135, %v2137
        %v2139 = vrot.slane %v2125, %v2138
        %v2140 = vcombine.high %v2132, %v2132
        %v2141 = vcombine.high %v2139, %v2139
        %v2142 = vcombine.high %v1134, %v1134
        %v2144 = vunpack.c.l.s4 1983009808
        %v2145 = vunpack.c.0.s8 %v2144
        %v2146 = vlaneseq
        %v2147 = vshrl.u32 %v2146, 7
        %v2148 = vsub.s32 %v2145, %v2147
        %v2149 = vrot.slane %v1134, %v2148
        %v2151 = vunpack.c.l.s4 1983009808
        %v2152 = vunpack.c.0.s8 %v2151
        %v2153 = vlaneseq
        %v2154 = vshrl.u32 %v2153, 7
        %v2155 = vsub.s32 %v2152, %v2154
        %v2156 = vrot.slane %v2142, %v2155
        %v2157 = vcombine.high %v2149, %v2149
        %v2158 = vcombine.high %v2156, %v2156
        %v2159 = vcombine.high %v1135, %v1135
        %v2161 = vunpack.c.l.s4 1983009808
        %v2162 = vunpack.c.0.s8 %v2161
        %v2163 = vlaneseq
        %v2164 = vshrl.u32 %v2163, 7
        %v2165 = vsub.s32 %v2162, %v2164
        %v2166 = vrot.slane %v1135, %v2165
        %v2168 = vunpack.c.l.s4 1983009808
        %v2169 = vunpack.c.0.s8 %v2168
        %v2170 = vlaneseq
        %v2171 = vshrl.u32 %v2170, 7
        %v2172 = vsub.s32 %v2169, %v2171
        %v2173 = vrot.slane %v2159, %v2172
        %v2174 = vcombine.high %v2166, %v2166
        %v2175 = vcombine.high %v2173, %v2173
        %v2176 = vcombine.high %v1136, %v1136
        %v2178 = vunpack.c.l.s4 1983009808
        %v2179 = vunpack.c.0.s8 %v2178
        %v2180 = vlaneseq
        %v2181 = vshrl.u32 %v2180, 7
        %v2182 = vsub.s32 %v2179, %v2181
        %v2183 = vrot.slane %v1136, %v2182
        %v2185 = vunpack.c.l.s4 1983009808
        %v2186 = vunpack.c.0.s8 %v2185
        %v2187 = vlaneseq
        %v2188 = vshrl.u32 %v2187, 7
        %v2189 = vsub.s32 %v2186, %v2188
        %v2190 = vrot.slane %v2176, %v2189
        %v2191 = vcombine.high %v2183, %v2183
        %v2192 = vcombine.high %v2190, %v2190
        %v2193 = vcombine.high %v1137, %v1137
        %v2195 = vunpack.c.l.s4 1983009808
        %v2196 = vunpack.c.0.s8 %v2195
        %v2197 = vlaneseq
        %v2198 = vshrl.u32 %v2197, 7
        %v2199 = vsub.s32 %v2196, %v2198
        %v2200 = vrot.slane %v1137, %v2199
        %v2202 = vunpack.c.l.s4 1983009808
        %v2203 = vunpack.c.0.s8 %v2202
        %v2204 = vlaneseq
        %v2205 = vshrl.u32 %v2204, 7
        %v2206 = vsub.s32 %v2203, %v2205
        %v2207 = vrot.slane %v2193, %v2206
        %v2208 = vcombine.high %v2200, %v2200
        %v2209 = vcombine.high %v2207, %v2207
        %v2210 = vcombine.high %v1138, %v1138
        %v2212 = vunpack.c.l.s4 1983009808
        %v2213 = vunpack.c.0.s8 %v2212
        %v2214 = vlaneseq
        %v2215 = vshrl.u32 %v2214, 7
        %v2216 = vsub.s32 %v2213, %v2215
        %v2217 = vrot.slane %v1138, %v2216
        %v2219 = vunpack.c.l.s4 1983009808
        %v2220 = vunpack.c.0.s8 %v2219
        %v2221 = vlaneseq
        %v2222 = vshrl.u32 %v2221, 7
        %v2223 = vsub.s32 %v2220, %v2222
        %v2224 = vrot.slane %v2210, %v2223
        %v2225 = vcombine.high %v2217, %v2217
        %v2226 = vcombine.high %v2224, %v2224
        %v2227 = vcombine.high %v1139, %v1139
        %v2229 = vunpack.c.l.s4 1983009808
        %v2230 = vunpack.c.0.s8 %v2229
        %v2231 = vlaneseq
        %v2232 = vshrl.u32 %v2231, 7
        %v2233 = vsub.s32 %v2230, %v2232
        %v2234 = vrot.slane %v1139, %v2233
        %v2236 = vunpack.c.l.s4 1983009808
        %v2237 = vunpack.c.0.s8 %v2236
        %v2238 = vlaneseq
        %v2239 = vshrl.u32 %v2238, 7
        %v2240 = vsub.s32 %v2237, %v2239
        %v2241 = vrot.slane %v2227, %v2240
        %v2242 = vcombine.high %v2234, %v2234
        %v2243 = vcombine.high %v2241, %v2241
        %v2244 = vcombine.high %v1140, %v1140
        %v2246 = vunpack.c.l.s4 1983009808
        %v2247 = vunpack.c.0.s8 %v2246
        %v2248 = vlaneseq
        %v2249 = vshrl.u32 %v2248, 7
        %v2250 = vsub.s32 %v2247, %v2249
        %v2251 = vrot.slane %v1140, %v2250
        %v2253 = vunpack.c.l.s4 1983009808
        %v2254 = vunpack.c.0.s8 %v2253
        %v2255 = vlaneseq
        %v2256 = vshrl.u32 %v2255, 7
        %v2257 = vsub.s32 %v2254, %v2256
        %v2258 = vrot.slane %v2244, %v2257
        %v2259 = vcombine.high %v2251, %v2251
        %v2260 = vcombine.high %v2258, %v2258
        %v2261 = vcombine.high %v1141, %v1141
        %v2263 = vunpack.c.l.s4 1983009808
        %v2264 = vunpack.c.0.s8 %v2263
        %v2265 = vlaneseq
        %v2266 = vshrl.u32 %v2265, 7
        %v2267 = vsub.s32 %v2264, %v2266
        %v2268 = vrot.slane %v1141, %v2267
        %v2270 = vunpack.c.l.s4 1983009808
        %v2271 = vunpack.c.0.s8 %v2270
        %v2272 = vlaneseq
        %v2273 = vshrl.u32 %v2272, 7
        %v2274 = vsub.s32 %v2271, %v2273
        %v2275 = vrot.slane %v2261, %v2274
        %v2276 = vcombine.high %v2268, %v2268
        %v2277 = vcombine.high %v2275, %v2275
        %v2278 = vcombine.high %v1142, %v1142
        %v2280 = vunpack.c.l.s4 1983009808
        %v2281 = vunpack.c.0.s8 %v2280
        %v2282 = vlaneseq
        %v2283 = vshrl.u32 %v2282, 7
        %v2284 = vsub.s32 %v2281, %v2283
        %v2285 = vrot.slane %v1142, %v2284
        %v2287 = vunpack.c.l.s4 1983009808
        %v2288 = vunpack.c.0.s8 %v2287
        %v2289 = vlaneseq
        %v2290 = vshrl.u32 %v2289, 7
        %v2291 = vsub.s32 %v2288, %v2290
        %v2292 = vrot.slane %v2278, %v2291
        %v2293 = vcombine.high %v2285, %v2285
        %v2294 = vcombine.high %v2292, %v2292
        %v2295 = vcombine.low %v1214, %v1222
        %v2296 = vcombine.low %v1221, %v1223
        %v2298 = vunpack.c.l.s4 1983009808
        %v2299 = vunpack.c.0.s8 %v2298
        %v2300 = vlaneseq
        %v2301 = vshrl.u32 %v2300, 7
        %v2302 = vsub.s32 %v2299, %v2301
        %v2303 = vrot.slane %v2295, %v2302
        %v2305 = vunpack.c.l.s4 1983009808
        %v2306 = vunpack.c.0.s8 %v2305
        %v2307 = vlaneseq
        %v2308 = vshrl.u32 %v2307, 7
        %v2309 = vsub.s32 %v2306, %v2308
        %v2310 = vrot.slane %v2296, %v2309
        %v2311 = vcombine.low %v2303, %v2310
        %v2312 = vcombine.low %v1231, %v1239
        %v2313 = vcombine.low %v1238, %v1240
        %v2315 = vunpack.c.l.s4 1983009808
        %v2316 = vunpack.c.0.s8 %v2315
        %v2317 = vlaneseq
        %v2318 = vshrl.u32 %v2317, 7
        %v2319 = vsub.s32 %v2316, %v2318
        %v2320 = vrot.slane %v2312, %v2319
        %v2322 = vunpack.c.l.s4 1983009808
        %v2323 = vunpack.c.0.s8 %v2322
        %v2324 = vlaneseq
        %v2325 = vshrl.u32 %v2324, 7
        %v2326 = vsub.s32 %v2323, %v2325
        %v2327 = vrot.slane %v2313, %v2326
        %v2328 = vcombine.low %v2320, %v2327
        %v2329 = vcombine.low %v1248, %v1256
        %v2330 = vcombine.low %v1255, %v1257
        %v2332 = vunpack.c.l.s4 1983009808
        %v2333 = vunpack.c.0.s8 %v2332
        %v2334 = vlaneseq
        %v2335 = vshrl.u32 %v2334, 7
        %v2336 = vsub.s32 %v2333, %v2335
        %v2337 = vrot.slane %v2329, %v2336
        %v2339 = vunpack.c.l.s4 1983009808
        %v2340 = vunpack.c.0.s8 %v2339
        %v2341 = vlaneseq
        %v2342 = vshrl.u32 %v2341, 7
        %v2343 = vsub.s32 %v2340, %v2342
        %v2344 = vrot.slane %v2330, %v2343
        %v2345 = vcombine.low %v2337, %v2344
        %v2346 = vcombine.low %v1265, %v1273
        %v2347 = vcombine.low %v1272, %v1274
        %v2349 = vunpack.c.l.s4 1983009808
        %v2350 = vunpack.c.0.s8 %v2349
        %v2351 = vlaneseq
        %v2352 = vshrl.u32 %v2351, 7
        %v2353 = vsub.s32 %v2350, %v2352
        %v2354 = vrot.slane %v2346, %v2353
        %v2356 = vunpack.c.l.s4 1983009808
        %v2357 = vunpack.c.0.s8 %v2356
        %v2358 = vlaneseq
        %v2359 = vshrl.u32 %v2358, 7
        %v2360 = vsub.s32 %v2357, %v2359
        %v2361 = vrot.slane %v2347, %v2360
        %v2362 = vcombine.low %v2354, %v2361
        %v2363 = vcombine.low %v1282, %v1290
        %v2364 = vcombine.low %v1289, %v1291
        %v2366 = vunpack.c.l.s4 1983009808
        %v2367 = vunpack.c.0.s8 %v2366
        %v2368 = vlaneseq
        %v2369 = vshrl.u32 %v2368, 7
        %v2370 = vsub.s32 %v2367, %v2369
        %v2371 = vrot.slane %v2363, %v2370
        %v2373 = vunpack.c.l.s4 1983009808
        %v2374 = vunpack.c.0.s8 %v2373
        %v2375 = vlaneseq
        %v2376 = vshrl.u32 %v2375, 7
        %v2377 = vsub.s32 %v2374, %v2376
        %v2378 = vrot.slane %v2364, %v2377
        %v2379 = vcombine.low %v2371, %v2378
        %v2380 = vcombine.low %v1299, %v1307
        %v2381 = vcombine.low %v1306, %v1308
        %v2383 = vunpack.c.l.s4 1983009808
        %v2384 = vunpack.c.0.s8 %v2383
        %v2385 = vlaneseq
        %v2386 = vshrl.u32 %v2385, 7
        %v2387 = vsub.s32 %v2384, %v2386
        %v2388 = vrot.slane %v2380, %v2387
        %v2390 = vunpack.c.l.s4 1983009808
        %v2391 = vunpack.c.0.s8 %v2390
        %v2392 = vlaneseq
        %v2393 = vshrl.u32 %v2392, 7
        %v2394 = vsub.s32 %v2391, %v2393
        %v2395 = vrot.slane %v2381, %v2394
        %v2396 = vcombine.low %v2388, %v2395
        %v2397 = vcombine.low %v1316, %v1324
        %v2398 = vcombine.low %v1323, %v1325
        %v2400 = vunpack.c.l.s4 1983009808
        %v2401 = vunpack.c.0.s8 %v2400
        %v2402 = vlaneseq
        %v2403 = vshrl.u32 %v2402, 7
        %v2404 = vsub.s32 %v2401, %v2403
        %v2405 = vrot.slane %v2397, %v2404
        %v2407 = vunpack.c.l.s4 1983009808
        %v2408 = vunpack.c.0.s8 %v2407
        %v2409 = vlaneseq
        %v2410 = vshrl.u32 %v2409, 7
        %v2411 = vsub.s32 %v2408, %v2410
        %v2412 = vrot.slane %v2398, %v2411
        %v2413 = vcombine.low %v2405, %v2412
        %v2414 = vcombine.low %v1333, %v1341
        %v2415 = vcombine.low %v1340, %v1342
        %v2417 = vunpack.c.l.s4 1983009808
        %v2418 = vunpack.c.0.s8 %v2417
        %v2419 = vlaneseq
        %v2420 = vshrl.u32 %v2419, 7
        %v2421 = vsub.s32 %v2418, %v2420
        %v2422 = vrot.slane %v2414, %v2421
        %v2424 = vunpack.c.l.s4 1983009808
        %v2425 = vunpack.c.0.s8 %v2424
        %v2426 = vlaneseq
        %v2427 = vshrl.u32 %v2426, 7
        %v2428 = vsub.s32 %v2425, %v2427
        %v2429 = vrot.slane %v2415, %v2428
        %v2430 = vcombine.low %v2422, %v2429
        %v2431 = vcombine.low %v1350, %v1358
        %v2432 = vcombine.low %v1357, %v1359
        %v2434 = vunpack.c.l.s4 1983009808
        %v2435 = vunpack.c.0.s8 %v2434
        %v2436 = vlaneseq
        %v2437 = vshrl.u32 %v2436, 7
        %v2438 = vsub.s32 %v2435, %v2437
        %v2439 = vrot.slane %v2431, %v2438
        %v2441 = vunpack.c.l.s4 1983009808
        %v2442 = vunpack.c.0.s8 %v2441
        %v2443 = vlaneseq
        %v2444 = vshrl.u32 %v2443, 7
        %v2445 = vsub.s32 %v2442, %v2444
        %v2446 = vrot.slane %v2432, %v2445
        %v2447 = vcombine.low %v2439, %v2446
        %v2448 = vcombine.low %v1367, %v1375
        %v2449 = vcombine.low %v1374, %v1376
        %v2451 = vunpack.c.l.s4 1983009808
        %v2452 = vunpack.c.0.s8 %v2451
        %v2453 = vlaneseq
        %v2454 = vshrl.u32 %v2453, 7
        %v2455 = vsub.s32 %v2452, %v2454
        %v2456 = vrot.slane %v2448, %v2455
        %v2458 = vunpack.c.l.s4 1983009808
        %v2459 = vunpack.c.0.s8 %v2458
        %v2460 = vlaneseq
        %v2461 = vshrl.u32 %v2460, 7
        %v2462 = vsub.s32 %v2459, %v2461
        %v2463 = vrot.slane %v2449, %v2462
        %v2464 = vcombine.low %v2456, %v2463
        %v2465 = vcombine.low %v1384, %v1392
        %v2466 = vcombine.low %v1391, %v1393
        %v2468 = vunpack.c.l.s4 1983009808
        %v2469 = vunpack.c.0.s8 %v2468
        %v2470 = vlaneseq
        %v2471 = vshrl.u32 %v2470, 7
        %v2472 = vsub.s32 %v2469, %v2471
        %v2473 = vrot.slane %v2465, %v2472
        %v2475 = vunpack.c.l.s4 1983009808
        %v2476 = vunpack.c.0.s8 %v2475
        %v2477 = vlaneseq
        %v2478 = vshrl.u32 %v2477, 7
        %v2479 = vsub.s32 %v2476, %v2478
        %v2480 = vrot.slane %v2466, %v2479
        %v2481 = vcombine.low %v2473, %v2480
        %v2482 = vcombine.low %v1401, %v1409
        %v2483 = vcombine.low %v1408, %v1410
        %v2485 = vunpack.c.l.s4 1983009808
        %v2486 = vunpack.c.0.s8 %v2485
        %v2487 = vlaneseq
        %v2488 = vshrl.u32 %v2487, 7
        %v2489 = vsub.s32 %v2486, %v2488
        %v2490 = vrot.slane %v2482, %v2489
        %v2492 = vunpack.c.l.s4 1983009808
        %v2493 = vunpack.c.0.s8 %v2492
        %v2494 = vlaneseq
        %v2495 = vshrl.u32 %v2494, 7
        %v2496 = vsub.s32 %v2493, %v2495
        %v2497 = vrot.slane %v2483, %v2496
        %v2498 = vcombine.low %v2490, %v2497
        %v2499 = vcombine.low %v1418, %v1426
        %v2500 = vcombine.low %v1425, %v1427
        %v2502 = vunpack.c.l.s4 1983009808
        %v2503 = vunpack.c.0.s8 %v2502
        %v2504 = vlaneseq
        %v2505 = vshrl.u32 %v2504, 7
        %v2506 = vsub.s32 %v2503, %v2505
        %v2507 = vrot.slane %v2499, %v2506
        %v2509 = vunpack.c.l.s4 1983009808
        %v2510 = vunpack.c.0.s8 %v2509
        %v2511 = vlaneseq
        %v2512 = vshrl.u32 %v2511, 7
        %v2513 = vsub.s32 %v2510, %v2512
        %v2514 = vrot.slane %v2500, %v2513
        %v2515 = vcombine.low %v2507, %v2514
        %v2516 = vcombine.low %v1435, %v1443
        %v2517 = vcombine.low %v1442, %v1444
        %v2519 = vunpack.c.l.s4 1983009808
        %v2520 = vunpack.c.0.s8 %v2519
        %v2521 = vlaneseq
        %v2522 = vshrl.u32 %v2521, 7
        %v2523 = vsub.s32 %v2520, %v2522
        %v2524 = vrot.slane %v2516, %v2523
        %v2526 = vunpack.c.l.s4 1983009808
        %v2527 = vunpack.c.0.s8 %v2526
        %v2528 = vlaneseq
        %v2529 = vshrl.u32 %v2528, 7
        %v2530 = vsub.s32 %v2527, %v2529
        %v2531 = vrot.slane %v2517, %v2530
        %v2532 = vcombine.low %v2524, %v2531
        %v2533 = vcombine.low %v1452, %v1460
        %v2534 = vcombine.low %v1459, %v1461
        %v2536 = vunpack.c.l.s4 1983009808
        %v2537 = vunpack.c.0.s8 %v2536
        %v2538 = vlaneseq
        %v2539 = vshrl.u32 %v2538, 7
        %v2540 = vsub.s32 %v2537, %v2539
        %v2541 = vrot.slane %v2533, %v2540
        %v2543 = vunpack.c.l.s4 1983009808
        %v2544 = vunpack.c.0.s8 %v2543
        %v2545 = vlaneseq
        %v2546 = vshrl.u32 %v2545, 7
        %v2547 = vsub.s32 %v2544, %v2546
        %v2548 = vrot.slane %v2534, %v2547
        %v2549 = vcombine.low %v2541, %v2548
        %v2550 = vcombine.low %v1469, %v1477
        %v2551 = vcombine.low %v1476, %v1478
        %v2553 = vunpack.c.l.s4 1983009808
        %v2554 = vunpack.c.0.s8 %v2553
        %v2555 = vlaneseq
        %v2556 = vshrl.u32 %v2555, 7
        %v2557 = vsub.s32 %v2554, %v2556
        %v2558 = vrot.slane %v2550, %v2557
        %v2560 = vunpack.c.l.s4 1983009808
        %v2561 = vunpack.c.0.s8 %v2560
        %v2562 = vlaneseq
        %v2563 = vshrl.u32 %v2562, 7
        %v2564 = vsub.s32 %v2561, %v2563
        %v2565 = vrot.slane %v2551, %v2564
        %v2566 = vcombine.low %v2558, %v2565
        %v2567 = vcombine.low %v1486, %v1494
        %v2568 = vcombine.low %v1493, %v1495
        %v2570 = vunpack.c.l.s4 1983009808
        %v2571 = vunpack.c.0.s8 %v2570
        %v2572 = vlaneseq
        %v2573 = vshrl.u32 %v2572, 7
        %v2574 = vsub.s32 %v2571, %v2573
        %v2575 = vrot.slane %v2567, %v2574
        %v2577 = vunpack.c.l.s4 1983009808
        %v2578 = vunpack.c.0.s8 %v2577
        %v2579 = vlaneseq
        %v2580 = vshrl.u32 %v2579, 7
        %v2581 = vsub.s32 %v2578, %v2580
        %v2582 = vrot.slane %v2568, %v2581
        %v2583 = vcombine.low %v2575, %v2582
        %v2584 = vcombine.low %v1503, %v1511
        %v2585 = vcombine.low %v1510, %v1512
        %v2587 = vunpack.c.l.s4 1983009808
        %v2588 = vunpack.c.0.s8 %v2587
        %v2589 = vlaneseq
        %v2590 = vshrl.u32 %v2589, 7
        %v2591 = vsub.s32 %v2588, %v2590
        %v2592 = vrot.slane %v2584, %v2591
        %v2594 = vunpack.c.l.s4 1983009808
        %v2595 = vunpack.c.0.s8 %v2594
        %v2596 = vlaneseq
        %v2597 = vshrl.u32 %v2596, 7
        %v2598 = vsub.s32 %v2595, %v2597
        %v2599 = vrot.slane %v2585, %v2598
        %v2600 = vcombine.low %v2592, %v2599
        %v2601 = vcombine.low %v1520, %v1528
        %v2602 = vcombine.low %v1527, %v1529
        %v2604 = vunpack.c.l.s4 1983009808
        %v2605 = vunpack.c.0.s8 %v2604
        %v2606 = vlaneseq
        %v2607 = vshrl.u32 %v2606, 7
        %v2608 = vsub.s32 %v2605, %v2607
        %v2609 = vrot.slane %v2601, %v2608
        %v2611 = vunpack.c.l.s4 1983009808
        %v2612 = vunpack.c.0.s8 %v2611
        %v2613 = vlaneseq
        %v2614 = vshrl.u32 %v2613, 7
        %v2615 = vsub.s32 %v2612, %v2614
        %v2616 = vrot.slane %v2602, %v2615
        %v2617 = vcombine.low %v2609, %v2616
        %v2618 = vcombine.low %v1537, %v1545
        %v2619 = vcombine.low %v1544, %v1546
        %v2621 = vunpack.c.l.s4 1983009808
        %v2622 = vunpack.c.0.s8 %v2621
        %v2623 = vlaneseq
        %v2624 = vshrl.u32 %v2623, 7
        %v2625 = vsub.s32 %v2622, %v2624
        %v2626 = vrot.slane %v2618, %v2625
        %v2628 = vunpack.c.l.s4 1983009808
        %v2629 = vunpack.c.0.s8 %v2628
        %v2630 = vlaneseq
        %v2631 = vshrl.u32 %v2630, 7
        %v2632 = vsub.s32 %v2629, %v2631
        %v2633 = vrot.slane %v2619, %v2632
        %v2634 = vcombine.low %v2626, %v2633
        %v2635 = vcombine.low %v1554, %v1562
        %v2636 = vcombine.low %v1561, %v1563
        %v2638 = vunpack.c.l.s4 1983009808
        %v2639 = vunpack.c.0.s8 %v2638
        %v2640 = vlaneseq
        %v2641 = vshrl.u32 %v2640, 7
        %v2642 = vsub.s32 %v2639, %v2641
        %v2643 = vrot.slane %v2635, %v2642
        %v2645 = vunpack.c.l.s4 1983009808
        %v2646 = vunpack.c.0.s8 %v2645
        %v2647 = vlaneseq
        %v2648 = vshrl.u32 %v2647, 7
        %v2649 = vsub.s32 %v2646, %v2648
        %v2650 = vrot.slane %v2636, %v2649
        %v2651 = vcombine.low %v2643, %v2650
        %v2652 = vcombine.low %v1571, %v1579
        %v2653 = vcombine.low %v1578, %v1580
        %v2655 = vunpack.c.l.s4 1983009808
        %v2656 = vunpack.c.0.s8 %v2655
        %v2657 = vlaneseq
        %v2658 = vshrl.u32 %v2657, 7
        %v2659 = vsub.s32 %v2656, %v2658
        %v2660 = vrot.slane %v2652, %v2659
        %v2662 = vunpack.c.l.s4 1983009808
        %v2663 = vunpack.c.0.s8 %v2662
        %v2664 = vlaneseq
        %v2665 = vshrl.u32 %v2664, 7
        %v2666 = vsub.s32 %v2663, %v2665
        %v2667 = vrot.slane %v2653, %v2666
        %v2668 = vcombine.low %v2660, %v2667
        %v2669 = vcombine.low %v1588, %v1596
        %v2670 = vcombine.low %v1595, %v1597
        %v2672 = vunpack.c.l.s4 1983009808
        %v2673 = vunpack.c.0.s8 %v2672
        %v2674 = vlaneseq
        %v2675 = vshrl.u32 %v2674, 7
        %v2676 = vsub.s32 %v2673, %v2675
        %v2677 = vrot.slane %v2669, %v2676
        %v2679 = vunpack.c.l.s4 1983009808
        %v2680 = vunpack.c.0.s8 %v2679
        %v2681 = vlaneseq
        %v2682 = vshrl.u32 %v2681, 7
        %v2683 = vsub.s32 %v2680, %v2682
        %v2684 = vrot.slane %v2670, %v2683
        %v2685 = vcombine.low %v2677, %v2684
        %v2686 = vcombine.low %v1605, %v1613
        %v2687 = vcombine.low %v1612, %v1614
        %v2689 = vunpack.c.l.s4 1983009808
        %v2690 = vunpack.c.0.s8 %v2689
        %v2691 = vlaneseq
        %v2692 = vshrl.u32 %v2691, 7
        %v2693 = vsub.s32 %v2690, %v2692
        %v2694 = vrot.slane %v2686, %v2693
        %v2696 = vunpack.c.l.s4 1983009808
        %v2697 = vunpack.c.0.s8 %v2696
        %v2698 = vlaneseq
        %v2699 = vshrl.u32 %v2698, 7
        %v2700 = vsub.s32 %v2697, %v2699
        %v2701 = vrot.slane %v2687, %v2700
        %v2702 = vcombine.low %v2694, %v2701
        %v2703 = vcombine.low %v1622, %v1630
        %v2704 = vcombine.low %v1629, %v1631
        %v2706 = vunpack.c.l.s4 1983009808
        %v2707 = vunpack.c.0.s8 %v2706
        %v2708 = vlaneseq
        %v2709 = vshrl.u32 %v2708, 7
        %v2710 = vsub.s32 %v2707, %v2709
        %v2711 = vrot.slane %v2703, %v2710
        %v2713 = vunpack.c.l.s4 1983009808
        %v2714 = vunpack.c.0.s8 %v2713
        %v2715 = vlaneseq
        %v2716 = vshrl.u32 %v2715, 7
        %v2717 = vsub.s32 %v2714, %v2716
        %v2718 = vrot.slane %v2704, %v2717
        %v2719 = vcombine.low %v2711, %v2718
        %v2720 = vcombine.low %v1639, %v1647
        %v2721 = vcombine.low %v1646, %v1648
        %v2723 = vunpack.c.l.s4 1983009808
        %v2724 = vunpack.c.0.s8 %v2723
        %v2725 = vlaneseq
        %v2726 = vshrl.u32 %v2725, 7
        %v2727 = vsub.s32 %v2724, %v2726
        %v2728 = vrot.slane %v2720, %v2727
        %v2730 = vunpack.c.l.s4 1983009808
        %v2731 = vunpack.c.0.s8 %v2730
        %v2732 = vlaneseq
        %v2733 = vshrl.u32 %v2732, 7
        %v2734 = vsub.s32 %v2731, %v2733
        %v2735 = vrot.slane %v2721, %v2734
        %v2736 = vcombine.low %v2728, %v2735
        %v2737 = vcombine.low %v1656, %v1664
        %v2738 = vcombine.low %v1663, %v1665
        %v2740 = vunpack.c.l.s4 1983009808
        %v2741 = vunpack.c.0.s8 %v2740
        %v2742 = vlaneseq
        %v2743 = vshrl.u32 %v2742, 7
        %v2744 = vsub.s32 %v2741, %v2743
        %v2745 = vrot.slane %v2737, %v2744
        %v2747 = vunpack.c.l.s4 1983009808
        %v2748 = vunpack.c.0.s8 %v2747
        %v2749 = vlaneseq
        %v2750 = vshrl.u32 %v2749, 7
        %v2751 = vsub.s32 %v2748, %v2750
        %v2752 = vrot.slane %v2738, %v2751
        %v2753 = vcombine.low %v2745, %v2752
        %v2754 = vcombine.low %v1673, %v1681
        %v2755 = vcombine.low %v1680, %v1682
        %v2757 = vunpack.c.l.s4 1983009808
        %v2758 = vunpack.c.0.s8 %v2757
        %v2759 = vlaneseq
        %v2760 = vshrl.u32 %v2759, 7
        %v2761 = vsub.s32 %v2758, %v2760
        %v2762 = vrot.slane %v2754, %v2761
        %v2764 = vunpack.c.l.s4 1983009808
        %v2765 = vunpack.c.0.s8 %v2764
        %v2766 = vlaneseq
        %v2767 = vshrl.u32 %v2766, 7
        %v2768 = vsub.s32 %v2765, %v2767
        %v2769 = vrot.slane %v2755, %v2768
        %v2770 = vcombine.low %v2762, %v2769
        %v2771 = vcombine.low %v1690, %v1698
        %v2772 = vcombine.low %v1697, %v1699
        %v2774 = vunpack.c.l.s4 1983009808
        %v2775 = vunpack.c.0.s8 %v2774
        %v2776 = vlaneseq
        %v2777 = vshrl.u32 %v2776, 7
        %v2778 = vsub.s32 %v2775, %v2777
        %v2779 = vrot.slane %v2771, %v2778
        %v2781 = vunpack.c.l.s4 1983009808
        %v2782 = vunpack.c.0.s8 %v2781
        %v2783 = vlaneseq
        %v2784 = vshrl.u32 %v2783, 7
        %v2785 = vsub.s32 %v2782, %v2784
        %v2786 = vrot.slane %v2772, %v2785
        %v2787 = vcombine.low %v2779, %v2786
        %v2788 = vcombine.low %v1707, %v1715
        %v2789 = vcombine.low %v1714, %v1716
        %v2791 = vunpack.c.l.s4 1983009808
        %v2792 = vunpack.c.0.s8 %v2791
        %v2793 = vlaneseq
        %v2794 = vshrl.u32 %v2793, 7
        %v2795 = vsub.s32 %v2792, %v2794
        %v2796 = vrot.slane %v2788, %v2795
        %v2798 = vunpack.c.l.s4 1983009808
        %v2799 = vunpack.c.0.s8 %v2798
        %v2800 = vlaneseq
        %v2801 = vshrl.u32 %v2800, 7
        %v2802 = vsub.s32 %v2799, %v2801
        %v2803 = vrot.slane %v2789, %v2802
        %v2804 = vcombine.low %v2796, %v2803
        %v2805 = vcombine.low %v1724, %v1732
        %v2806 = vcombine.low %v1731, %v1733
        %v2808 = vunpack.c.l.s4 1983009808
        %v2809 = vunpack.c.0.s8 %v2808
        %v2810 = vlaneseq
        %v2811 = vshrl.u32 %v2810, 7
        %v2812 = vsub.s32 %v2809, %v2811
        %v2813 = vrot.slane %v2805, %v2812
        %v2815 = vunpack.c.l.s4 1983009808
        %v2816 = vunpack.c.0.s8 %v2815
        %v2817 = vlaneseq
        %v2818 = vshrl.u32 %v2817, 7
        %v2819 = vsub.s32 %v2816, %v2818
        %v2820 = vrot.slane %v2806, %v2819
        %v2821 = vcombine.low %v2813, %v2820
        %v2822 = vcombine.low %v1741, %v1749
        %v2823 = vcombine.low %v1748, %v1750
        %v2825 = vunpack.c.l.s4 1983009808
        %v2826 = vunpack.c.0.s8 %v2825
        %v2827 = vlaneseq
        %v2828 = vshrl.u32 %v2827, 7
        %v2829 = vsub.s32 %v2826, %v2828
        %v2830 = vrot.slane %v2822, %v2829
        %v2832 = vunpack.c.l.s4 1983009808
        %v2833 = vunpack.c.0.s8 %v2832
        %v2834 = vlaneseq
        %v2835 = vshrl.u32 %v2834, 7
        %v2836 = vsub.s32 %v2833, %v2835
        %v2837 = vrot.slane %v2823, %v2836
        %v2838 = vcombine.low %v2830, %v2837
        %v2839 = vcombine.low %v1758, %v1766
        %v2840 = vcombine.low %v1765, %v1767
        %v2842 = vunpack.c.l.s4 1983009808
        %v2843 = vunpack.c.0.s8 %v2842
        %v2844 = vlaneseq
        %v2845 = vshrl.u32 %v2844, 7
        %v2846 = vsub.s32 %v2843, %v2845
        %v2847 = vrot.slane %v2839, %v2846
        %v2849 = vunpack.c.l.s4 1983009808
        %v2850 = vunpack.c.0.s8 %v2849
        %v2851 = vlaneseq
        %v2852 = vshrl.u32 %v2851, 7
        %v2853 = vsub.s32 %v2850, %v2852
        %v2854 = vrot.slane %v2840, %v2853
        %v2855 = vcombine.low %v2847, %v2854
        %v2856 = vcombine.low %v1775, %v1783
        %v2857 = vcombine.low %v1782, %v1784
        %v2859 = vunpack.c.l.s4 1983009808
        %v2860 = vunpack.c.0.s8 %v2859
        %v2861 = vlaneseq
        %v2862 = vshrl.u32 %v2861, 7
        %v2863 = vsub.s32 %v2860, %v2862
        %v2864 = vrot.slane %v2856, %v2863
        %v2866 = vunpack.c.l.s4 1983009808
        %v2867 = vunpack.c.0.s8 %v2866
        %v2868 = vlaneseq
        %v2869 = vshrl.u32 %v2868, 7
        %v2870 = vsub.s32 %v2867, %v2869
        %v2871 = vrot.slane %v2857, %v2870
        %v2872 = vcombine.low %v2864, %v2871
        %v2873 = vcombine.low %v1792, %v1800
        %v2874 = vcombine.low %v1799, %v1801
        %v2876 = vunpack.c.l.s4 1983009808
        %v2877 = vunpack.c.0.s8 %v2876
        %v2878 = vlaneseq
        %v2879 = vshrl.u32 %v2878, 7
        %v2880 = vsub.s32 %v2877, %v2879
        %v2881 = vrot.slane %v2873, %v2880
        %v2883 = vunpack.c.l.s4 1983009808
        %v2884 = vunpack.c.0.s8 %v2883
        %v2885 = vlaneseq
        %v2886 = vshrl.u32 %v2885, 7
        %v2887 = vsub.s32 %v2884, %v2886
        %v2888 = vrot.slane %v2874, %v2887
        %v2889 = vcombine.low %v2881, %v2888
        %v2890 = vcombine.low %v1809, %v1817
        %v2891 = vcombine.low %v1816, %v1818
        %v2893 = vunpack.c.l.s4 1983009808
        %v2894 = vunpack.c.0.s8 %v2893
        %v2895 = vlaneseq
        %v2896 = vshrl.u32 %v2895, 7
        %v2897 = vsub.s32 %v2894, %v2896
        %v2898 = vrot.slane %v2890, %v2897
        %v2900 = vunpack.c.l.s4 1983009808
        %v2901 = vunpack.c.0.s8 %v2900
        %v2902 = vlaneseq
        %v2903 = vshrl.u32 %v2902, 7
        %v2904 = vsub.s32 %v2901, %v2903
        %v2905 = vrot.slane %v2891, %v2904
        %v2906 = vcombine.low %v2898, %v2905
        %v2907 = vcombine.low %v1826, %v1834
        %v2908 = vcombine.low %v1833, %v1835
        %v2910 = vunpack.c.l.s4 1983009808
        %v2911 = vunpack.c.0.s8 %v2910
        %v2912 = vlaneseq
        %v2913 = vshrl.u32 %v2912, 7
        %v2914 = vsub.s32 %v2911, %v2913
        %v2915 = vrot.slane %v2907, %v2914
        %v2917 = vunpack.c.l.s4 1983009808
        %v2918 = vunpack.c.0.s8 %v2917
        %v2919 = vlaneseq
        %v2920 = vshrl.u32 %v2919, 7
        %v2921 = vsub.s32 %v2918, %v2920
        %v2922 = vrot.slane %v2908, %v2921
        %v2923 = vcombine.low %v2915, %v2922
        %v2924 = vcombine.low %v1843, %v1851
        %v2925 = vcombine.low %v1850, %v1852
        %v2927 = vunpack.c.l.s4 1983009808
        %v2928 = vunpack.c.0.s8 %v2927
        %v2929 = vlaneseq
        %v2930 = vshrl.u32 %v2929, 7
        %v2931 = vsub.s32 %v2928, %v2930
        %v2932 = vrot.slane %v2924, %v2931
        %v2934 = vunpack.c.l.s4 1983009808
        %v2935 = vunpack.c.0.s8 %v2934
        %v2936 = vlaneseq
        %v2937 = vshrl.u32 %v2936, 7
        %v2938 = vsub.s32 %v2935, %v2937
        %v2939 = vrot.slane %v2925, %v2938
        %v2940 = vcombine.low %v2932, %v2939
        %v2941 = vcombine.low %v1860, %v1868
        %v2942 = vcombine.low %v1867, %v1869
        %v2944 = vunpack.c.l.s4 1983009808
        %v2945 = vunpack.c.0.s8 %v2944
        %v2946 = vlaneseq
        %v2947 = vshrl.u32 %v2946, 7
        %v2948 = vsub.s32 %v2945, %v2947
        %v2949 = vrot.slane %v2941, %v2948
        %v2951 = vunpack.c.l.s4 1983009808
        %v2952 = vunpack.c.0.s8 %v2951
        %v2953 = vlaneseq
        %v2954 = vshrl.u32 %v2953, 7
        %v2955 = vsub.s32 %v2952, %v2954
        %v2956 = vrot.slane %v2942, %v2955
        %v2957 = vcombine.low %v2949, %v2956
        %v2958 = vcombine.low %v1877, %v1885
        %v2959 = vcombine.low %v1884, %v1886
        %v2961 = vunpack.c.l.s4 1983009808
        %v2962 = vunpack.c.0.s8 %v2961
        %v2963 = vlaneseq
        %v2964 = vshrl.u32 %v2963, 7
        %v2965 = vsub.s32 %v2962, %v2964
        %v2966 = vrot.slane %v2958, %v2965
        %v2968 = vunpack.c.l.s4 1983009808
        %v2969 = vunpack.c.0.s8 %v2968
        %v2970 = vlaneseq
        %v2971 = vshrl.u32 %v2970, 7
        %v2972 = vsub.s32 %v2969, %v2971
        %v2973 = vrot.slane %v2959, %v2972
        %v2974 = vcombine.low %v2966, %v2973
        %v2975 = vcombine.low %v1894, %v1902
        %v2976 = vcombine.low %v1901, %v1903
        %v2978 = vunpack.c.l.s4 1983009808
        %v2979 = vunpack.c.0.s8 %v2978
        %v2980 = vlaneseq
        %v2981 = vshrl.u32 %v2980, 7
        %v2982 = vsub.s32 %v2979, %v2981
        %v2983 = vrot.slane %v2975, %v2982
        %v2985 = vunpack.c.l.s4 1983009808
        %v2986 = vunpack.c.0.s8 %v2985
        %v2987 = vlaneseq
        %v2988 = vshrl.u32 %v2987, 7
        %v2989 = vsub.s32 %v2986, %v2988
        %v2990 = vrot.slane %v2976, %v2989
        %v2991 = vcombine.low %v2983, %v2990
        %v2992 = vcombine.low %v1911, %v1919
        %v2993 = vcombine.low %v1918, %v1920
        %v2995 = vunpack.c.l.s4 1983009808
        %v2996 = vunpack.c.0.s8 %v2995
        %v2997 = vlaneseq
        %v2998 = vshrl.u32 %v2997, 7
        %v2999 = vsub.s32 %v2996, %v2998
        %v3000 = vrot.slane %v2992, %v2999
        %v3002 = vunpack.c.l.s4 1983009808
        %v3003 = vunpack.c.0.s8 %v3002
        %v3004 = vlaneseq
        %v3005 = vshrl.u32 %v3004, 7
        %v3006 = vsub.s32 %v3003, %v3005
        %v3007 = vrot.slane %v2993, %v3006
        %v3008 = vcombine.low %v3000, %v3007
        %v3009 = vcombine.low %v1928, %v1936
        %v3010 = vcombine.low %v1935, %v1937
        %v3012 = vunpack.c.l.s4 1983009808
        %v3013 = vunpack.c.0.s8 %v3012
        %v3014 = vlaneseq
        %v3015 = vshrl.u32 %v3014, 7
        %v3016 = vsub.s32 %v3013, %v3015
        %v3017 = vrot.slane %v3009, %v3016
        %v3019 = vunpack.c.l.s4 1983009808
        %v3020 = vunpack.c.0.s8 %v3019
        %v3021 = vlaneseq
        %v3022 = vshrl.u32 %v3021, 7
        %v3023 = vsub.s32 %v3020, %v3022
        %v3024 = vrot.slane %v3010, %v3023
        %v3025 = vcombine.low %v3017, %v3024
        %v3026 = vcombine.low %v1945, %v1953
        %v3027 = vcombine.low %v1952, %v1954
        %v3029 = vunpack.c.l.s4 1983009808
        %v3030 = vunpack.c.0.s8 %v3029
        %v3031 = vlaneseq
        %v3032 = vshrl.u32 %v3031, 7
        %v3033 = vsub.s32 %v3030, %v3032
        %v3034 = vrot.slane %v3026, %v3033
        %v3036 = vunpack.c.l.s4 1983009808
        %v3037 = vunpack.c.0.s8 %v3036
        %v3038 = vlaneseq
        %v3039 = vshrl.u32 %v3038, 7
        %v3040 = vsub.s32 %v3037, %v3039
        %v3041 = vrot.slane %v3027, %v3040
        %v3042 = vcombine.low %v3034, %v3041
        %v3043 = vcombine.low %v1962, %v1970
        %v3044 = vcombine.low %v1969, %v1971
        %v3046 = vunpack.c.l.s4 1983009808
        %v3047 = vunpack.c.0.s8 %v3046
        %v3048 = vlaneseq
        %v3049 = vshrl.u32 %v3048, 7
        %v3050 = vsub.s32 %v3047, %v3049
        %v3051 = vrot.slane %v3043, %v3050
        %v3053 = vunpack.c.l.s4 1983009808
        %v3054 = vunpack.c.0.s8 %v3053
        %v3055 = vlaneseq
        %v3056 = vshrl.u32 %v3055, 7
        %v3057 = vsub.s32 %v3054, %v3056
        %v3058 = vrot.slane %v3044, %v3057
        %v3059 = vcombine.low %v3051, %v3058
        %v3060 = vcombine.low %v1979, %v1987
        %v3061 = vcombine.low %v1986, %v1988
        %v3063 = vunpack.c.l.s4 1983009808
        %v3064 = vunpack.c.0.s8 %v3063
        %v3065 = vlaneseq
        %v3066 = vshrl.u32 %v3065, 7
        %v3067 = vsub.s32 %v3064, %v3066
        %v3068 = vrot.slane %v3060, %v3067
        %v3070 = vunpack.c.l.s4 1983009808
        %v3071 = vunpack.c.0.s8 %v3070
        %v3072 = vlaneseq
        %v3073 = vshrl.u32 %v3072, 7
        %v3074 = vsub.s32 %v3071, %v3073
        %v3075 = vrot.slane %v3061, %v3074
        %v3076 = vcombine.low %v3068, %v3075
        %v3077 = vcombine.low %v1996, %v2004
        %v3078 = vcombine.low %v2003, %v2005
        %v3080 = vunpack.c.l.s4 1983009808
        %v3081 = vunpack.c.0.s8 %v3080
        %v3082 = vlaneseq
        %v3083 = vshrl.u32 %v3082, 7
        %v3084 = vsub.s32 %v3081, %v3083
        %v3085 = vrot.slane %v3077, %v3084
        %v3087 = vunpack.c.l.s4 1983009808
        %v3088 = vunpack.c.0.s8 %v3087
        %v3089 = vlaneseq
        %v3090 = vshrl.u32 %v3089, 7
        %v3091 = vsub.s32 %v3088, %v3090
        %v3092 = vrot.slane %v3078, %v3091
        %v3093 = vcombine.low %v3085, %v3092
        %v3094 = vcombine.low %v2013, %v2021
        %v3095 = vcombine.low %v2020, %v2022
        %v3097 = vunpack.c.l.s4 1983009808
        %v3098 = vunpack.c.0.s8 %v3097
        %v3099 = vlaneseq
        %v3100 = vshrl.u32 %v3099, 7
        %v3101 = vsub.s32 %v3098, %v3100
        %v3102 = vrot.slane %v3094, %v3101
        %v3104 = vunpack.c.l.s4 1983009808
        %v3105 = vunpack.c.0.s8 %v3104
        %v3106 = vlaneseq
        %v3107 = vshrl.u32 %v3106, 7
        %v3108 = vsub.s32 %v3105, %v3107
        %v3109 = vrot.slane %v3095, %v3108
        %v3110 = vcombine.low %v3102, %v3109
        %v3111 = vcombine.low %v2030, %v2038
        %v3112 = vcombine.low %v2037, %v2039
        %v3114 = vunpack.c.l.s4 1983009808
        %v3115 = vunpack.c.0.s8 %v3114
        %v3116 = vlaneseq
        %v3117 = vshrl.u32 %v3116, 7
        %v3118 = vsub.s32 %v3115, %v3117
        %v3119 = vrot.slane %v3111, %v3118
        %v3121 = vunpack.c.l.s4 1983009808
        %v3122 = vunpack.c.0.s8 %v3121
        %v3123 = vlaneseq
        %v3124 = vshrl.u32 %v3123, 7
        %v3125 = vsub.s32 %v3122, %v3124
        %v3126 = vrot.slane %v3112, %v3125
        %v3127 = vcombine.low %v3119, %v3126
        %v3128 = vcombine.low %v2047, %v2055
        %v3129 = vcombine.low %v2054, %v2056
        %v3131 = vunpack.c.l.s4 1983009808
        %v3132 = vunpack.c.0.s8 %v3131
        %v3133 = vlaneseq
        %v3134 = vshrl.u32 %v3133, 7
        %v3135 = vsub.s32 %v3132, %v3134
        %v3136 = vrot.slane %v3128, %v3135
        %v3138 = vunpack.c.l.s4 1983009808
        %v3139 = vunpack.c.0.s8 %v3138
        %v3140 = vlaneseq
        %v3141 = vshrl.u32 %v3140, 7
        %v3142 = vsub.s32 %v3139, %v3141
        %v3143 = vrot.slane %v3129, %v3142
        %v3144 = vcombine.low %v3136, %v3143
        %v3145 = vcombine.low %v2064, %v2072
        %v3146 = vcombine.low %v2071, %v2073
        %v3148 = vunpack.c.l.s4 1983009808
        %v3149 = vunpack.c.0.s8 %v3148
        %v3150 = vlaneseq
        %v3151 = vshrl.u32 %v3150, 7
        %v3152 = vsub.s32 %v3149, %v3151
        %v3153 = vrot.slane %v3145, %v3152
        %v3155 = vunpack.c.l.s4 1983009808
        %v3156 = vunpack.c.0.s8 %v3155
        %v3157 = vlaneseq
        %v3158 = vshrl.u32 %v3157, 7
        %v3159 = vsub.s32 %v3156, %v3158
        %v3160 = vrot.slane %v3146, %v3159
        %v3161 = vcombine.low %v3153, %v3160
        %v3162 = vcombine.low %v2081, %v2089
        %v3163 = vcombine.low %v2088, %v2090
        %v3165 = vunpack.c.l.s4 1983009808
        %v3166 = vunpack.c.0.s8 %v3165
        %v3167 = vlaneseq
        %v3168 = vshrl.u32 %v3167, 7
        %v3169 = vsub.s32 %v3166, %v3168
        %v3170 = vrot.slane %v3162, %v3169
        %v3172 = vunpack.c.l.s4 1983009808
        %v3173 = vunpack.c.0.s8 %v3172
        %v3174 = vlaneseq
        %v3175 = vshrl.u32 %v3174, 7
        %v3176 = vsub.s32 %v3173, %v3175
        %v3177 = vrot.slane %v3163, %v3176
        %v3178 = vcombine.low %v3170, %v3177
        %v3179 = vcombine.low %v2098, %v2106
        %v3180 = vcombine.low %v2105, %v2107
        %v3182 = vunpack.c.l.s4 1983009808
        %v3183 = vunpack.c.0.s8 %v3182
        %v3184 = vlaneseq
        %v3185 = vshrl.u32 %v3184, 7
        %v3186 = vsub.s32 %v3183, %v3185
        %v3187 = vrot.slane %v3179, %v3186
        %v3189 = vunpack.c.l.s4 1983009808
        %v3190 = vunpack.c.0.s8 %v3189
        %v3191 = vlaneseq
        %v3192 = vshrl.u32 %v3191, 7
        %v3193 = vsub.s32 %v3190, %v3192
        %v3194 = vrot.slane %v3180, %v3193
        %v3195 = vcombine.low %v3187, %v3194
        %v3196 = vcombine.low %v2115, %v2123
        %v3197 = vcombine.low %v2122, %v2124
        %v3199 = vunpack.c.l.s4 1983009808
        %v3200 = vunpack.c.0.s8 %v3199
        %v3201 = vlaneseq
        %v3202 = vshrl.u32 %v3201, 7
        %v3203 = vsub.s32 %v3200, %v3202
        %v3204 = vrot.slane %v3196, %v3203
        %v3206 = vunpack.c.l.s4 1983009808
        %v3207 = vunpack.c.0.s8 %v3206
        %v3208 = vlaneseq
        %v3209 = vshrl.u32 %v3208, 7
        %v3210 = vsub.s32 %v3207, %v3209
        %v3211 = vrot.slane %v3197, %v3210
        %v3212 = vcombine.low %v3204, %v3211
        %v3213 = vcombine.low %v2132, %v2140
        %v3214 = vcombine.low %v2139, %v2141
        %v3216 = vunpack.c.l.s4 1983009808
        %v3217 = vunpack.c.0.s8 %v3216
        %v3218 = vlaneseq
        %v3219 = vshrl.u32 %v3218, 7
        %v3220 = vsub.s32 %v3217, %v3219
        %v3221 = vrot.slane %v3213, %v3220
        %v3223 = vunpack.c.l.s4 1983009808
        %v3224 = vunpack.c.0.s8 %v3223
        %v3225 = vlaneseq
        %v3226 = vshrl.u32 %v3225, 7
        %v3227 = vsub.s32 %v3224, %v3226
        %v3228 = vrot.slane %v3214, %v3227
        %v3229 = vcombine.low %v3221, %v3228
        %v3230 = vcombine.low %v2149, %v2157
        %v3231 = vcombine.low %v2156, %v2158
        %v3233 = vunpack.c.l.s4 1983009808
        %v3234 = vunpack.c.0.s8 %v3233
        %v3235 = vlaneseq
        %v3236 = vshrl.u32 %v3235, 7
        %v3237 = vsub.s32 %v3234, %v3236
        %v3238 = vrot.slane %v3230, %v3237
        %v3240 = vunpack.c.l.s4 1983009808
        %v3241 = vunpack.c.0.s8 %v3240
        %v3242 = vlaneseq
        %v3243 = vshrl.u32 %v3242, 7
        %v3244 = vsub.s32 %v3241, %v3243
        %v3245 = vrot.slane %v3231, %v3244
        %v3246 = vcombine.low %v3238, %v3245
        %v3247 = vcombine.low %v2166, %v2174
        %v3248 = vcombine.low %v2173, %v2175
        %v3250 = vunpack.c.l.s4 1983009808
        %v3251 = vunpack.c.0.s8 %v3250
        %v3252 = vlaneseq
        %v3253 = vshrl.u32 %v3252, 7
        %v3254 = vsub.s32 %v3251, %v3253
        %v3255 = vrot.slane %v3247, %v3254
        %v3257 = vunpack.c.l.s4 1983009808
        %v3258 = vunpack.c.0.s8 %v3257
        %v3259 = vlaneseq
        %v3260 = vshrl.u32 %v3259, 7
        %v3261 = vsub.s32 %v3258, %v3260
        %v3262 = vrot.slane %v3248, %v3261
        %v3263 = vcombine.low %v3255, %v3262
        %v3264 = vcombine.low %v2183, %v2191
        %v3265 = vcombine.low %v2190, %v2192
        %v3267 = vunpack.c.l.s4 1983009808
        %v3268 = vunpack.c.0.s8 %v3267
        %v3269 = vlaneseq
        %v3270 = vshrl.u32 %v3269, 7
        %v3271 = vsub.s32 %v3268, %v3270
        %v3272 = vrot.slane %v3264, %v3271
        %v3274 = vunpack.c.l.s4 1983009808
        %v3275 = vunpack.c.0.s8 %v3274
        %v3276 = vlaneseq
        %v3277 = vshrl.u32 %v3276, 7
        %v3278 = vsub.s32 %v3275, %v3277
        %v3279 = vrot.slane %v3265, %v3278
        %v3280 = vcombine.low %v3272, %v3279
        %v3281 = vcombine.low %v2200, %v2208
        %v3282 = vcombine.low %v2207, %v2209
        %v3284 = vunpack.c.l.s4 1983009808
        %v3285 = vunpack.c.0.s8 %v3284
        %v3286 = vlaneseq
        %v3287 = vshrl.u32 %v3286, 7
        %v3288 = vsub.s32 %v3285, %v3287
        %v3289 = vrot.slane %v3281, %v3288
        %v3291 = vunpack.c.l.s4 1983009808
        %v3292 = vunpack.c.0.s8 %v3291
        %v3293 = vlaneseq
        %v3294 = vshrl.u32 %v3293, 7
        %v3295 = vsub.s32 %v3292, %v3294
        %v3296 = vrot.slane %v3282, %v3295
        %v3297 = vcombine.low %v3289, %v3296
        %v3298 = vcombine.low %v2217, %v2225
        %v3299 = vcombine.low %v2224, %v2226
        %v3301 = vunpack.c.l.s4 1983009808
        %v3302 = vunpack.c.0.s8 %v3301
        %v3303 = vlaneseq
        %v3304 = vshrl.u32 %v3303, 7
        %v3305 = vsub.s32 %v3302, %v3304
        %v3306 = vrot.slane %v3298, %v3305
        %v3308 = vunpack.c.l.s4 1983009808
        %v3309 = vunpack.c.0.s8 %v3308
        %v3310 = vlaneseq
        %v3311 = vshrl.u32 %v3310, 7
        %v3312 = vsub.s32 %v3309, %v3311
        %v3313 = vrot.slane %v3299, %v3312
        %v3314 = vcombine.low %v3306, %v3313
        %v3315 = vcombine.low %v2234, %v2242
        %v3316 = vcombine.low %v2241, %v2243
        %v3318 = vunpack.c.l.s4 1983009808
        %v3319 = vunpack.c.0.s8 %v3318
        %v3320 = vlaneseq
        %v3321 = vshrl.u32 %v3320, 7
        %v3322 = vsub.s32 %v3319, %v3321
        %v3323 = vrot.slane %v3315, %v3322
        %v3325 = vunpack.c.l.s4 1983009808
        %v3326 = vunpack.c.0.s8 %v3325
        %v3327 = vlaneseq
        %v3328 = vshrl.u32 %v3327, 7
        %v3329 = vsub.s32 %v3326, %v3328
        %v3330 = vrot.slane %v3316, %v3329
        %v3331 = vcombine.low %v3323, %v3330
        %v3332 = vcombine.low %v2251, %v2259
        %v3333 = vcombine.low %v2258, %v2260
        %v3335 = vunpack.c.l.s4 1983009808
        %v3336 = vunpack.c.0.s8 %v3335
        %v3337 = vlaneseq
        %v3338 = vshrl.u32 %v3337, 7
        %v3339 = vsub.s32 %v3336, %v3338
        %v3340 = vrot.slane %v3332, %v3339
        %v3342 = vunpack.c.l.s4 1983009808
        %v3343 = vunpack.c.0.s8 %v3342
        %v3344 = vlaneseq
        %v3345 = vshrl.u32 %v3344, 7
        %v3346 = vsub.s32 %v3343, %v3345
        %v3347 = vrot.slane %v3333, %v3346
        %v3348 = vcombine.low %v3340, %v3347
        %v3349 = vcombine.low %v2268, %v2276
        %v3350 = vcombine.low %v2275, %v2277
        %v3352 = vunpack.c.l.s4 1983009808
        %v3353 = vunpack.c.0.s8 %v3352
        %v3354 = vlaneseq
        %v3355 = vshrl.u32 %v3354, 7
        %v3356 = vsub.s32 %v3353, %v3355
        %v3357 = vrot.slane %v3349, %v3356
        %v3359 = vunpack.c.l.s4 1983009808
        %v3360 = vunpack.c.0.s8 %v3359
        %v3361 = vlaneseq
        %v3362 = vshrl.u32 %v3361, 7
        %v3363 = vsub.s32 %v3360, %v3362
        %v3364 = vrot.slane %v3350, %v3363
        %v3365 = vcombine.low %v3357, %v3364
        %v3366 = vcombine.low %v2285, %v2293
        %v3367 = vcombine.low %v2292, %v2294
        %v3369 = vunpack.c.l.s4 1983009808
        %v3370 = vunpack.c.0.s8 %v3369
        %v3371 = vlaneseq
        %v3372 = vshrl.u32 %v3371, 7
        %v3373 = vsub.s32 %v3370, %v3372
        %v3374 = vrot.slane %v3366, %v3373
        %v3376 = vunpack.c.l.s4 1983009808
        %v3377 = vunpack.c.0.s8 %v3376
        %v3378 = vlaneseq
        %v3379 = vshrl.u32 %v3378, 7
        %v3380 = vsub.s32 %v3377, %v3379
        %v3381 = vrot.slane %v3367, %v3380
        %v3382 = vcombine.low %v3374, %v3381
        %3383 = vset.pattern.permute.xlu0 0
        %3384 = vperm.xlu0 %3383, %v2311
        %v3385 = vpop.permute.xlu0 %3384
        %3386 = vset.pattern.permute.xlu0 0
        %3387 = vperm.xlu0 %3386, %v2328
        %v3388 = vpop.permute.xlu0 %3387
        %3389 = vset.pattern.permute.xlu0 0
        %3390 = vperm.xlu0 %3389, %v2345
        %v3391 = vpop.permute.xlu0 %3390
        %3392 = vset.pattern.permute.xlu0 0
        %3393 = vperm.xlu0 %3392, %v2362
        %v3394 = vpop.permute.xlu0 %3393
        %3395 = vset.pattern.permute.xlu0 0
        %3396 = vperm.xlu0 %3395, %v2379
        %v3397 = vpop.permute.xlu0 %3396
        %3398 = vset.pattern.permute.xlu0 0
        %3399 = vperm.xlu0 %3398, %v2396
        %v3400 = vpop.permute.xlu0 %3399
        %3401 = vset.pattern.permute.xlu0 0
        %3402 = vperm.xlu0 %3401, %v2413
        %v3403 = vpop.permute.xlu0 %3402
        %3404 = vset.pattern.permute.xlu0 0
        %3405 = vperm.xlu0 %3404, %v2430
        %v3406 = vpop.permute.xlu0 %3405
        %3407 = vset.pattern.permute.xlu0 0
        %3408 = vperm.xlu0 %3407, %v2447
        %v3409 = vpop.permute.xlu0 %3408
        %3410 = vset.pattern.permute.xlu0 0
        %3411 = vperm.xlu0 %3410, %v2464
        %v3412 = vpop.permute.xlu0 %3411
        %3413 = vset.pattern.permute.xlu0 0
        %3414 = vperm.xlu0 %3413, %v2481
        %v3415 = vpop.permute.xlu0 %3414
        %3416 = vset.pattern.permute.xlu0 0
        %3417 = vperm.xlu0 %3416, %v2498
        %v3418 = vpop.permute.xlu0 %3417
        %3419 = vset.pattern.permute.xlu0 0
        %3420 = vperm.xlu0 %3419, %v2515
        %v3421 = vpop.permute.xlu0 %3420
        %3422 = vset.pattern.permute.xlu0 0
        %3423 = vperm.xlu0 %3422, %v2532
        %v3424 = vpop.permute.xlu0 %3423
        %3425 = vset.pattern.permute.xlu0 0
        %3426 = vperm.xlu0 %3425, %v2549
        %v3427 = vpop.permute.xlu0 %3426
        %3428 = vset.pattern.permute.xlu0 0
        %3429 = vperm.xlu0 %3428, %v2566
        %v3430 = vpop.permute.xlu0 %3429
        %3431 = vset.pattern.permute.xlu0 0
        %3432 = vperm.xlu0 %3431, %v2583
        %v3433 = vpop.permute.xlu0 %3432
        %3434 = vset.pattern.permute.xlu0 0
        %3435 = vperm.xlu0 %3434, %v2600
        %v3436 = vpop.permute.xlu0 %3435
        %3437 = vset.pattern.permute.xlu0 0
        %3438 = vperm.xlu0 %3437, %v2617
        %v3439 = vpop.permute.xlu0 %3438
        %3440 = vset.pattern.permute.xlu0 0
        %3441 = vperm.xlu0 %3440, %v2634
        %v3442 = vpop.permute.xlu0 %3441
        %3443 = vset.pattern.permute.xlu0 0
        %3444 = vperm.xlu0 %3443, %v2651
        %v3445 = vpop.permute.xlu0 %3444
        %3446 = vset.pattern.permute.xlu0 0
        %3447 = vperm.xlu0 %3446, %v2668
        %v3448 = vpop.permute.xlu0 %3447
        %3449 = vset.pattern.permute.xlu0 0
        %3450 = vperm.xlu0 %3449, %v2685
        %v3451 = vpop.permute.xlu0 %3450
        %3452 = vset.pattern.permute.xlu0 0
        %3453 = vperm.xlu0 %3452, %v2702
        %v3454 = vpop.permute.xlu0 %3453
        %3455 = vset.pattern.permute.xlu0 0
        %3456 = vperm.xlu0 %3455, %v2719
        %v3457 = vpop.permute.xlu0 %3456
        %3458 = vset.pattern.permute.xlu0 0
        %3459 = vperm.xlu0 %3458, %v2736
        %v3460 = vpop.permute.xlu0 %3459
        %3461 = vset.pattern.permute.xlu0 0
        %3462 = vperm.xlu0 %3461, %v2753
        %v3463 = vpop.permute.xlu0 %3462
        %3464 = vset.pattern.permute.xlu0 0
        %3465 = vperm.xlu0 %3464, %v2770
        %v3466 = vpop.permute.xlu0 %3465
        %3467 = vset.pattern.permute.xlu0 0
        %3468 = vperm.xlu0 %3467, %v2787
        %v3469 = vpop.permute.xlu0 %3468
        %3470 = vset.pattern.permute.xlu0 0
        %3471 = vperm.xlu0 %3470, %v2804
        %v3472 = vpop.permute.xlu0 %3471
        %3473 = vset.pattern.permute.xlu0 0
        %3474 = vperm.xlu0 %3473, %v2821
        %v3475 = vpop.permute.xlu0 %3474
        %3476 = vset.pattern.permute.xlu0 0
        %3477 = vperm.xlu0 %3476, %v2838
        %v3478 = vpop.permute.xlu0 %3477
        %3479 = vset.pattern.permute.xlu0 0
        %3480 = vperm.xlu0 %3479, %v2855
        %v3481 = vpop.permute.xlu0 %3480
        %3482 = vset.pattern.permute.xlu0 0
        %3483 = vperm.xlu0 %3482, %v2872
        %v3484 = vpop.permute.xlu0 %3483
        %3485 = vset.pattern.permute.xlu0 0
        %3486 = vperm.xlu0 %3485, %v2889
        %v3487 = vpop.permute.xlu0 %3486
        %3488 = vset.pattern.permute.xlu0 0
        %3489 = vperm.xlu0 %3488, %v2906
        %v3490 = vpop.permute.xlu0 %3489
        %3491 = vset.pattern.permute.xlu0 0
        %3492 = vperm.xlu0 %3491, %v2923
        %v3493 = vpop.permute.xlu0 %3492
        %3494 = vset.pattern.permute.xlu0 0
        %3495 = vperm.xlu0 %3494, %v2940
        %v3496 = vpop.permute.xlu0 %3495
        %3497 = vset.pattern.permute.xlu0 0
        %3498 = vperm.xlu0 %3497, %v2957
        %v3499 = vpop.permute.xlu0 %3498
        %3500 = vset.pattern.permute.xlu0 0
        %3501 = vperm.xlu0 %3500, %v2974
        %v3502 = vpop.permute.xlu0 %3501
        %3503 = vset.pattern.permute.xlu0 0
        %3504 = vperm.xlu0 %3503, %v2991
        %v3505 = vpop.permute.xlu0 %3504
        %3506 = vset.pattern.permute.xlu0 0
        %3507 = vperm.xlu0 %3506, %v3008
        %v3508 = vpop.permute.xlu0 %3507
        %3509 = vset.pattern.permute.xlu0 0
        %3510 = vperm.xlu0 %3509, %v3025
        %v3511 = vpop.permute.xlu0 %3510
        %3512 = vset.pattern.permute.xlu0 0
        %3513 = vperm.xlu0 %3512, %v3042
        %v3514 = vpop.permute.xlu0 %3513
        %3515 = vset.pattern.permute.xlu0 0
        %3516 = vperm.xlu0 %3515, %v3059
        %v3517 = vpop.permute.xlu0 %3516
        %3518 = vset.pattern.permute.xlu0 0
        %3519 = vperm.xlu0 %3518, %v3076
        %v3520 = vpop.permute.xlu0 %3519
        %3521 = vset.pattern.permute.xlu0 0
        %3522 = vperm.xlu0 %3521, %v3093
        %v3523 = vpop.permute.xlu0 %3522
        %3524 = vset.pattern.permute.xlu0 0
        %3525 = vperm.xlu0 %3524, %v3110
        %v3526 = vpop.permute.xlu0 %3525
        %3527 = vset.pattern.permute.xlu0 0
        %3528 = vperm.xlu0 %3527, %v3127
        %v3529 = vpop.permute.xlu0 %3528
        %3530 = vset.pattern.permute.xlu0 0
        %3531 = vperm.xlu0 %3530, %v3144
        %v3532 = vpop.permute.xlu0 %3531
        %3533 = vset.pattern.permute.xlu0 0
        %3534 = vperm.xlu0 %3533, %v3161
        %v3535 = vpop.permute.xlu0 %3534
        %3536 = vset.pattern.permute.xlu0 0
        %3537 = vperm.xlu0 %3536, %v3178
        %v3538 = vpop.permute.xlu0 %3537
        %3539 = vset.pattern.permute.xlu0 0
        %3540 = vperm.xlu0 %3539, %v3195
        %v3541 = vpop.permute.xlu0 %3540
        %3542 = vset.pattern.permute.xlu0 0
        %3543 = vperm.xlu0 %3542, %v3212
        %v3544 = vpop.permute.xlu0 %3543
        %3545 = vset.pattern.permute.xlu0 0
        %3546 = vperm.xlu0 %3545, %v3229
        %v3547 = vpop.permute.xlu0 %3546
        %3548 = vset.pattern.permute.xlu0 0
        %3549 = vperm.xlu0 %3548, %v3246
        %v3550 = vpop.permute.xlu0 %3549
        %3551 = vset.pattern.permute.xlu0 0
        %3552 = vperm.xlu0 %3551, %v3263
        %v3553 = vpop.permute.xlu0 %3552
        %3554 = vset.pattern.permute.xlu0 0
        %3555 = vperm.xlu0 %3554, %v3280
        %v3556 = vpop.permute.xlu0 %3555
        %3557 = vset.pattern.permute.xlu0 0
        %3558 = vperm.xlu0 %3557, %v3297
        %v3559 = vpop.permute.xlu0 %3558
        %3560 = vset.pattern.permute.xlu0 0
        %3561 = vperm.xlu0 %3560, %v3314
        %v3562 = vpop.permute.xlu0 %3561
        %3563 = vset.pattern.permute.xlu0 0
        %3564 = vperm.xlu0 %3563, %v3331
        %v3565 = vpop.permute.xlu0 %3564
        %3566 = vset.pattern.permute.xlu0 0
        %3567 = vperm.xlu0 %3566, %v3348
        %v3568 = vpop.permute.xlu0 %3567
        %3569 = vset.pattern.permute.xlu0 0
        %3570 = vperm.xlu0 %3569, %v3365
        %v3571 = vpop.permute.xlu0 %3570
        %3572 = vset.pattern.permute.xlu0 0
        %3573 = vperm.xlu0 %3572, %v3382
        %v3574 = vpop.permute.xlu0 %3573
        %v3575 = vlaneseq
        %v3576 = vand.u32 %v3575, 127
        %v3577 = vlaneseq
        %v3578 = vshrl.u32 %v3577, 7
        %v3579 = vsub.s32 %v3576, %v3578
        %v3580 = vrot.slane %v3385, %v3579
        %v3581 = vadd.s32 %v3576, 4294967288
        %v3582 = vlaneseq
        %v3583 = vshrl.u32 %v3582, 7
        %v3584 = vsub.s32 %v3581, %v3583
        %v3585 = vrot.slane %v3388, %v3584
        %vm3586 = vcmask 130112
        %v3587 = vsel %vm3586, %v3585, %v3580
        %v3588 = vadd.s32 %v3576, 4294967280
        %v3589 = vlaneseq
        %v3590 = vshrl.u32 %v3589, 7
        %v3591 = vsub.s32 %v3588, %v3590
        %v3592 = vrot.slane %v3391, %v3591
        %vm3593 = vcmask 195712
        %v3594 = vsel %vm3593, %v3592, %v3587
        %v3595 = vadd.s32 %v3576, 4294967272
        %v3596 = vlaneseq
        %v3597 = vshrl.u32 %v3596, 7
        %v3598 = vsub.s32 %v3595, %v3597
        %v3599 = vrot.slane %v3394, %v3598
        %vm3600 = vcmask 261312
        %v3601 = vsel %vm3600, %v3599, %v3594
        %v3602 = vadd.s32 %v3576, 4294967264
        %v3603 = vlaneseq
        %v3604 = vshrl.u32 %v3603, 7
        %v3605 = vsub.s32 %v3602, %v3604
        %v3606 = vrot.slane %v3397, %v3605
        %vm3607 = vcmask 326912
        %v3608 = vsel %vm3607, %v3606, %v3601
        %v3609 = vadd.s32 %v3576, 4294967256
        %v3610 = vlaneseq
        %v3611 = vshrl.u32 %v3610, 7
        %v3612 = vsub.s32 %v3609, %v3611
        %v3613 = vrot.slane %v3400, %v3612
        %vm3614 = vcmask 392512
        %v3615 = vsel %vm3614, %v3613, %v3608
        %v3616 = vadd.s32 %v3576, 4294967248
        %v3617 = vlaneseq
        %v3618 = vshrl.u32 %v3617, 7
        %v3619 = vsub.s32 %v3616, %v3618
        %v3620 = vrot.slane %v3403, %v3619
        %vm3621 = vcmask 458112
        %v3622 = vsel %vm3621, %v3620, %v3615
        %v3623 = vadd.s32 %v3576, 4294967240
        %v3624 = vlaneseq
        %v3625 = vshrl.u32 %v3624, 7
        %v3626 = vsub.s32 %v3623, %v3625
        %v3627 = vrot.slane %v3406, %v3626
        %vm3628 = vcmask 523712
        %v3629 = vsel %vm3628, %v3627, %v3622
        %v3630 = vadd.s32 %v3576, 4294967232
        %v3631 = vlaneseq
        %v3632 = vshrl.u32 %v3631, 7
        %v3633 = vsub.s32 %v3630, %v3632
        %v3634 = vrot.slane %v3409, %v3633
        %vm3635 = vcmask 589312
        %v3636 = vsel %vm3635, %v3634, %v3629
        %v3637 = vadd.s32 %v3576, 4294967224
        %v3638 = vlaneseq
        %v3639 = vshrl.u32 %v3638, 7
        %v3640 = vsub.s32 %v3637, %v3639
        %v3641 = vrot.slane %v3412, %v3640
        %vm3642 = vcmask 654912
        %v3643 = vsel %vm3642, %v3641, %v3636
        %v3644 = vadd.s32 %v3576, 4294967216
        %v3645 = vlaneseq
        %v3646 = vshrl.u32 %v3645, 7
        %v3647 = vsub.s32 %v3644, %v3646
        %v3648 = vrot.slane %v3415, %v3647
        %vm3649 = vcmask 720512
        %v3650 = vsel %vm3649, %v3648, %v3643
        %v3651 = vadd.s32 %v3576, 4294967208
        %v3652 = vlaneseq
        %v3653 = vshrl.u32 %v3652, 7
        %v3654 = vsub.s32 %v3651, %v3653
        %v3655 = vrot.slane %v3418, %v3654
        %vm3656 = vcmask 786112
        %v3657 = vsel %vm3656, %v3655, %v3650
        %v3658 = vadd.s32 %v3576, 4294967200
        %v3659 = vlaneseq
        %v3660 = vshrl.u32 %v3659, 7
        %v3661 = vsub.s32 %v3658, %v3660
        %v3662 = vrot.slane %v3421, %v3661
        %vm3663 = vcmask 851712
        %v3664 = vsel %vm3663, %v3662, %v3657
        %v3665 = vadd.s32 %v3576, 4294967192
        %v3666 = vlaneseq
        %v3667 = vshrl.u32 %v3666, 7
        %v3668 = vsub.s32 %v3665, %v3667
        %v3669 = vrot.slane %v3424, %v3668
        %vm3670 = vcmask 917312
        %v3671 = vsel %vm3670, %v3669, %v3664
        %v3672 = vadd.s32 %v3576, 4294967184
        %v3673 = vlaneseq
        %v3674 = vshrl.u32 %v3673, 7
        %v3675 = vsub.s32 %v3672, %v3674
        %v3676 = vrot.slane %v3427, %v3675
        %vm3677 = vcmask 982912
        %v3678 = vsel %vm3677, %v3676, %v3671
        %v3679 = vadd.s32 %v3576, 4294967176
        %v3680 = vlaneseq
        %v3681 = vshrl.u32 %v3680, 7
        %v3682 = vsub.s32 %v3679, %v3681
        %v3683 = vrot.slane %v3430, %v3682
        %vm3684 = vcmask 1048512
        %v3685 = vsel %vm3684, %v3683, %v3678
        %v3686 = vlaneseq
        %v3687 = vshrl.u32 %v3686, 7
        %v3688 = vsub.s32 %v3576, %v3687
        %v3689 = vrot.slane %v3433, %v3688
        %v3690 = vlaneseq
        %v3691 = vshrl.u32 %v3690, 7
        %v3692 = vsub.s32 %v3581, %v3691
        %v3693 = vrot.slane %v3436, %v3692
        %v3694 = vsel %vm3586, %v3693, %v3689
        %v3695 = vlaneseq
        %v3696 = vshrl.u32 %v3695, 7
        %v3697 = vsub.s32 %v3588, %v3696
        %v3698 = vrot.slane %v3439, %v3697
        %v3699 = vsel %vm3593, %v3698, %v3694
        %v3700 = vlaneseq
        %v3701 = vshrl.u32 %v3700, 7
        %v3702 = vsub.s32 %v3595, %v3701
        %v3703 = vrot.slane %v3442, %v3702
        %v3704 = vsel %vm3600, %v3703, %v3699
        %v3705 = vlaneseq
        %v3706 = vshrl.u32 %v3705, 7
        %v3707 = vsub.s32 %v3602, %v3706
        %v3708 = vrot.slane %v3445, %v3707
        %v3709 = vsel %vm3607, %v3708, %v3704
        %v3710 = vlaneseq
        %v3711 = vshrl.u32 %v3710, 7
        %v3712 = vsub.s32 %v3609, %v3711
        %v3713 = vrot.slane %v3448, %v3712
        %v3714 = vsel %vm3614, %v3713, %v3709
        %v3715 = vlaneseq
        %v3716 = vshrl.u32 %v3715, 7
        %v3717 = vsub.s32 %v3616, %v3716
        %v3718 = vrot.slane %v3451, %v3717
        %v3719 = vsel %vm3621, %v3718, %v3714
        %v3720 = vlaneseq
        %v3721 = vshrl.u32 %v3720, 7
        %v3722 = vsub.s32 %v3623, %v3721
        %v3723 = vrot.slane %v3454, %v3722
        %v3724 = vsel %vm3628, %v3723, %v3719
        %v3725 = vlaneseq
        %v3726 = vshrl.u32 %v3725, 7
        %v3727 = vsub.s32 %v3630, %v3726
        %v3728 = vrot.slane %v3457, %v3727
        %v3729 = vsel %vm3635, %v3728, %v3724
        %v3730 = vlaneseq
        %v3731 = vshrl.u32 %v3730, 7
        %v3732 = vsub.s32 %v3637, %v3731
        %v3733 = vrot.slane %v3460, %v3732
        %v3734 = vsel %vm3642, %v3733, %v3729
        %v3735 = vlaneseq
        %v3736 = vshrl.u32 %v3735, 7
        %v3737 = vsub.s32 %v3644, %v3736
        %v3738 = vrot.slane %v3463, %v3737
        %v3739 = vsel %vm3649, %v3738, %v3734
        %v3740 = vlaneseq
        %v3741 = vshrl.u32 %v3740, 7
        %v3742 = vsub.s32 %v3651, %v3741
        %v3743 = vrot.slane %v3466, %v3742
        %v3744 = vsel %vm3656, %v3743, %v3739
        %v3745 = vlaneseq
        %v3746 = vshrl.u32 %v3745, 7
        %v3747 = vsub.s32 %v3658, %v3746
        %v3748 = vrot.slane %v3469, %v3747
        %v3749 = vsel %vm3663, %v3748, %v3744
        %v3750 = vlaneseq
        %v3751 = vshrl.u32 %v3750, 7
        %v3752 = vsub.s32 %v3665, %v3751
        %v3753 = vrot.slane %v3472, %v3752
        %v3754 = vsel %vm3670, %v3753, %v3749
        %v3755 = vlaneseq
        %v3756 = vshrl.u32 %v3755, 7
        %v3757 = vsub.s32 %v3672, %v3756
        %v3758 = vrot.slane %v3475, %v3757
        %v3759 = vsel %vm3677, %v3758, %v3754
        %v3760 = vlaneseq
        %v3761 = vshrl.u32 %v3760, 7
        %v3762 = vsub.s32 %v3679, %v3761
        %v3763 = vrot.slane %v3478, %v3762
        %v3764 = vsel %vm3684, %v3763, %v3759
        %v3765 = vlaneseq
        %v3766 = vshrl.u32 %v3765, 7
        %v3767 = vsub.s32 %v3576, %v3766
        %v3768 = vrot.slane %v3481, %v3767
        %v3769 = vlaneseq
        %v3770 = vshrl.u32 %v3769, 7
        %v3771 = vsub.s32 %v3581, %v3770
        %v3772 = vrot.slane %v3484, %v3771
        %v3773 = vsel %vm3586, %v3772, %v3768
        %v3774 = vlaneseq
        %v3775 = vshrl.u32 %v3774, 7
        %v3776 = vsub.s32 %v3588, %v3775
        %v3777 = vrot.slane %v3487, %v3776
        %v3778 = vsel %vm3593, %v3777, %v3773
        %v3779 = vlaneseq
        %v3780 = vshrl.u32 %v3779, 7
        %v3781 = vsub.s32 %v3595, %v3780
        %v3782 = vrot.slane %v3490, %v3781
        %v3783 = vsel %vm3600, %v3782, %v3778
        %v3784 = vlaneseq
        %v3785 = vshrl.u32 %v3784, 7
        %v3786 = vsub.s32 %v3602, %v3785
        %v3787 = vrot.slane %v3493, %v3786
        %v3788 = vsel %vm3607, %v3787, %v3783
        %v3789 = vlaneseq
        %v3790 = vshrl.u32 %v3789, 7
        %v3791 = vsub.s32 %v3609, %v3790
        %v3792 = vrot.slane %v3496, %v3791
        %v3793 = vsel %vm3614, %v3792, %v3788
        %v3794 = vlaneseq
        %v3795 = vshrl.u32 %v3794, 7
        %v3796 = vsub.s32 %v3616, %v3795
        %v3797 = vrot.slane %v3499, %v3796
        %v3798 = vsel %vm3621, %v3797, %v3793
        %v3799 = vlaneseq
        %v3800 = vshrl.u32 %v3799, 7
        %v3801 = vsub.s32 %v3623, %v3800
        %v3802 = vrot.slane %v3502, %v3801
        %v3803 = vsel %vm3628, %v3802, %v3798
        %v3804 = vlaneseq
        %v3805 = vshrl.u32 %v3804, 7
        %v3806 = vsub.s32 %v3630, %v3805
        %v3807 = vrot.slane %v3505, %v3806
        %v3808 = vsel %vm3635, %v3807, %v3803
        %v3809 = vlaneseq
        %v3810 = vshrl.u32 %v3809, 7
        %v3811 = vsub.s32 %v3637, %v3810
        %v3812 = vrot.slane %v3508, %v3811
        %v3813 = vsel %vm3642, %v3812, %v3808
        %v3814 = vlaneseq
        %v3815 = vshrl.u32 %v3814, 7
        %v3816 = vsub.s32 %v3644, %v3815
        %v3817 = vrot.slane %v3511, %v3816
        %v3818 = vsel %vm3649, %v3817, %v3813
        %v3819 = vlaneseq
        %v3820 = vshrl.u32 %v3819, 7
        %v3821 = vsub.s32 %v3651, %v3820
        %v3822 = vrot.slane %v3514, %v3821
        %v3823 = vsel %vm3656, %v3822, %v3818
        %v3824 = vlaneseq
        %v3825 = vshrl.u32 %v3824, 7
        %v3826 = vsub.s32 %v3658, %v3825
        %v3827 = vrot.slane %v3517, %v3826
        %v3828 = vsel %vm3663, %v3827, %v3823
        %v3829 = vlaneseq
        %v3830 = vshrl.u32 %v3829, 7
        %v3831 = vsub.s32 %v3665, %v3830
        %v3832 = vrot.slane %v3520, %v3831
        %v3833 = vsel %vm3670, %v3832, %v3828
        %v3834 = vlaneseq
        %v3835 = vshrl.u32 %v3834, 7
        %v3836 = vsub.s32 %v3672, %v3835
        %v3837 = vrot.slane %v3523, %v3836
        %v3838 = vsel %vm3677, %v3837, %v3833
        %v3839 = vlaneseq
        %v3840 = vshrl.u32 %v3839, 7
        %v3841 = vsub.s32 %v3679, %v3840
        %v3842 = vrot.slane %v3526, %v3841
        %v3843 = vsel %vm3684, %v3842, %v3838
        %v3844 = vlaneseq
        %v3845 = vshrl.u32 %v3844, 7
        %v3846 = vsub.s32 %v3576, %v3845
        %v3847 = vrot.slane %v3529, %v3846
        %v3848 = vlaneseq
        %v3849 = vshrl.u32 %v3848, 7
        %v3850 = vsub.s32 %v3581, %v3849
        %v3851 = vrot.slane %v3532, %v3850
        %v3852 = vsel %vm3586, %v3851, %v3847
        %v3853 = vlaneseq
        %v3854 = vshrl.u32 %v3853, 7
        %v3855 = vsub.s32 %v3588, %v3854
        %v3856 = vrot.slane %v3535, %v3855
        %v3857 = vsel %vm3593, %v3856, %v3852
        %v3858 = vlaneseq
        %v3859 = vshrl.u32 %v3858, 7
        %v3860 = vsub.s32 %v3595, %v3859
        %v3861 = vrot.slane %v3538, %v3860
        %v3862 = vsel %vm3600, %v3861, %v3857
        %v3863 = vlaneseq
        %v3864 = vshrl.u32 %v3863, 7
        %v3865 = vsub.s32 %v3602, %v3864
        %v3866 = vrot.slane %v3541, %v3865
        %v3867 = vsel %vm3607, %v3866, %v3862
        %v3868 = vlaneseq
        %v3869 = vshrl.u32 %v3868, 7
        %v3870 = vsub.s32 %v3609, %v3869
        %v3871 = vrot.slane %v3544, %v3870
        %v3872 = vsel %vm3614, %v3871, %v3867
        %v3873 = vlaneseq
        %v3874 = vshrl.u32 %v3873, 7
        %v3875 = vsub.s32 %v3616, %v3874
        %v3876 = vrot.slane %v3547, %v3875
        %v3877 = vsel %vm3621, %v3876, %v3872
        %v3878 = vlaneseq
        %v3879 = vshrl.u32 %v3878, 7
        %v3880 = vsub.s32 %v3623, %v3879
        %v3881 = vrot.slane %v3550, %v3880
        %v3882 = vsel %vm3628, %v3881, %v3877
        %v3883 = vlaneseq
        %v3884 = vshrl.u32 %v3883, 7
        %v3885 = vsub.s32 %v3630, %v3884
        %v3886 = vrot.slane %v3553, %v3885
        %v3887 = vsel %vm3635, %v3886, %v3882
        %v3888 = vlaneseq
        %v3889 = vshrl.u32 %v3888, 7
        %v3890 = vsub.s32 %v3637, %v3889
        %v3891 = vrot.slane %v3556, %v3890
        %v3892 = vsel %vm3642, %v3891, %v3887
        %v3893 = vlaneseq
        %v3894 = vshrl.u32 %v3893, 7
        %v3895 = vsub.s32 %v3644, %v3894
        %v3896 = vrot.slane %v3559, %v3895
        %v3897 = vsel %vm3649, %v3896, %v3892
        %v3898 = vlaneseq
        %v3899 = vshrl.u32 %v3898, 7
        %v3900 = vsub.s32 %v3651, %v3899
        %v3901 = vrot.slane %v3562, %v3900
        %v3902 = vsel %vm3656, %v3901, %v3897
        %v3903 = vlaneseq
        %v3904 = vshrl.u32 %v3903, 7
        %v3905 = vsub.s32 %v3658, %v3904
        %v3906 = vrot.slane %v3565, %v3905
        %v3907 = vsel %vm3663, %v3906, %v3902
        %v3908 = vlaneseq
        %v3909 = vshrl.u32 %v3908, 7
        %v3910 = vsub.s32 %v3665, %v3909
        %v3911 = vrot.slane %v3568, %v3910
        %v3912 = vsel %vm3670, %v3911, %v3907
        %v3913 = vlaneseq
        %v3914 = vshrl.u32 %v3913, 7
        %v3915 = vsub.s32 %v3672, %v3914
        %v3916 = vrot.slane %v3571, %v3915
        %v3917 = vsel %vm3677, %v3916, %v3912
        %v3918 = vlaneseq
        %v3919 = vshrl.u32 %v3918, 7
        %v3920 = vsub.s32 %v3679, %v3919
        %v3921 = vrot.slane %v3574, %v3920
        %v3922 = vsel %vm3684, %v3921, %v3917
        %vm3923 = vcmask 1041409
        %v3924 = vsel %vm3923, %v3843, %v3685
        %v3925 = vsel %vm3923, %v3922, %v3764
        %v3926 = vcombine.low %v3924, %v3925
        %v3928 = vunpack.c.l.s4 1983009808
        %v3929 = vunpack.c.0.s8 %v3928
        %v3930 = vlaneseq
        %v3931 = vshrl.u32 %v3930, 7
        %v3932 = vsub.s32 %v3929, %v3931
        %v3933 = vrot.slane %v3926, %v3932
        %3935 = vst [vmem:[%s285] sm:$0xf] %v3933
        %s3936 = sand.u32 %s125, 1
        %s3937 = scalar_lea.sflag [#allocation4], %s3936
        %s3938 = sand.u32 %s125, 1
        %s3939 = smul.addr %s3938, 4
        %s3940 = scalar_lea.vmem [#allocation7], %s3939
        // Predicated region
        $region41: #{tpu_custom_call.1} parent=31 // pred_check
          %p3941 = pneg %p135
        $region42: #{tpu_custom_call.1} parent=31 // pred_check_branch
          %3943 = sbr.rel (%p3941) target = $region44
        $region43: #{tpu_custom_call.1} parent=31 // pred_region
          %s3944 = smul.u32 2, %s28
          %s3946 = ssub.s32 64, 64
          %3947 = vsyncadd %s3937, %s3946
          %s3948 = smul.addr %s27, 4
          %s3949 = sadd.s32 %s3944, %s3948
          %s3950 = smul.addr %s3949, 32
          %s3951 = scalar_lea.hbm %s3, %s3950
          %s3953 = sshll.u32 %s3940, 4
          %s3954 = int_to_ptr.vmem [resolvable:$true] %s3953
          %3956 = dma.vmem_to_hbm [thread:$0]  %s3954, 64, %s3951, %s3937
        $region44: #{tpu_custom_call.1} parent=31 // pred_fallthru
          _
      $region32: #{tpu_custom_call.1} parent=5 // pred_fallthru
        _
      %p3957 = scmp.le.s32.totalorder 2, %s18
      // Predicated region
      $region45: #{tpu_custom_call.1} parent=5 // pred_check
        %p3958 = pneg %p3957
      $region46: #{tpu_custom_call.1} parent=5 // pred_check_branch
        %3960 = sbr.rel (%p3958) target = $region48
      $region47: #{tpu_custom_call.1} parent=5 // pred_region
        %s3961 = ssub.s32 %s18, 2
        // Predicated region
        $region49: #{tpu_custom_call.1} parent=47 // pred_check
          %p3962 = pneg %p141
        $region50: #{tpu_custom_call.1} parent=47 // pred_check_branch
          %3964 = sbr.rel (%p3962) target = $region52
        $region51: #{tpu_custom_call.1} parent=47 // pred_region
          %s3965 = sand.u32 %s126, 1
          %s3966 = scalar_lea.sflag [#allocation4], %s3965
          %s3967 = sand.u32 %s126, 1
          %s3968 = smul.addr %s3967, 4
          %s3969 = scalar_lea.vmem [#allocation7], %s3968
          %3970 = dma.done %s3966, 64
        $region52: #{tpu_custom_call.1} parent=47 // pred_fallthru
          _
      $region48: #{tpu_custom_call.1} parent=5 // pred_fallthru
        _
    $region6: #{tpu_custom_call.1} parent=1 // loop_footer
      %s22 = sadd.s32 1, %s18
    $region7: #{tpu_custom_call.1} parent=1 // loop_footer_branch
      %17 = sbr.rel target = $region3
    $region8: #{tpu_custom_call.1} parent=1 // loop_exit
      _
    %3971 = vsyncpa [#allocation3], 1
    %s3972 = scalar_lea.sflag [#allocation3], 1
    %3973 = vsyncpa %s3972, 1
    %3974 = vsyncpa [#allocation6], 1
    %s3975 = scalar_lea.sflag [#allocation6], 1
    %3976 = vsyncpa %s3975, 1
    %3977 = vsyncpa [#allocation4], 1
    %s3978 = scalar_lea.sflag [#allocation4], 1
    %3979 = vsyncpa %s3978, 1

</llo_original>
